<compile_context>
chip_gen: v7x
topology: tpu7x:2x2x1
jax: 0.10.0
libtpu: 0.0.40
codegen_flags: <defaults>
</compile_context>

<pallas_src>
import functools

import jax
import jax.numpy as jnp
import numpy as np
from jax.experimental import pallas as pl
from jax.experimental.pallas import tpu as pltpu


# ------------------------------ Pallas kernel -------------------------------

def _make_fused_kernel(H2: int, W2: int):
    HW2 = H2 * W2
    offsets = [(dh, dw) for dh in (-1, 0, 1) for dw in (-1, 0, 1)]  # t = kh*3+kw

    def kernel(x1_ref, x2_ref, nn_ref, pm_ref, cm_ref,
               wu_ref, bu_ref, w1u_ref, w1x_ref, b1_ref, w2_ref, b2_ref,
               o_ref):
        f32 = jnp.float32
        x1 = x1_ref[0]          # (Cin, H1*W1)   low-res input, flat spatial
        x2 = x2_ref[0]          # (Chalf, HW2)   skip connection, flat spatial
        pm = pm_ref[...]        # (4, HW2)       deconv parity masks
        cm = cm_ref[...]        # (9, HW2)       conv border (zero-pad) masks

        # ---- ConvTranspose2d(Cin, Chalf, k=2, s=2) --------------------------
        # x1_nn[c, p] = x1[c, (Y//2, X//2)]  (nearest-neighbour scatter matmul)
        x1_nn = jnp.dot(x1, nn_ref[...], preferred_element_type=f32)  # (Cin, HW2)
        up = jnp.dot(wu_ref[0], x1_nn, preferred_element_type=f32) * pm[0:1]
        for t in range(1, 4):
            up = up + jnp.dot(wu_ref[t], x1_nn,
                              preferred_element_type=f32) * pm[t:t + 1]
        up = up + bu_ref[...]                                         # (Chalf, HW2)

        # ---- shifted + zero-padded view of a (C, HW2) activation for tap t --
        def tap(x, t):
            dh, dw = offsets[t]
            s = (-(dh * W2 + dw)) % HW2
            xs = x if s == 0 else pltpu.roll(x, s, axis=1)
            return xs * cm[t:t + 1]          # kills wrap-around & pad region

        # ---- conv1: 3x3, pad=1 on cat([up, x2], channel) + ReLU -------------
        acc1 = None
        for t in range(9):
            term = (jnp.dot(w1u_ref[t], tap(up, t), preferred_element_type=f32)
                    + jnp.dot(w1x_ref[t], tap(x2, t), preferred_element_type=f32))
            acc1 = term if acc1 is None else acc1 + term
        h1 = jnp.maximum(acc1 + b1_ref[...], 0.0)                     # (Cout, HW2)

        # ---- conv2: 3x3, pad=1 + ReLU ---------------------------------------
        acc2 = None
        for t in range(9):
            term = jnp.dot(w2_ref[t], tap(h1, t), preferred_element_type=f32)
            acc2 = term if acc2 is None else acc2 + term
        h2 = jnp.maximum(acc2 + b2_ref[...], 0.0)                     # (Cout, HW2)

        o_ref[0] = h2.astype(o_ref.dtype)

    return kernel


# --------------------------- constant index tables ---------------------------

def _upsample_constants(H1: int, W1: int):
    """NN-scatter matrix, deconv parity masks, conv border masks (numpy)."""
    H2, W2 = 2 * H1, 2 * W1
    HW1, HW2 = H1 * W1, H2 * W2
    Y, X = np.divmod(np.arange(HW2), W2)

    nn = np.zeros((HW1, HW2), np.float32)
    nn[(Y // 2) * W1 + (X // 2), np.arange(HW2)] = 1.0

    pm = np.zeros((4, HW2), np.float32)
    for kh in range(2):
        for kw in range(2):
            pm[kh * 2 + kw] = ((Y % 2 == kh) & (X % 2 == kw)).astype(np.float32)

    cm = np.zeros((9, HW2), np.float32)
    t = 0
    for dh in (-1, 0, 1):
        for dw in (-1, 0, 1):
            cm[t] = ((Y + dh >= 0) & (Y + dh < H2) &
                     (X + dw >= 0) & (X + dw < W2)).astype(np.float32)
            t += 1
    return nn, pm, cm


# ------------------------------- JAX wrapper ---------------------------------

def upsample_forward(x1_nchw, x2_nchw, params):
    """UpSample.forward: up(x1) -> cat([x1, x2], dim=1) -> DoubleConv. NCHW io."""
    N, Cin, H1, W1 = x1_nchw.shape
    Chalf = Cin // 2
    H2, W2 = 2 * H1, 2 * W1
    HW1, HW2 = H1 * W1, H2 * W2
    Cout = params["c1_w"].shape[0]

    # NCHW -> (N, C, H*W): pure reshapes, no transposes.
    x1f = x1_nchw.reshape(N, Cin, HW1)
    x2f = x2_nchw.reshape(N, Chalf, HW2)

    nn_np, pm_np, cm_np = _upsample_constants(H1, W1)
    nn, pm, cm = jnp.asarray(nn_np), jnp.asarray(pm_np), jnp.asarray(cm_np)

    # Repack weights (tiny, done once at trace time).
    # up_w: (Cin, Chalf, 2, 2) -> (4, Chalf, Cin), tap t = kh*2+kw
    wu = jnp.transpose(params["up_w"], (2, 3, 1, 0)).reshape(4, Chalf, Cin)
    bu = params["up_b"].reshape(Chalf, 1)
    # c1_w: (Cout, Cin, 3, 3) split into the `up` half and the `x2` half.
    w1u = jnp.transpose(params["c1_w"][:, :Chalf], (2, 3, 0, 1)).reshape(9, Cout, Chalf)
    w1x = jnp.transpose(params["c1_w"][:, Chalf:], (2, 3, 0, 1)).reshape(9, Cout, Chalf)
    b1 = params["c1_b"].reshape(Cout, 1)
    w2 = jnp.transpose(params["c2_w"], (2, 3, 0, 1)).reshape(9, Cout, Cout)
    b2 = params["c2_b"].reshape(Cout, 1)

    kernel = _make_fused_kernel(H2, W2)
    const2 = lambda n: (0, 0)
    const3 = lambda n: (0, 0, 0)

    out = pl.pallas_call(
        kernel,
        out_shape=jax.ShapeDtypeStruct((N, Cout, HW2), x1_nchw.dtype),
        grid=(N,),
        in_specs=[
            pl.BlockSpec((1, Cin, HW1), lambda n: (n, 0, 0)),    # x1
            pl.BlockSpec((1, Chalf, HW2), lambda n: (n, 0, 0)),  # x2
            pl.BlockSpec((HW1, HW2), const2),                    # NN scatter
            pl.BlockSpec((4, HW2), const2),                      # parity masks
            pl.BlockSpec((9, HW2), const2),                      # border masks
            pl.BlockSpec((4, Chalf, Cin), const3),               # deconv taps
            pl.BlockSpec((Chalf, 1), const2),                    # deconv bias
            pl.BlockSpec((9, Cout, Chalf), const3),              # conv1 (up half)
            pl.BlockSpec((9, Cout, Chalf), const3),              # conv1 (x2 half)
            pl.BlockSpec((Cout, 1), const2),                     # conv1 bias
            pl.BlockSpec((9, Cout, Cout), const3),               # conv2
            pl.BlockSpec((Cout, 1), const2),                     # conv2 bias
        ],
        out_specs=pl.BlockSpec((1, Cout, HW2), lambda n: (n, 0, 0)),
        compiler_params=pltpu.CompilerParams(
            dimension_semantics=("parallel",)),                  # v7x: 2 TCs split batch
    )(x1f, x2f, nn, pm, cm, wu, bu, w1u, w1x, b1, w2, b2)

    return out.reshape(N, Cout, H2, W2)


# --------------------------- numpy reference check ---------------------------

def _ref_upsample(x1, x2, p):
    N, Cin, H, W = x1.shape
    Ch = Cin // 2
    up = np.zeros((N, Ch, 2 * H, 2 * W), np.float32)
    for kh in range(2):
        for kw in range(2):
            up[:, :, kh::2, kw::2] = np.einsum("nchw,cd->ndhw", x1,
                                               p["up_w"][:, :, kh, kw])
    up += p["up_b"][None, :, None, None]
    x = np.concatenate([up, x2], axis=1)

    def conv3(x, Wc, bc):
        n, c, h, w = x.shape
        xp = np.pad(x, ((0, 0), (0, 0), (1, 1), (1, 1)))
        out = np.zeros((n, Wc.shape[0], h, w), np.float32)
        for kh in range(3):
            for kw in range(3):
                out += np.einsum("nchw,oc->nohw", xp[:, :, kh:kh + h, kw:kw + w],
                                 Wc[:, :, kh, kw])
        out += bc[None, :, None, None]
        return np.maximum(out, 0.0)

    x = conv3(x, p["c1_w"], p["c1_b"])
    x = conv3(x, p["c2_w"], p["c2_b"])
    return x


# ----------------------------------- main ------------------------------------

if __name__ == "__main__":
    in_ch, out_ch = 8, 4
    N, H1, W1 = 2, 8, 8                           # x1 spatial; x2 is 2x that

    key = jax.random.PRNGKey(0)
    keys = jax.random.split(key, 8)
    x1 = jax.random.normal(keys[0], (N, in_ch, H1, W1), jnp.float32)
    x2 = jax.random.normal(keys[1], (N, in_ch // 2, 2 * H1, 2 * W1), jnp.float32)

    params = {
        "up_w": jax.random.normal(keys[2], (in_ch, in_ch // 2, 2, 2), jnp.float32) * 0.1,
        "up_b": jax.random.normal(keys[3], (in_ch // 2,), jnp.float32) * 0.1,
        "c1_w": jax.random.normal(keys[4], (out_ch, in_ch, 3, 3), jnp.float32) * 0.1,
        "c1_b": jax.random.normal(keys[5], (out_ch,), jnp.float32) * 0.1,
        "c2_w": jax.random.normal(keys[6], (out_ch, out_ch, 3, 3), jnp.float32) * 0.1,
        "c2_b": jax.random.normal(keys[7], (out_ch,), jnp.float32) * 0.1,
    }

    out = jax.jit(upsample_forward)(x1, x2, params)
    out = jax.block_until_ready(out)

    assert out.shape == (N, out_ch, 2 * H1, 2 * W1)
    ref = _ref_upsample(np.asarray(x1), np.asarray(x2),
                        {k: np.asarray(v) for k, v in params.items()})
    np.testing.assert_allclose(np.asarray(out), ref, rtol=2e-3, atol=2e-3)

    print("KERNEL_OK")
</pallas_src>

<mosaic_0001>
module attributes {stable_mosaic.version = 11 : i64} {
  func.func @kernel(%arg0: i32, %arg1: memref<1x8x64xf32, #tpu.memory_space<vmem>>, %arg2: memref<1x4x256xf32, #tpu.memory_space<vmem>>, %arg3: memref<64x256xf32, #tpu.memory_space<vmem>>, %arg4: memref<4x256xf32, #tpu.memory_space<vmem>>, %arg5: memref<9x256xf32, #tpu.memory_space<vmem>>, %arg6: memref<4x4x8xf32, #tpu.memory_space<vmem>>, %arg7: memref<4x1xf32, #tpu.memory_space<vmem>>, %arg8: memref<9x4x4xf32, #tpu.memory_space<vmem>>, %arg9: memref<9x4x4xf32, #tpu.memory_space<vmem>>, %arg10: memref<4x1xf32, #tpu.memory_space<vmem>>, %arg11: memref<9x4x4xf32, #tpu.memory_space<vmem>>, %arg12: memref<4x1xf32, #tpu.memory_space<vmem>>, %arg13: memref<1x4x256xf32, #tpu.memory_space<vmem>>) attributes {dimension_semantics = [#tpu.dimension_semantics<parallel>], iteration_bounds = array<i64: 2>, scalar_prefetch = 0 : i64, scratch_operands = 0 : i64, tpu.core_type = #tpu.core_type<tc>, window_params = [{transform_indices = @transform_0, window_bounds = array<i64: 1, 8, 64>}, {transform_indices = @transform_1, window_bounds = array<i64: 1, 4, 256>}, {pipeline_mode = #tpu.pipeline_mode<synchronous>, transform_indices = @transform_2, window_bounds = array<i64: 64, 256>}, {pipeline_mode = #tpu.pipeline_mode<synchronous>, transform_indices = @transform_3, window_bounds = array<i64: 4, 256>}, {pipeline_mode = #tpu.pipeline_mode<synchronous>, transform_indices = @transform_4, window_bounds = array<i64: 9, 256>}, {pipeline_mode = #tpu.pipeline_mode<synchronous>, transform_indices = @transform_5, window_bounds = array<i64: 4, 4, 8>}, {pipeline_mode = #tpu.pipeline_mode<synchronous>, transform_indices = @transform_6, window_bounds = array<i64: 4, 1>}, {pipeline_mode = #tpu.pipeline_mode<synchronous>, transform_indices = @transform_7, window_bounds = array<i64: 9, 4, 4>}, {pipeline_mode = #tpu.pipeline_mode<synchronous>, transform_indices = @transform_8, window_bounds = array<i64: 9, 4, 4>}, {pipeline_mode = #tpu.pipeline_mode<synchronous>, transform_indices = @transform_9, window_bounds = array<i64: 4, 1>}, {pipeline_mode = #tpu.pipeline_mode<synchronous>, transform_indices = @transform_10, window_bounds = array<i64: 9, 4, 4>}, {pipeline_mode = #tpu.pipeline_mode<synchronous>, transform_indices = @transform_11, window_bounds = array<i64: 4, 1>}, {transform_indices = @transform_12, window_bounds = array<i64: 1, 4, 256>}]} {
    %c0 = arith.constant 0 : index
    %c0_0 = arith.constant 0 : index
    %c0_1 = arith.constant 0 : index
    %0 = vector.load %arg1[%c0, %c0_0, %c0_1] : memref<1x8x64xf32, #tpu.memory_space<vmem>>, vector<1x8x64xf32>
    %1 = vector.shape_cast %0 : vector<1x8x64xf32> to vector<8x64xf32>
    %c0_2 = arith.constant 0 : index
    %c0_3 = arith.constant 0 : index
    %c0_4 = arith.constant 0 : index
    %2 = vector.load %arg2[%c0_2, %c0_3, %c0_4] : memref<1x4x256xf32, #tpu.memory_space<vmem>>, vector<1x4x256xf32>
    %3 = vector.shape_cast %2 : vector<1x4x256xf32> to vector<4x256xf32>
    %c0_5 = arith.constant 0 : index
    %c0_6 = arith.constant 0 : index
    %4 = vector.load %arg4[%c0_5, %c0_6] : memref<4x256xf32, #tpu.memory_space<vmem>>, vector<4x256xf32>
    %c0_7 = arith.constant 0 : index
    %c0_8 = arith.constant 0 : index
    %5 = vector.load %arg5[%c0_7, %c0_8] : memref<9x256xf32, #tpu.memory_space<vmem>>, vector<9x256xf32>
    %c0_9 = arith.constant 0 : index
    %c0_10 = arith.constant 0 : index
    %6 = vector.load %arg3[%c0_9, %c0_10] : memref<64x256xf32, #tpu.memory_space<vmem>>, vector<64x256xf32>
    %cst = arith.constant dense<0.000000e+00> : vector<8x256xf32>
    %7 = tpu.matmul %1, %6, %cst {dimension_numbers = #tpu.dot_dimension_numbers<[1], [0], [0], [1], [0, 0, 1, 1], [], []>} : vector<8x64xf32>, vector<64x256xf32>, vector<8x256xf32> -> vector<8x256xf32>
    %c0_11 = arith.constant 0 : index
    %c0_12 = arith.constant 0 : index
    %c0_13 = arith.constant 0 : index
    %8 = vector.load %arg6[%c0_11, %c0_12, %c0_13] : memref<4x4x8xf32, #tpu.memory_space<vmem>>, vector<1x4x8xf32>
    %9 = vector.shape_cast %8 : vector<1x4x8xf32> to vector<4x8xf32>
    %cst_14 = arith.constant dense<0.000000e+00> : vector<4x256xf32>
    %10 = tpu.matmul %9, %7, %cst_14 {dimension_numbers = #tpu.dot_dimension_numbers<[1], [0], [0], [1], [0, 0, 1, 1], [], []>} : vector<4x8xf32>, vector<8x256xf32>, vector<4x256xf32> -> vector<4x256xf32>
    %11 = vector.extract_strided_slice %4 {offsets = [0, 0], sizes = [1, 256], strides = [1, 1]} : vector<4x256xf32> to vector<1x256xf32>
    %12 = vector.broadcast %11 : vector<1x256xf32> to vector<4x256xf32>
    %13 = arith.mulf %10, %12 : vector<4x256xf32>
    %c1 = arith.constant 1 : index
    %c0_15 = arith.constant 0 : index
    %c0_16 = arith.constant 0 : index
    %14 = vector.load %arg6[%c1, %c0_15, %c0_16] : memref<4x4x8xf32, #tpu.memory_space<vmem>>, vector<1x4x8xf32>
    %15 = vector.shape_cast %14 : vector<1x4x8xf32> to vector<4x8xf32>
    %cst_17 = arith.constant dense<0.000000e+00> : vector<4x256xf32>
    %16 = tpu.matmul %15, %7, %cst_17 {dimension_numbers = #tpu.dot_dimension_numbers<[1], [0], [0], [1], [0, 0, 1, 1], [], []>} : vector<4x8xf32>, vector<8x256xf32>, vector<4x256xf32> -> vector<4x256xf32>
    %17 = vector.extract_strided_slice %4 {offsets = [1, 0], sizes = [1, 256], strides = [1, 1]} : vector<4x256xf32> to vector<1x256xf32>
    %18 = vector.broadcast %17 : vector<1x256xf32> to vector<4x256xf32>
    %19 = arith.mulf %16, %18 : vector<4x256xf32>
    %20 = arith.addf %13, %19 : vector<4x256xf32>
    %c2 = arith.constant 2 : index
    %c0_18 = arith.constant 0 : index
    %c0_19 = arith.constant 0 : index
    %21 = vector.load %arg6[%c2, %c0_18, %c0_19] : memref<4x4x8xf32, #tpu.memory_space<vmem>>, vector<1x4x8xf32>
    %22 = vector.shape_cast %21 : vector<1x4x8xf32> to vector<4x8xf32>
    %cst_20 = arith.constant dense<0.000000e+00> : vector<4x256xf32>
    %23 = tpu.matmul %22, %7, %cst_20 {dimension_numbers = #tpu.dot_dimension_numbers<[1], [0], [0], [1], [0, 0, 1, 1], [], []>} : vector<4x8xf32>, vector<8x256xf32>, vector<4x256xf32> -> vector<4x256xf32>
    %24 = vector.extract_strided_slice %4 {offsets = [2, 0], sizes = [1, 256], strides = [1, 1]} : vector<4x256xf32> to vector<1x256xf32>
    %25 = vector.broadcast %24 : vector<1x256xf32> to vector<4x256xf32>
    %26 = arith.mulf %23, %25 : vector<4x256xf32>
    %27 = arith.addf %20, %26 : vector<4x256xf32>
    %c3 = arith.constant 3 : index
    %c0_21 = arith.constant 0 : index
    %c0_22 = arith.constant 0 : index
    %28 = vector.load %arg6[%c3, %c0_21, %c0_22] : memref<4x4x8xf32, #tpu.memory_space<vmem>>, vector<1x4x8xf32>
    %29 = vector.shape_cast %28 : vector<1x4x8xf32> to vector<4x8xf32>
    %cst_23 = arith.constant dense<0.000000e+00> : vector<4x256xf32>
    %30 = tpu.matmul %29, %7, %cst_23 {dimension_numbers = #tpu.dot_dimension_numbers<[1], [0], [0], [1], [0, 0, 1, 1], [], []>} : vector<4x8xf32>, vector<8x256xf32>, vector<4x256xf32> -> vector<4x256xf32>
    %31 = vector.extract_strided_slice %4 {offsets = [3, 0], sizes = [1, 256], strides = [1, 1]} : vector<4x256xf32> to vector<1x256xf32>
    %32 = vector.broadcast %31 : vector<1x256xf32> to vector<4x256xf32>
    %33 = arith.mulf %30, %32 : vector<4x256xf32>
    %34 = arith.addf %27, %33 : vector<4x256xf32>
    %c0_24 = arith.constant 0 : index
    %c0_25 = arith.constant 0 : index
    %35 = vector.load %arg7[%c0_24, %c0_25] : memref<4x1xf32, #tpu.memory_space<vmem>>, vector<4x1xf32>
    %36 = vector.broadcast %35 : vector<4x1xf32> to vector<4x256xf32>
    %37 = arith.addf %34, %36 : vector<4x256xf32>
    %c0_26 = arith.constant 0 : index
    %c0_27 = arith.constant 0 : index
    %c0_28 = arith.constant 0 : index
    %38 = vector.load %arg8[%c0_26, %c0_27, %c0_28] : memref<9x4x4xf32, #tpu.memory_space<vmem>>, vector<1x4x4xf32>
    %39 = vector.shape_cast %38 : vector<1x4x4xf32> to vector<4x4xf32>
    %c17_i32 = arith.constant 17 : i32
    %40 = tpu.dynamic_rotate %37 by %c17_i32 dim 1 : vector<4x256xf32>, i32 -> vector<4x256xf32>
    %41 = vector.extract_strided_slice %5 {offsets = [0, 0], sizes = [1, 256], strides = [1, 1]} : vector<9x256xf32> to vector<1x256xf32>
    %42 = vector.broadcast %41 : vector<1x256xf32> to vector<4x256xf32>
    %43 = arith.mulf %40, %42 : vector<4x256xf32>
    %cst_29 = arith.constant dense<0.000000e+00> : vector<4x256xf32>
    %44 = tpu.matmul %39, %43, %cst_29 {dimension_numbers = #tpu.dot_dimension_numbers<[1], [0], [0], [1], [0, 0, 1, 1], [], []>} : vector<4x4xf32>, vector<4x256xf32>, vector<4x256xf32> -> vector<4x256xf32>
    %c0_30 = arith.constant 0 : index
    %c0_31 = arith.constant 0 : index
    %c0_32 = arith.constant 0 : index
    %45 = vector.load %arg9[%c0_30, %c0_31, %c0_32] : memref<9x4x4xf32, #tpu.memory_space<vmem>>, vector<1x4x4xf32>
    %46 = vector.shape_cast %45 : vector<1x4x4xf32> to vector<4x4xf32>
    %c17_i32_33 = arith.constant 17 : i32
    %47 = tpu.dynamic_rotate %3 by %c17_i32_33 dim 1 : vector<4x256xf32>, i32 -> vector<4x256xf32>
    %48 = vector.extract_strided_slice %5 {offsets = [0, 0], sizes = [1, 256], strides = [1, 1]} : vector<9x256xf32> to vector<1x256xf32>
    %49 = vector.broadcast %48 : vector<1x256xf32> to vector<4x256xf32>
    %50 = arith.mulf %47, %49 : vector<4x256xf32>
    %cst_34 = arith.constant dense<0.000000e+00> : vector<4x256xf32>
    %51 = tpu.matmul %46, %50, %cst_34 {dimension_numbers = #tpu.dot_dimension_numbers<[1], [0], [0], [1], [0, 0, 1, 1], [], []>} : vector<4x4xf32>, vector<4x256xf32>, vector<4x256xf32> -> vector<4x256xf32>
    %52 = arith.addf %44, %51 : vector<4x256xf32>
    %c1_35 = arith.constant 1 : index
    %c0_36 = arith.constant 0 : index
    %c0_37 = arith.constant 0 : index
    %53 = vector.load %arg8[%c1_35, %c0_36, %c0_37] : memref<9x4x4xf32, #tpu.memory_space<vmem>>, vector<1x4x4xf32>
    %54 = vector.shape_cast %53 : vector<1x4x4xf32> to vector<4x4xf32>
    %c16_i32 = arith.constant 16 : i32
    %55 = tpu.dynamic_rotate %37 by %c16_i32 dim 1 : vector<4x256xf32>, i32 -> vector<4x256xf32>
    %56 = vector.extract_strided_slice %5 {offsets = [1, 0], sizes = [1, 256], strides = [1, 1]} : vector<9x256xf32> to vector<1x256xf32>
    %57 = vector.broadcast %56 : vector<1x256xf32> to vector<4x256xf32>
    %58 = arith.mulf %55, %57 : vector<4x256xf32>
    %cst_38 = arith.constant dense<0.000000e+00> : vector<4x256xf32>
    %59 = tpu.matmul %54, %58, %cst_38 {dimension_numbers = #tpu.dot_dimension_numbers<[1], [0], [0], [1], [0, 0, 1, 1], [], []>} : vector<4x4xf32>, vector<4x256xf32>, vector<4x256xf32> -> vector<4x256xf32>
    %c1_39 = arith.constant 1 : index
    %c0_40 = arith.constant 0 : index
    %c0_41 = arith.constant 0 : index
    %60 = vector.load %arg9[%c1_39, %c0_40, %c0_41] : memref<9x4x4xf32, #tpu.memory_space<vmem>>, vector<1x4x4xf32>
    %61 = vector.shape_cast %60 : vector<1x4x4xf32> to vector<4x4xf32>
    %c16_i32_42 = arith.constant 16 : i32
    %62 = tpu.dynamic_rotate %3 by %c16_i32_42 dim 1 : vector<4x256xf32>, i32 -> vector<4x256xf32>
    %63 = vector.extract_strided_slice %5 {offsets = [1, 0], sizes = [1, 256], strides = [1, 1]} : vector<9x256xf32> to vector<1x256xf32>
    %64 = vector.broadcast %63 : vector<1x256xf32> to vector<4x256xf32>
    %65 = arith.mulf %62, %64 : vector<4x256xf32>
    %cst_43 = arith.constant dense<0.000000e+00> : vector<4x256xf32>
    %66 = tpu.matmul %61, %65, %cst_43 {dimension_numbers = #tpu.dot_dimension_numbers<[1], [0], [0], [1], [0, 0, 1, 1], [], []>} : vector<4x4xf32>, vector<4x256xf32>, vector<4x256xf32> -> vector<4x256xf32>
    %67 = arith.addf %59, %66 : vector<4x256xf32>
    %68 = arith.addf %52, %67 : vector<4x256xf32>
    %c2_44 = arith.constant 2 : index
    %c0_45 = arith.constant 0 : index
    %c0_46 = arith.constant 0 : index
    %69 = vector.load %arg8[%c2_44, %c0_45, %c0_46] : memref<9x4x4xf32, #tpu.memory_space<vmem>>, vector<1x4x4xf32>
    %70 = vector.shape_cast %69 : vector<1x4x4xf32> to vector<4x4xf32>
    %c15_i32 = arith.constant 15 : i32
    %71 = tpu.dynamic_rotate %37 by %c15_i32 dim 1 : vector<4x256xf32>, i32 -> vector<4x256xf32>
    %72 = vector.extract_strided_slice %5 {offsets = [2, 0], sizes = [1, 256], strides = [1, 1]} : vector<9x256xf32> to vector<1x256xf32>
    %73 = vector.broadcast %72 : vector<1x256xf32> to vector<4x256xf32>
    %74 = arith.mulf %71, %73 : vector<4x256xf32>
    %cst_47 = arith.constant dense<0.000000e+00> : vector<4x256xf32>
    %75 = tpu.matmul %70, %74, %cst_47 {dimension_numbers = #tpu.dot_dimension_numbers<[1], [0], [0], [1], [0, 0, 1, 1], [], []>} : vector<4x4xf32>, vector<4x256xf32>, vector<4x256xf32> -> vector<4x256xf32>
    %c2_48 = arith.constant 2 : index
    %c0_49 = arith.constant 0 : index
    %c0_50 = arith.constant 0 : index
    %76 = vector.load %arg9[%c2_48, %c0_49, %c0_50] : memref<9x4x4xf32, #tpu.memory_space<vmem>>, vector<1x4x4xf32>
    %77 = vector.shape_cast %76 : vector<1x4x4xf32> to vector<4x4xf32>
    %c15_i32_51 = arith.constant 15 : i32
    %78 = tpu.dynamic_rotate %3 by %c15_i32_51 dim 1 : vector<4x256xf32>, i32 -> vector<4x256xf32>
    %79 = vector.extract_strided_slice %5 {offsets = [2, 0], sizes = [1, 256], strides = [1, 1]} : vector<9x256xf32> to vector<1x256xf32>
    %80 = vector.broadcast %79 : vector<1x256xf32> to vector<4x256xf32>
    %81 = arith.mulf %78, %80 : vector<4x256xf32>
    %cst_52 = arith.constant dense<0.000000e+00> : vector<4x256xf32>
    %82 = tpu.matmul %77, %81, %cst_52 {dimension_numbers = #tpu.dot_dimension_numbers<[1], [0], [0], [1], [0, 0, 1, 1], [], []>} : vector<4x4xf32>, vector<4x256xf32>, vector<4x256xf32> -> vector<4x256xf32>
    %83 = arith.addf %75, %82 : vector<4x256xf32>
    %84 = arith.addf %68, %83 : vector<4x256xf32>
    %c3_53 = arith.constant 3 : index
    %c0_54 = arith.constant 0 : index
    %c0_55 = arith.constant 0 : index
    %85 = vector.load %arg8[%c3_53, %c0_54, %c0_55] : memref<9x4x4xf32, #tpu.memory_space<vmem>>, vector<1x4x4xf32>
    %86 = vector.shape_cast %85 : vector<1x4x4xf32> to vector<4x4xf32>
    %c1_i32 = arith.constant 1 : i32
    %87 = tpu.dynamic_rotate %37 by %c1_i32 dim 1 : vector<4x256xf32>, i32 -> vector<4x256xf32>
    %88 = vector.extract_strided_slice %5 {offsets = [3, 0], sizes = [1, 256], strides = [1, 1]} : vector<9x256xf32> to vector<1x256xf32>
    %89 = vector.broadcast %88 : vector<1x256xf32> to vector<4x256xf32>
    %90 = arith.mulf %87, %89 : vector<4x256xf32>
    %cst_56 = arith.constant dense<0.000000e+00> : vector<4x256xf32>
    %91 = tpu.matmul %86, %90, %cst_56 {dimension_numbers = #tpu.dot_dimension_numbers<[1], [0], [0], [1], [0, 0, 1, 1], [], []>} : vector<4x4xf32>, vector<4x256xf32>, vector<4x256xf32> -> vector<4x256xf32>
    %c3_57 = arith.constant 3 : index
    %c0_58 = arith.constant 0 : index
    %c0_59 = arith.constant 0 : index
    %92 = vector.load %arg9[%c3_57, %c0_58, %c0_59] : memref<9x4x4xf32, #tpu.memory_space<vmem>>, vector<1x4x4xf32>
    %93 = vector.shape_cast %92 : vector<1x4x4xf32> to vector<4x4xf32>
    %c1_i32_60 = arith.constant 1 : i32
    %94 = tpu.dynamic_rotate %3 by %c1_i32_60 dim 1 : vector<4x256xf32>, i32 -> vector<4x256xf32>
    %95 = vector.extract_strided_slice %5 {offsets = [3, 0], sizes = [1, 256], strides = [1, 1]} : vector<9x256xf32> to vector<1x256xf32>
    %96 = vector.broadcast %95 : vector<1x256xf32> to vector<4x256xf32>
    %97 = arith.mulf %94, %96 : vector<4x256xf32>
    %cst_61 = arith.constant dense<0.000000e+00> : vector<4x256xf32>
    %98 = tpu.matmul %93, %97, %cst_61 {dimension_numbers = #tpu.dot_dimension_numbers<[1], [0], [0], [1], [0, 0, 1, 1], [], []>} : vector<4x4xf32>, vector<4x256xf32>, vector<4x256xf32> -> vector<4x256xf32>
    %99 = arith.addf %91, %98 : vector<4x256xf32>
    %100 = arith.addf %84, %99 : vector<4x256xf32>
    %c4 = arith.constant 4 : index
    %c0_62 = arith.constant 0 : index
    %c0_63 = arith.constant 0 : index
    %101 = vector.load %arg8[%c4, %c0_62, %c0_63] : memref<9x4x4xf32, #tpu.memory_space<vmem>>, vector<1x4x4xf32>
    %102 = vector.shape_cast %101 : vector<1x4x4xf32> to vector<4x4xf32>
    %103 = vector.extract_strided_slice %5 {offsets = [4, 0], sizes = [1, 256], strides = [1, 1]} : vector<9x256xf32> to vector<1x256xf32>
    %104 = vector.broadcast %103 : vector<1x256xf32> to vector<4x256xf32>
    %105 = arith.mulf %37, %104 : vector<4x256xf32>
    %cst_64 = arith.constant dense<0.000000e+00> : vector<4x256xf32>
    %106 = tpu.matmul %102, %105, %cst_64 {dimension_numbers = #tpu.dot_dimension_numbers<[1], [0], [0], [1], [0, 0, 1, 1], [], []>} : vector<4x4xf32>, vector<4x256xf32>, vector<4x256xf32> -> vector<4x256xf32>
    %c4_65 = arith.constant 4 : index
    %c0_66 = arith.constant 0 : index
    %c0_67 = arith.constant 0 : index
    %107 = vector.load %arg9[%c4_65, %c0_66, %c0_67] : memref<9x4x4xf32, #tpu.memory_space<vmem>>, vector<1x4x4xf32>
    %108 = vector.shape_cast %107 : vector<1x4x4xf32> to vector<4x4xf32>
    %109 = vector.extract_strided_slice %5 {offsets = [4, 0], sizes = [1, 256], strides = [1, 1]} : vector<9x256xf32> to vector<1x256xf32>
    %110 = vector.broadcast %109 : vector<1x256xf32> to vector<4x256xf32>
    %111 = arith.mulf %3, %110 : vector<4x256xf32>
    %cst_68 = arith.constant dense<0.000000e+00> : vector<4x256xf32>
    %112 = tpu.matmul %108, %111, %cst_68 {dimension_numbers = #tpu.dot_dimension_numbers<[1], [0], [0], [1], [0, 0, 1, 1], [], []>} : vector<4x4xf32>, vector<4x256xf32>, vector<4x256xf32> -> vector<4x256xf32>
    %113 = arith.addf %106, %112 : vector<4x256xf32>
    %114 = arith.addf %100, %113 : vector<4x256xf32>
    %c5 = arith.constant 5 : index
    %c0_69 = arith.constant 0 : index
    %c0_70 = arith.constant 0 : index
    %115 = vector.load %arg8[%c5, %c0_69, %c0_70] : memref<9x4x4xf32, #tpu.memory_space<vmem>>, vector<1x4x4xf32>
    %116 = vector.shape_cast %115 : vector<1x4x4xf32> to vector<4x4xf32>
    %c255_i32 = arith.constant 255 : i32
    %117 = tpu.dynamic_rotate %37 by %c255_i32 dim 1 : vector<4x256xf32>, i32 -> vector<4x256xf32>
    %118 = vector.extract_strided_slice %5 {offsets = [5, 0], sizes = [1, 256], strides = [1, 1]} : vector<9x256xf32> to vector<1x256xf32>
    %119 = vector.broadcast %118 : vector<1x256xf32> to vector<4x256xf32>
    %120 = arith.mulf %117, %119 : vector<4x256xf32>
    %cst_71 = arith.constant dense<0.000000e+00> : vector<4x256xf32>
    %121 = tpu.matmul %116, %120, %cst_71 {dimension_numbers = #tpu.dot_dimension_numbers<[1], [0], [0], [1], [0, 0, 1, 1], [], []>} : vector<4x4xf32>, vector<4x256xf32>, vector<4x256xf32> -> vector<4x256xf32>
    %c5_72 = arith.constant 5 : index
    %c0_73 = arith.constant 0 : index
    %c0_74 = arith.constant 0 : index
    %122 = vector.load %arg9[%c5_72, %c0_73, %c0_74] : memref<9x4x4xf32, #tpu.memory_space<vmem>>, vector<1x4x4xf32>
    %123 = vector.shape_cast %122 : vector<1x4x4xf32> to vector<4x4xf32>
    %c255_i32_75 = arith.constant 255 : i32
    %124 = tpu.dynamic_rotate %3 by %c255_i32_75 dim 1 : vector<4x256xf32>, i32 -> vector<4x256xf32>
    %125 = vector.extract_strided_slice %5 {offsets = [5, 0], sizes = [1, 256], strides = [1, 1]} : vector<9x256xf32> to vector<1x256xf32>
    %126 = vector.broadcast %125 : vector<1x256xf32> to vector<4x256xf32>
    %127 = arith.mulf %124, %126 : vector<4x256xf32>
    %cst_76 = arith.constant dense<0.000000e+00> : vector<4x256xf32>
    %128 = tpu.matmul %123, %127, %cst_76 {dimension_numbers = #tpu.dot_dimension_numbers<[1], [0], [0], [1], [0, 0, 1, 1], [], []>} : vector<4x4xf32>, vector<4x256xf32>, vector<4x256xf32> -> vector<4x256xf32>
    %129 = arith.addf %121, %128 : vector<4x256xf32>
    %130 = arith.addf %114, %129 : vector<4x256xf32>
    %c6 = arith.constant 6 : index
    %c0_77 = arith.constant 0 : index
    %c0_78 = arith.constant 0 : index
    %131 = vector.load %arg8[%c6, %c0_77, %c0_78] : memref<9x4x4xf32, #tpu.memory_space<vmem>>, vector<1x4x4xf32>
    %132 = vector.shape_cast %131 : vector<1x4x4xf32> to vector<4x4xf32>
    %c241_i32 = arith.constant 241 : i32
    %133 = tpu.dynamic_rotate %37 by %c241_i32 dim 1 : vector<4x256xf32>, i32 -> vector<4x256xf32>
    %134 = vector.extract_strided_slice %5 {offsets = [6, 0], sizes = [1, 256], strides = [1, 1]} : vector<9x256xf32> to vector<1x256xf32>
    %135 = vector.broadcast %134 : vector<1x256xf32> to vector<4x256xf32>
    %136 = arith.mulf %133, %135 : vector<4x256xf32>
    %cst_79 = arith.constant dense<0.000000e+00> : vector<4x256xf32>
    %137 = tpu.matmul %132, %136, %cst_79 {dimension_numbers = #tpu.dot_dimension_numbers<[1], [0], [0], [1], [0, 0, 1, 1], [], []>} : vector<4x4xf32>, vector<4x256xf32>, vector<4x256xf32> -> vector<4x256xf32>
    %c6_80 = arith.constant 6 : index
    %c0_81 = arith.constant 0 : index
    %c0_82 = arith.constant 0 : index
    %138 = vector.load %arg9[%c6_80, %c0_81, %c0_82] : memref<9x4x4xf32, #tpu.memory_space<vmem>>, vector<1x4x4xf32>
    %139 = vector.shape_cast %138 : vector<1x4x4xf32> to vector<4x4xf32>
    %c241_i32_83 = arith.constant 241 : i32
    %140 = tpu.dynamic_rotate %3 by %c241_i32_83 dim 1 : vector<4x256xf32>, i32 -> vector<4x256xf32>
    %141 = vector.extract_strided_slice %5 {offsets = [6, 0], sizes = [1, 256], strides = [1, 1]} : vector<9x256xf32> to vector<1x256xf32>
    %142 = vector.broadcast %141 : vector<1x256xf32> to vector<4x256xf32>
    %143 = arith.mulf %140, %142 : vector<4x256xf32>
    %cst_84 = arith.constant dense<0.000000e+00> : vector<4x256xf32>
    %144 = tpu.matmul %139, %143, %cst_84 {dimension_numbers = #tpu.dot_dimension_numbers<[1], [0], [0], [1], [0, 0, 1, 1], [], []>} : vector<4x4xf32>, vector<4x256xf32>, vector<4x256xf32> -> vector<4x256xf32>
    %145 = arith.addf %137, %144 : vector<4x256xf32>
    %146 = arith.addf %130, %145 : vector<4x256xf32>
    %c7 = arith.constant 7 : index
    %c0_85 = arith.constant 0 : index
    %c0_86 = arith.constant 0 : index
    %147 = vector.load %arg8[%c7, %c0_85, %c0_86] : memref<9x4x4xf32, #tpu.memory_space<vmem>>, vector<1x4x4xf32>
    %148 = vector.shape_cast %147 : vector<1x4x4xf32> to vector<4x4xf32>
    %c240_i32 = arith.constant 240 : i32
    %149 = tpu.dynamic_rotate %37 by %c240_i32 dim 1 : vector<4x256xf32>, i32 -> vector<4x256xf32>
    %150 = vector.extract_strided_slice %5 {offsets = [7, 0], sizes = [1, 256], strides = [1, 1]} : vector<9x256xf32> to vector<1x256xf32>
    %151 = vector.broadcast %150 : vector<1x256xf32> to vector<4x256xf32>
    %152 = arith.mulf %149, %151 : vector<4x256xf32>
    %cst_87 = arith.constant dense<0.000000e+00> : vector<4x256xf32>
    %153 = tpu.matmul %148, %152, %cst_87 {dimension_numbers = #tpu.dot_dimension_numbers<[1], [0], [0], [1], [0, 0, 1, 1], [], []>} : vector<4x4xf32>, vector<4x256xf32>, vector<4x256xf32> -> vector<4x256xf32>
    %c7_88 = arith.constant 7 : index
    %c0_89 = arith.constant 0 : index
    %c0_90 = arith.constant 0 : index
    %154 = vector.load %arg9[%c7_88, %c0_89, %c0_90] : memref<9x4x4xf32, #tpu.memory_space<vmem>>, vector<1x4x4xf32>
    %155 = vector.shape_cast %154 : vector<1x4x4xf32> to vector<4x4xf32>
    %c240_i32_91 = arith.constant 240 : i32
    %156 = tpu.dynamic_rotate %3 by %c240_i32_91 dim 1 : vector<4x256xf32>, i32 -> vector<4x256xf32>
    %157 = vector.extract_strided_slice %5 {offsets = [7, 0], sizes = [1, 256], strides = [1, 1]} : vector<9x256xf32> to vector<1x256xf32>
    %158 = vector.broadcast %157 : vector<1x256xf32> to vector<4x256xf32>
    %159 = arith.mulf %156, %158 : vector<4x256xf32>
    %cst_92 = arith.constant dense<0.000000e+00> : vector<4x256xf32>
    %160 = tpu.matmul %155, %159, %cst_92 {dimension_numbers = #tpu.dot_dimension_numbers<[1], [0], [0], [1], [0, 0, 1, 1], [], []>} : vector<4x4xf32>, vector<4x256xf32>, vector<4x256xf32> -> vector<4x256xf32>
    %161 = arith.addf %153, %160 : vector<4x256xf32>
    %162 = arith.addf %146, %161 : vector<4x256xf32>
    %c8 = arith.constant 8 : index
    %c0_93 = arith.constant 0 : index
    %c0_94 = arith.constant 0 : index
    %163 = vector.load %arg8[%c8, %c0_93, %c0_94] : memref<9x4x4xf32, #tpu.memory_space<vmem>>, vector<1x4x4xf32>
    %164 = vector.shape_cast %163 : vector<1x4x4xf32> to vector<4x4xf32>
    %c239_i32 = arith.constant 239 : i32
    %165 = tpu.dynamic_rotate %37 by %c239_i32 dim 1 : vector<4x256xf32>, i32 -> vector<4x256xf32>
    %166 = vector.extract_strided_slice %5 {offsets = [8, 0], sizes = [1, 256], strides = [1, 1]} : vector<9x256xf32> to vector<1x256xf32>
    %167 = vector.broadcast %166 : vector<1x256xf32> to vector<4x256xf32>
    %168 = arith.mulf %165, %167 : vector<4x256xf32>
    %cst_95 = arith.constant dense<0.000000e+00> : vector<4x256xf32>
    %169 = tpu.matmul %164, %168, %cst_95 {dimension_numbers = #tpu.dot_dimension_numbers<[1], [0], [0], [1], [0, 0, 1, 1], [], []>} : vector<4x4xf32>, vector<4x256xf32>, vector<4x256xf32> -> vector<4x256xf32>
    %c8_96 = arith.constant 8 : index
    %c0_97 = arith.constant 0 : index
    %c0_98 = arith.constant 0 : index
    %170 = vector.load %arg9[%c8_96, %c0_97, %c0_98] : memref<9x4x4xf32, #tpu.memory_space<vmem>>, vector<1x4x4xf32>
    %171 = vector.shape_cast %170 : vector<1x4x4xf32> to vector<4x4xf32>
    %c239_i32_99 = arith.constant 239 : i32
    %172 = tpu.dynamic_rotate %3 by %c239_i32_99 dim 1 : vector<4x256xf32>, i32 -> vector<4x256xf32>
    %173 = vector.extract_strided_slice %5 {offsets = [8, 0], sizes = [1, 256], strides = [1, 1]} : vector<9x256xf32> to vector<1x256xf32>
    %174 = vector.broadcast %173 : vector<1x256xf32> to vector<4x256xf32>
    %175 = arith.mulf %172, %174 : vector<4x256xf32>
    %cst_100 = arith.constant dense<0.000000e+00> : vector<4x256xf32>
    %176 = tpu.matmul %171, %175, %cst_100 {dimension_numbers = #tpu.dot_dimension_numbers<[1], [0], [0], [1], [0, 0, 1, 1], [], []>} : vector<4x4xf32>, vector<4x256xf32>, vector<4x256xf32> -> vector<4x256xf32>
    %177 = arith.addf %169, %176 : vector<4x256xf32>
    %178 = arith.addf %162, %177 : vector<4x256xf32>
    %c0_101 = arith.constant 0 : index
    %c0_102 = arith.constant 0 : index
    %179 = vector.load %arg10[%c0_101, %c0_102] : memref<4x1xf32, #tpu.memory_space<vmem>>, vector<4x1xf32>
    %180 = vector.broadcast %179 : vector<4x1xf32> to vector<4x256xf32>
    %181 = arith.addf %178, %180 : vector<4x256xf32>
    %cst_103 = arith.constant 0.000000e+00 : f32
    %182 = vector.broadcast %cst_103 : f32 to vector<4x256xf32>
    %183 = arith.maximumf %181, %182 : vector<4x256xf32>
    %c0_104 = arith.constant 0 : index
    %c0_105 = arith.constant 0 : index
    %c0_106 = arith.constant 0 : index
    %184 = vector.load %arg11[%c0_104, %c0_105, %c0_106] : memref<9x4x4xf32, #tpu.memory_space<vmem>>, vector<1x4x4xf32>
    %185 = vector.shape_cast %184 : vector<1x4x4xf32> to vector<4x4xf32>
    %c17_i32_107 = arith.constant 17 : i32
    %186 = tpu.dynamic_rotate %183 by %c17_i32_107 dim 1 : vector<4x256xf32>, i32 -> vector<4x256xf32>
    %187 = vector.extract_strided_slice %5 {offsets = [0, 0], sizes = [1, 256], strides = [1, 1]} : vector<9x256xf32> to vector<1x256xf32>
    %188 = vector.broadcast %187 : vector<1x256xf32> to vector<4x256xf32>
    %189 = arith.mulf %186, %188 : vector<4x256xf32>
    %cst_108 = arith.constant dense<0.000000e+00> : vector<4x256xf32>
    %190 = tpu.matmul %185, %189, %cst_108 {dimension_numbers = #tpu.dot_dimension_numbers<[1], [0], [0], [1], [0, 0, 1, 1], [], []>} : vector<4x4xf32>, vector<4x256xf32>, vector<4x256xf32> -> vector<4x256xf32>
    %c1_109 = arith.constant 1 : index
    %c0_110 = arith.constant 0 : index
    %c0_111 = arith.constant 0 : index
    %191 = vector.load %arg11[%c1_109, %c0_110, %c0_111] : memref<9x4x4xf32, #tpu.memory_space<vmem>>, vector<1x4x4xf32>
    %192 = vector.shape_cast %191 : vector<1x4x4xf32> to vector<4x4xf32>
    %c16_i32_112 = arith.constant 16 : i32
    %193 = tpu.dynamic_rotate %183 by %c16_i32_112 dim 1 : vector<4x256xf32>, i32 -> vector<4x256xf32>
    %194 = vector.extract_strided_slice %5 {offsets = [1, 0], sizes = [1, 256], strides = [1, 1]} : vector<9x256xf32> to vector<1x256xf32>
    %195 = vector.broadcast %194 : vector<1x256xf32> to vector<4x256xf32>
    %196 = arith.mulf %193, %195 : vector<4x256xf32>
    %cst_113 = arith.constant dense<0.000000e+00> : vector<4x256xf32>
    %197 = tpu.matmul %192, %196, %cst_113 {dimension_numbers = #tpu.dot_dimension_numbers<[1], [0], [0], [1], [0, 0, 1, 1], [], []>} : vector<4x4xf32>, vector<4x256xf32>, vector<4x256xf32> -> vector<4x256xf32>
    %198 = arith.addf %190, %197 : vector<4x256xf32>
    %c2_114 = arith.constant 2 : index
    %c0_115 = arith.constant 0 : index
    %c0_116 = arith.constant 0 : index
    %199 = vector.load %arg11[%c2_114, %c0_115, %c0_116] : memref<9x4x4xf32, #tpu.memory_space<vmem>>, vector<1x4x4xf32>
    %200 = vector.shape_cast %199 : vector<1x4x4xf32> to vector<4x4xf32>
    %c15_i32_117 = arith.constant 15 : i32
    %201 = tpu.dynamic_rotate %183 by %c15_i32_117 dim 1 : vector<4x256xf32>, i32 -> vector<4x256xf32>
    %202 = vector.extract_strided_slice %5 {offsets = [2, 0], sizes = [1, 256], strides = [1, 1]} : vector<9x256xf32> to vector<1x256xf32>
    %203 = vector.broadcast %202 : vector<1x256xf32> to vector<4x256xf32>
    %204 = arith.mulf %201, %203 : vector<4x256xf32>
    %cst_118 = arith.constant dense<0.000000e+00> : vector<4x256xf32>
    %205 = tpu.matmul %200, %204, %cst_118 {dimension_numbers = #tpu.dot_dimension_numbers<[1], [0], [0], [1], [0, 0, 1, 1], [], []>} : vector<4x4xf32>, vector<4x256xf32>, vector<4x256xf32> -> vector<4x256xf32>
    %206 = arith.addf %198, %205 : vector<4x256xf32>
    %c3_119 = arith.constant 3 : index
    %c0_120 = arith.constant 0 : index
    %c0_121 = arith.constant 0 : index
    %207 = vector.load %arg11[%c3_119, %c0_120, %c0_121] : memref<9x4x4xf32, #tpu.memory_space<vmem>>, vector<1x4x4xf32>
    %208 = vector.shape_cast %207 : vector<1x4x4xf32> to vector<4x4xf32>
    %c1_i32_122 = arith.constant 1 : i32
    %209 = tpu.dynamic_rotate %183 by %c1_i32_122 dim 1 : vector<4x256xf32>, i32 -> vector<4x256xf32>
    %210 = vector.extract_strided_slice %5 {offsets = [3, 0], sizes = [1, 256], strides = [1, 1]} : vector<9x256xf32> to vector<1x256xf32>
    %211 = vector.broadcast %210 : vector<1x256xf32> to vector<4x256xf32>
    %212 = arith.mulf %209, %211 : vector<4x256xf32>
    %cst_123 = arith.constant dense<0.000000e+00> : vector<4x256xf32>
    %213 = tpu.matmul %208, %212, %cst_123 {dimension_numbers = #tpu.dot_dimension_numbers<[1], [0], [0], [1], [0, 0, 1, 1], [], []>} : vector<4x4xf32>, vector<4x256xf32>, vector<4x256xf32> -> vector<4x256xf32>
    %214 = arith.addf %206, %213 : vector<4x256xf32>
    %c4_124 = arith.constant 4 : index
    %c0_125 = arith.constant 0 : index
    %c0_126 = arith.constant 0 : index
    %215 = vector.load %arg11[%c4_124, %c0_125, %c0_126] : memref<9x4x4xf32, #tpu.memory_space<vmem>>, vector<1x4x4xf32>
    %216 = vector.shape_cast %215 : vector<1x4x4xf32> to vector<4x4xf32>
    %217 = vector.extract_strided_slice %5 {offsets = [4, 0], sizes = [1, 256], strides = [1, 1]} : vector<9x256xf32> to vector<1x256xf32>
    %218 = vector.broadcast %217 : vector<1x256xf32> to vector<4x256xf32>
    %219 = arith.mulf %183, %218 : vector<4x256xf32>
    %cst_127 = arith.constant dense<0.000000e+00> : vector<4x256xf32>
    %220 = tpu.matmul %216, %219, %cst_127 {dimension_numbers = #tpu.dot_dimension_numbers<[1], [0], [0], [1], [0, 0, 1, 1], [], []>} : vector<4x4xf32>, vector<4x256xf32>, vector<4x256xf32> -> vector<4x256xf32>
    %221 = arith.addf %214, %220 : vector<4x256xf32>
    %c5_128 = arith.constant 5 : index
    %c0_129 = arith.constant 0 : index
    %c0_130 = arith.constant 0 : index
    %222 = vector.load %arg11[%c5_128, %c0_129, %c0_130] : memref<9x4x4xf32, #tpu.memory_space<vmem>>, vector<1x4x4xf32>
    %223 = vector.shape_cast %222 : vector<1x4x4xf32> to vector<4x4xf32>
    %c255_i32_131 = arith.constant 255 : i32
    %224 = tpu.dynamic_rotate %183 by %c255_i32_131 dim 1 : vector<4x256xf32>, i32 -> vector<4x256xf32>
    %225 = vector.extract_strided_slice %5 {offsets = [5, 0], sizes = [1, 256], strides = [1, 1]} : vector<9x256xf32> to vector<1x256xf32>
    %226 = vector.broadcast %225 : vector<1x256xf32> to vector<4x256xf32>
    %227 = arith.mulf %224, %226 : vector<4x256xf32>
    %cst_132 = arith.constant dense<0.000000e+00> : vector<4x256xf32>
    %228 = tpu.matmul %223, %227, %cst_132 {dimension_numbers = #tpu.dot_dimension_numbers<[1], [0], [0], [1], [0, 0, 1, 1], [], []>} : vector<4x4xf32>, vector<4x256xf32>, vector<4x256xf32> -> vector<4x256xf32>
    %229 = arith.addf %221, %228 : vector<4x256xf32>
    %c6_133 = arith.constant 6 : index
    %c0_134 = arith.constant 0 : index
    %c0_135 = arith.constant 0 : index
    %230 = vector.load %arg11[%c6_133, %c0_134, %c0_135] : memref<9x4x4xf32, #tpu.memory_space<vmem>>, vector<1x4x4xf32>
    %231 = vector.shape_cast %230 : vector<1x4x4xf32> to vector<4x4xf32>
    %c241_i32_136 = arith.constant 241 : i32
    %232 = tpu.dynamic_rotate %183 by %c241_i32_136 dim 1 : vector<4x256xf32>, i32 -> vector<4x256xf32>
    %233 = vector.extract_strided_slice %5 {offsets = [6, 0], sizes = [1, 256], strides = [1, 1]} : vector<9x256xf32> to vector<1x256xf32>
    %234 = vector.broadcast %233 : vector<1x256xf32> to vector<4x256xf32>
    %235 = arith.mulf %232, %234 : vector<4x256xf32>
    %cst_137 = arith.constant dense<0.000000e+00> : vector<4x256xf32>
    %236 = tpu.matmul %231, %235, %cst_137 {dimension_numbers = #tpu.dot_dimension_numbers<[1], [0], [0], [1], [0, 0, 1, 1], [], []>} : vector<4x4xf32>, vector<4x256xf32>, vector<4x256xf32> -> vector<4x256xf32>
    %237 = arith.addf %229, %236 : vector<4x256xf32>
    %c7_138 = arith.constant 7 : index
    %c0_139 = arith.constant 0 : index
    %c0_140 = arith.constant 0 : index
    %238 = vector.load %arg11[%c7_138, %c0_139, %c0_140] : memref<9x4x4xf32, #tpu.memory_space<vmem>>, vector<1x4x4xf32>
    %239 = vector.shape_cast %238 : vector<1x4x4xf32> to vector<4x4xf32>
    %c240_i32_141 = arith.constant 240 : i32
    %240 = tpu.dynamic_rotate %183 by %c240_i32_141 dim 1 : vector<4x256xf32>, i32 -> vector<4x256xf32>
    %241 = vector.extract_strided_slice %5 {offsets = [7, 0], sizes = [1, 256], strides = [1, 1]} : vector<9x256xf32> to vector<1x256xf32>
    %242 = vector.broadcast %241 : vector<1x256xf32> to vector<4x256xf32>
    %243 = arith.mulf %240, %242 : vector<4x256xf32>
    %cst_142 = arith.constant dense<0.000000e+00> : vector<4x256xf32>
    %244 = tpu.matmul %239, %243, %cst_142 {dimension_numbers = #tpu.dot_dimension_numbers<[1], [0], [0], [1], [0, 0, 1, 1], [], []>} : vector<4x4xf32>, vector<4x256xf32>, vector<4x256xf32> -> vector<4x256xf32>
    %245 = arith.addf %237, %244 : vector<4x256xf32>
    %c8_143 = arith.constant 8 : index
    %c0_144 = arith.constant 0 : index
    %c0_145 = arith.constant 0 : index
    %246 = vector.load %arg11[%c8_143, %c0_144, %c0_145] : memref<9x4x4xf32, #tpu.memory_space<vmem>>, vector<1x4x4xf32>
    %247 = vector.shape_cast %246 : vector<1x4x4xf32> to vector<4x4xf32>
    %c239_i32_146 = arith.constant 239 : i32
    %248 = tpu.dynamic_rotate %183 by %c239_i32_146 dim 1 : vector<4x256xf32>, i32 -> vector<4x256xf32>
    %249 = vector.extract_strided_slice %5 {offsets = [8, 0], sizes = [1, 256], strides = [1, 1]} : vector<9x256xf32> to vector<1x256xf32>
    %250 = vector.broadcast %249 : vector<1x256xf32> to vector<4x256xf32>
    %251 = arith.mulf %248, %250 : vector<4x256xf32>
    %cst_147 = arith.constant dense<0.000000e+00> : vector<4x256xf32>
    %252 = tpu.matmul %247, %251, %cst_147 {dimension_numbers = #tpu.dot_dimension_numbers<[1], [0], [0], [1], [0, 0, 1, 1], [], []>} : vector<4x4xf32>, vector<4x256xf32>, vector<4x256xf32> -> vector<4x256xf32>
    %253 = arith.addf %245, %252 : vector<4x256xf32>
    %c0_148 = arith.constant 0 : index
    %c0_149 = arith.constant 0 : index
    %254 = vector.load %arg12[%c0_148, %c0_149] : memref<4x1xf32, #tpu.memory_space<vmem>>, vector<4x1xf32>
    %255 = vector.broadcast %254 : vector<4x1xf32> to vector<4x256xf32>
    %256 = arith.addf %253, %255 : vector<4x256xf32>
    %cst_150 = arith.constant 0.000000e+00 : f32
    %257 = vector.broadcast %cst_150 : f32 to vector<4x256xf32>
    %258 = arith.maximumf %256, %257 : vector<4x256xf32>
    %c0_151 = arith.constant 0 : index
    %c0_152 = arith.constant 0 : index
    %c0_153 = arith.constant 0 : index
    %259 = vector.load %arg13[%c0_151, %c0_152, %c0_153] : memref<1x4x256xf32, #tpu.memory_space<vmem>>, vector<1x4x256xf32>
    %260 = vector.shape_cast %259 : vector<1x4x256xf32> to vector<4x256xf32>
    %261 = vector.shape_cast %258 : vector<4x256xf32> to vector<1x4x256xf32>
    tpu.vector_store %arg13[%c0_151, %c0_152, %c0_153], %261 {strides = array<i32>} : memref<1x4x256xf32, #tpu.memory_space<vmem>>, vector<1x4x256xf32>,
    return
  }
  func.func @transform_0(%arg0: i32) -> (i32, i32, i32) {
    %c0_i32 = arith.constant 0 : i32
    %c0_i32_0 = arith.constant 0 : i32
    %c0_i32_1 = arith.constant 0 : i32
    return %arg0, %c0_i32, %c0_i32_0 : i32, i32, i32
  }
  func.func @transform_1(%arg0: i32) -> (i32, i32, i32) {
    %c0_i32 = arith.constant 0 : i32
    %c0_i32_0 = arith.constant 0 : i32
    %c0_i32_1 = arith.constant 0 : i32
    return %arg0, %c0_i32, %c0_i32_0 : i32, i32, i32
  }
  func.func @transform_2(%arg0: i32) -> (i32, i32) {
    %c0_i32 = arith.constant 0 : i32
    %c0_i32_0 = arith.constant 0 : i32
    %c0_i32_1 = arith.constant 0 : i32
    return %c0_i32, %c0_i32_0 : i32, i32
  }
  func.func @transform_3(%arg0: i32) -> (i32, i32) {
    %c0_i32 = arith.constant 0 : i32
    %c0_i32_0 = arith.constant 0 : i32
    %c0_i32_1 = arith.constant 0 : i32
    return %c0_i32, %c0_i32_0 : i32, i32
  }
  func.func @transform_4(%arg0: i32) -> (i32, i32) {
    %c0_i32 = arith.constant 0 : i32
    %c0_i32_0 = arith.constant 0 : i32
    %c0_i32_1 = arith.constant 0 : i32
    return %c0_i32, %c0_i32_0 : i32, i32
  }
  func.func @transform_5(%arg0: i32) -> (i32, i32, i32) {
    %c0_i32 = arith.constant 0 : i32
    %c0_i32_0 = arith.constant 0 : i32
    %c0_i32_1 = arith.constant 0 : i32
    %c0_i32_2 = arith.constant 0 : i32
    return %c0_i32, %c0_i32_0, %c0_i32_1 : i32, i32, i32
  }
  func.func @transform_6(%arg0: i32) -> (i32, i32) {
    %c0_i32 = arith.constant 0 : i32
    %c0_i32_0 = arith.constant 0 : i32
    %c0_i32_1 = arith.constant 0 : i32
    return %c0_i32, %c0_i32_0 : i32, i32
  }
  func.func @transform_7(%arg0: i32) -> (i32, i32, i32) {
    %c0_i32 = arith.constant 0 : i32
    %c0_i32_0 = arith.constant 0 : i32
    %c0_i32_1 = arith.constant 0 : i32
    %c0_i32_2 = arith.constant 0 : i32
    return %c0_i32, %c0_i32_0, %c0_i32_1 : i32, i32, i32
  }
  func.func @transform_8(%arg0: i32) -> (i32, i32, i32) {
    %c0_i32 = arith.constant 0 : i32
    %c0_i32_0 = arith.constant 0 : i32
    %c0_i32_1 = arith.constant 0 : i32
    %c0_i32_2 = arith.constant 0 : i32
    return %c0_i32, %c0_i32_0, %c0_i32_1 : i32, i32, i32
  }
  func.func @transform_9(%arg0: i32) -> (i32, i32) {
    %c0_i32 = arith.constant 0 : i32
    %c0_i32_0 = arith.constant 0 : i32
    %c0_i32_1 = arith.constant 0 : i32
    return %c0_i32, %c0_i32_0 : i32, i32
  }
  func.func @transform_10(%arg0: i32) -> (i32, i32, i32) {
    %c0_i32 = arith.constant 0 : i32
    %c0_i32_0 = arith.constant 0 : i32
    %c0_i32_1 = arith.constant 0 : i32
    %c0_i32_2 = arith.constant 0 : i32
    return %c0_i32, %c0_i32_0, %c0_i32_1 : i32, i32, i32
  }
  func.func @transform_11(%arg0: i32) -> (i32, i32) {
    %c0_i32 = arith.constant 0 : i32
    %c0_i32_0 = arith.constant 0 : i32
    %c0_i32_1 = arith.constant 0 : i32
    return %c0_i32, %c0_i32_0 : i32, i32
  }
  func.func @transform_12(%arg0: i32) -> (i32, i32, i32) {
    %c0_i32 = arith.constant 0 : i32
    %c0_i32_0 = arith.constant 0 : i32
    %c0_i32_1 = arith.constant 0 : i32
    return %arg0, %c0_i32, %c0_i32_0 : i32, i32, i32
  }
}

</mosaic_0001>

<llo_original>
// kernel: upsample_forward.1
$region0: #{upsample_forward.1}
  #allocation0 [shape = 'u32[]', space=smem, size = 0x4, offset = 0x4, fixed_abs, tag = 'smem constant byte address 0x4 - core index']
  #allocation1 [shape = 'u32[144,128]{1,0:T(1,128)}', space=vmem, size = 0x12000, scoped, tag = 'internal scratch']
  %s0 = inlined_call_operand.vmem [shape: f32[2,8,64], index: 0, kind: input, shape index: {}]
  %s1 = inlined_call_operand.vmem [shape: f32[2,4,256], index: 1, kind: input, shape index: {}]
  %s2 = inlined_call_operand.vmem [shape: f32[64,256], index: 2, kind: input, shape index: {}]
  %s3 = inlined_call_operand.vmem [shape: f32[4,256], index: 3, kind: input, shape index: {}]
  %s4 = inlined_call_operand.vmem [shape: f32[9,256], index: 4, kind: input, shape index: {}]
  %s5 = inlined_call_operand.vmem [shape: f32[4,4,8], index: 5, kind: input, shape index: {}]
  %s6 = inlined_call_operand.vmem [shape: f32[4,1], index: 6, kind: input, shape index: {}]
  %s7 = inlined_call_operand.vmem [shape: f32[9,4,4], index: 7, kind: input, shape index: {}]
  %s8 = inlined_call_operand.vmem [shape: f32[9,4,4], index: 8, kind: input, shape index: {}]
  %s9 = inlined_call_operand.vmem [shape: f32[4,1], index: 9, kind: input, shape index: {}]
  %s10 = inlined_call_operand.vmem [shape: f32[9,4,4], index: 10, kind: input, shape index: {}]
  %s11 = inlined_call_operand.vmem [shape: f32[4,1], index: 11, kind: input, shape index: {}]
  %s12 = inlined_call_operand.vmem [shape: f32[2,4,256], index: 12, kind: output, shape index: {}]
  %s13 = sld [smem:[#allocation0]]
  $region81: #{upsample_forward.1} parent=0
    _
  %s15 = ssub.s32 1, %s13
  %s16 = scalar_select 0, %s15, %s13
  loop: start=0, step=1, limit=4
  $region2: #{upsample_forward.1} parent=0 // loop_pre_header
    _
  $region3: #{upsample_forward.1} parent=0 // loop_header
    %s18 = sphi 0, %s22
    %p19 = scmp.ge.s32.totalorder %s18, 4
    %s28 = sphi 0, %s30
    %s31 = sphi 0, %s28
    %s32 = sphi 0, %s31
    %s48 = sphi 0, %s32
    %s54 = sphi 0, %s56
    %s57 = sphi 0, %s54
    %s58 = sphi 0, %s57
    %s74 = sphi 0, %s58
    %s78 = sphi 0, %s78
    %s80 = sphi 0, %s78
    %s81 = sphi 0, %s80
    %s95 = sphi 0, %s81
    %s99 = sphi 0, %s99
    %s101 = sphi 0, %s99
    %s102 = sphi 0, %s101
    %s116 = sphi 0, %s102
    %s120 = sphi 0, %s120
    %s122 = sphi 0, %s120
    %s123 = sphi 0, %s122
    %s137 = sphi 0, %s123
    %s141 = sphi 0, %s141
    %s143 = sphi 0, %s141
    %s144 = sphi 0, %s143
    %s158 = sphi 0, %s144
    %s162 = sphi 0, %s162
    %s164 = sphi 0, %s162
    %s165 = sphi 0, %s164
    %s179 = sphi 0, %s165
    %s183 = sphi 0, %s183
    %s185 = sphi 0, %s183
    %s186 = sphi 0, %s185
    %s200 = sphi 0, %s186
    %s204 = sphi 0, %s204
    %s206 = sphi 0, %s204
    %s207 = sphi 0, %s206
    %s221 = sphi 0, %s207
    %s225 = sphi 0, %s225
    %s227 = sphi 0, %s225
    %s228 = sphi 0, %s227
    %s242 = sphi 0, %s228
    %s246 = sphi 0, %s246
    %s248 = sphi 0, %s246
    %s249 = sphi 0, %s248
    %s263 = sphi 0, %s249
    %s267 = sphi 0, %s267
    %s269 = sphi 0, %s267
    %s270 = sphi 0, %s269
    %s284 = sphi 0, %s270
    %s290 = sphi 0, %s292
    %s293 = sphi 0, %s290
    %s294 = sphi 0, %s293
    %s310 = sphi 0, %s294
  $region4: #{upsample_forward.1} parent=0 // loop_header_branch
    %21 = sbr.rel (%p19) target = $region8
  $region5: #{upsample_forward.1} parent=0 // loop_body
    %s23 = ssub.s32 %s18, 1
    %s24 = ssub.s32 %s18, 2
    %s25 = sadd.s32 %s18, 1
    %s26 = ssub.s32 %s18, %s25
    %p27 = scmp.eq.s32.totalorder %s26, 0
    %s29 = sadd.s32 %s28, 1
    %s30 = scalar_select %p27, %s28, %s29
    %p33 = pneg %p27
    %p34 = scmp.eq.s32.totalorder %s18, 1
    %p35 = por %p33, %p34
    %p36 = scmp.ne.s32.totalorder %s28, %s31
    %p37 = scmp.eq.s32.totalorder %s18, 0
    %p38 = por %p36, %p37
    %p39 = scmp.ne.s32.totalorder %s28, %s31
    %p40 = scmp.eq.s32.totalorder %s23, 1
    %p41 = por %p39, %p40
    %p42 = scmp.ne.s32.totalorder %s31, %s32
    %p43 = scmp.eq.s32.totalorder %s23, 0
    %p44 = por %p42, %p43
    %p45 = scmp.ne.s32.totalorder %s31, %s32
    %p46 = scmp.eq.s32.totalorder %s24, 1
    %p47 = por %p45, %p46
    %p49 = scmp.ne.s32.totalorder %s32, %s48
    %p50 = scmp.eq.s32.totalorder %s24, 0
    %p51 = por %p49, %p50
    %s52 = ssub.s32 %s18, %s25
    %p53 = scmp.eq.s32.totalorder %s52, 0
    %s55 = sadd.s32 %s54, 1
    %s56 = scalar_select %p53, %s54, %s55
    %p59 = pneg %p53
    %p60 = scmp.eq.s32.totalorder %s18, 1
    %p61 = por %p59, %p60
    %p62 = scmp.ne.s32.totalorder %s54, %s57
    %p63 = scmp.eq.s32.totalorder %s18, 0
    %p64 = por %p62, %p63
    %p65 = scmp.ne.s32.totalorder %s54, %s57
    %p66 = scmp.eq.s32.totalorder %s23, 1
    %p67 = por %p65, %p66
    %p68 = scmp.ne.s32.totalorder %s57, %s58
    %p69 = scmp.eq.s32.totalorder %s23, 0
    %p70 = por %p68, %p69
    %p71 = scmp.ne.s32.totalorder %s57, %s58
    %p72 = scmp.eq.s32.totalorder %s24, 1
    %p73 = por %p71, %p72
    %p75 = scmp.ne.s32.totalorder %s58, %s74
    %p76 = scmp.eq.s32.totalorder %s24, 0
    %p77 = por %p75, %p76
    %s79 = sadd.s32 %s78, 1
    %p82 = scmp.eq.s32.totalorder %s18, 1
    %p83 = scmp.ne.s32.totalorder %s78, %s80
    %p84 = scmp.eq.s32.totalorder %s18, 0
    %p85 = por %p83, %p84
    %p86 = scmp.ne.s32.totalorder %s78, %s80
    %p87 = scmp.eq.s32.totalorder %s23, 1
    %p88 = por %p86, %p87
    %p89 = scmp.ne.s32.totalorder %s80, %s81
    %p90 = scmp.eq.s32.totalorder %s23, 0
    %p91 = por %p89, %p90
    %p92 = scmp.ne.s32.totalorder %s80, %s81
    %p93 = scmp.eq.s32.totalorder %s24, 1
    %p94 = por %p92, %p93
    %p96 = scmp.ne.s32.totalorder %s81, %s95
    %p97 = scmp.eq.s32.totalorder %s24, 0
    %p98 = por %p96, %p97
    %s100 = sadd.s32 %s99, 1
    %p103 = scmp.eq.s32.totalorder %s18, 1
    %p104 = scmp.ne.s32.totalorder %s99, %s101
    %p105 = scmp.eq.s32.totalorder %s18, 0
    %p106 = por %p104, %p105
    %p107 = scmp.ne.s32.totalorder %s99, %s101
    %p108 = scmp.eq.s32.totalorder %s23, 1
    %p109 = por %p107, %p108
    %p110 = scmp.ne.s32.totalorder %s101, %s102
    %p111 = scmp.eq.s32.totalorder %s23, 0
    %p112 = por %p110, %p111
    %p113 = scmp.ne.s32.totalorder %s101, %s102
    %p114 = scmp.eq.s32.totalorder %s24, 1
    %p115 = por %p113, %p114
    %p117 = scmp.ne.s32.totalorder %s102, %s116
    %p118 = scmp.eq.s32.totalorder %s24, 0
    %p119 = por %p117, %p118
    %s121 = sadd.s32 %s120, 1
    %p124 = scmp.eq.s32.totalorder %s18, 1
    %p125 = scmp.ne.s32.totalorder %s120, %s122
    %p126 = scmp.eq.s32.totalorder %s18, 0
    %p127 = por %p125, %p126
    %p128 = scmp.ne.s32.totalorder %s120, %s122
    %p129 = scmp.eq.s32.totalorder %s23, 1
    %p130 = por %p128, %p129
    %p131 = scmp.ne.s32.totalorder %s122, %s123
    %p132 = scmp.eq.s32.totalorder %s23, 0
    %p133 = por %p131, %p132
    %p134 = scmp.ne.s32.totalorder %s122, %s123
    %p135 = scmp.eq.s32.totalorder %s24, 1
    %p136 = por %p134, %p135
    %p138 = scmp.ne.s32.totalorder %s123, %s137
    %p139 = scmp.eq.s32.totalorder %s24, 0
    %p140 = por %p138, %p139
    %s142 = sadd.s32 %s141, 1
    %p145 = scmp.eq.s32.totalorder %s18, 1
    %p146 = scmp.ne.s32.totalorder %s141, %s143
    %p147 = scmp.eq.s32.totalorder %s18, 0
    %p148 = por %p146, %p147
    %p149 = scmp.ne.s32.totalorder %s141, %s143
    %p150 = scmp.eq.s32.totalorder %s23, 1
    %p151 = por %p149, %p150
    %p152 = scmp.ne.s32.totalorder %s143, %s144
    %p153 = scmp.eq.s32.totalorder %s23, 0
    %p154 = por %p152, %p153
    %p155 = scmp.ne.s32.totalorder %s143, %s144
    %p156 = scmp.eq.s32.totalorder %s24, 1
    %p157 = por %p155, %p156
    %p159 = scmp.ne.s32.totalorder %s144, %s158
    %p160 = scmp.eq.s32.totalorder %s24, 0
    %p161 = por %p159, %p160
    %s163 = sadd.s32 %s162, 1
    %p166 = scmp.eq.s32.totalorder %s18, 1
    %p167 = scmp.ne.s32.totalorder %s162, %s164
    %p168 = scmp.eq.s32.totalorder %s18, 0
    %p169 = por %p167, %p168
    %p170 = scmp.ne.s32.totalorder %s162, %s164
    %p171 = scmp.eq.s32.totalorder %s23, 1
    %p172 = por %p170, %p171
    %p173 = scmp.ne.s32.totalorder %s164, %s165
    %p174 = scmp.eq.s32.totalorder %s23, 0
    %p175 = por %p173, %p174
    %p176 = scmp.ne.s32.totalorder %s164, %s165
    %p177 = scmp.eq.s32.totalorder %s24, 1
    %p178 = por %p176, %p177
    %p180 = scmp.ne.s32.totalorder %s165, %s179
    %p181 = scmp.eq.s32.totalorder %s24, 0
    %p182 = por %p180, %p181
    %s184 = sadd.s32 %s183, 1
    %p187 = scmp.eq.s32.totalorder %s18, 1
    %p188 = scmp.ne.s32.totalorder %s183, %s185
    %p189 = scmp.eq.s32.totalorder %s18, 0
    %p190 = por %p188, %p189
    %p191 = scmp.ne.s32.totalorder %s183, %s185
    %p192 = scmp.eq.s32.totalorder %s23, 1
    %p193 = por %p191, %p192
    %p194 = scmp.ne.s32.totalorder %s185, %s186
    %p195 = scmp.eq.s32.totalorder %s23, 0
    %p196 = por %p194, %p195
    %p197 = scmp.ne.s32.totalorder %s185, %s186
    %p198 = scmp.eq.s32.totalorder %s24, 1
    %p199 = por %p197, %p198
    %p201 = scmp.ne.s32.totalorder %s186, %s200
    %p202 = scmp.eq.s32.totalorder %s24, 0
    %p203 = por %p201, %p202
    %s205 = sadd.s32 %s204, 1
    %p208 = scmp.eq.s32.totalorder %s18, 1
    %p209 = scmp.ne.s32.totalorder %s204, %s206
    %p210 = scmp.eq.s32.totalorder %s18, 0
    %p211 = por %p209, %p210
    %p212 = scmp.ne.s32.totalorder %s204, %s206
    %p213 = scmp.eq.s32.totalorder %s23, 1
    %p214 = por %p212, %p213
    %p215 = scmp.ne.s32.totalorder %s206, %s207
    %p216 = scmp.eq.s32.totalorder %s23, 0
    %p217 = por %p215, %p216
    %p218 = scmp.ne.s32.totalorder %s206, %s207
    %p219 = scmp.eq.s32.totalorder %s24, 1
    %p220 = por %p218, %p219
    %p222 = scmp.ne.s32.totalorder %s207, %s221
    %p223 = scmp.eq.s32.totalorder %s24, 0
    %p224 = por %p222, %p223
    %s226 = sadd.s32 %s225, 1
    %p229 = scmp.eq.s32.totalorder %s18, 1
    %p230 = scmp.ne.s32.totalorder %s225, %s227
    %p231 = scmp.eq.s32.totalorder %s18, 0
    %p232 = por %p230, %p231
    %p233 = scmp.ne.s32.totalorder %s225, %s227
    %p234 = scmp.eq.s32.totalorder %s23, 1
    %p235 = por %p233, %p234
    %p236 = scmp.ne.s32.totalorder %s227, %s228
    %p237 = scmp.eq.s32.totalorder %s23, 0
    %p238 = por %p236, %p237
    %p239 = scmp.ne.s32.totalorder %s227, %s228
    %p240 = scmp.eq.s32.totalorder %s24, 1
    %p241 = por %p239, %p240
    %p243 = scmp.ne.s32.totalorder %s228, %s242
    %p244 = scmp.eq.s32.totalorder %s24, 0
    %p245 = por %p243, %p244
    %s247 = sadd.s32 %s246, 1
    %p250 = scmp.eq.s32.totalorder %s18, 1
    %p251 = scmp.ne.s32.totalorder %s246, %s248
    %p252 = scmp.eq.s32.totalorder %s18, 0
    %p253 = por %p251, %p252
    %p254 = scmp.ne.s32.totalorder %s246, %s248
    %p255 = scmp.eq.s32.totalorder %s23, 1
    %p256 = por %p254, %p255
    %p257 = scmp.ne.s32.totalorder %s248, %s249
    %p258 = scmp.eq.s32.totalorder %s23, 0
    %p259 = por %p257, %p258
    %p260 = scmp.ne.s32.totalorder %s248, %s249
    %p261 = scmp.eq.s32.totalorder %s24, 1
    %p262 = por %p260, %p261
    %p264 = scmp.ne.s32.totalorder %s249, %s263
    %p265 = scmp.eq.s32.totalorder %s24, 0
    %p266 = por %p264, %p265
    %s268 = sadd.s32 %s267, 1
    %p271 = scmp.eq.s32.totalorder %s18, 1
    %p272 = scmp.ne.s32.totalorder %s267, %s269
    %p273 = scmp.eq.s32.totalorder %s18, 0
    %p274 = por %p272, %p273
    %p275 = scmp.ne.s32.totalorder %s267, %s269
    %p276 = scmp.eq.s32.totalorder %s23, 1
    %p277 = por %p275, %p276
    %p278 = scmp.ne.s32.totalorder %s269, %s270
    %p279 = scmp.eq.s32.totalorder %s23, 0
    %p280 = por %p278, %p279
    %p281 = scmp.ne.s32.totalorder %s269, %s270
    %p282 = scmp.eq.s32.totalorder %s24, 1
    %p283 = por %p281, %p282
    %p285 = scmp.ne.s32.totalorder %s270, %s284
    %p286 = scmp.eq.s32.totalorder %s24, 0
    %p287 = por %p285, %p286
    %s288 = ssub.s32 %s18, %s25
    %p289 = scmp.eq.s32.totalorder %s288, 0
    %s291 = sadd.s32 %s290, 1
    %s292 = scalar_select %p289, %s290, %s291
    %p295 = pneg %p289
    %p296 = scmp.eq.s32.totalorder %s18, 1
    %p297 = por %p295, %p296
    %p298 = scmp.ne.s32.totalorder %s290, %s293
    %p299 = scmp.eq.s32.totalorder %s18, 0
    %p300 = por %p298, %p299
    %p301 = scmp.ne.s32.totalorder %s290, %s293
    %p302 = scmp.eq.s32.totalorder %s23, 1
    %p303 = por %p301, %p302
    %p304 = scmp.ne.s32.totalorder %s293, %s294
    %p305 = scmp.eq.s32.totalorder %s23, 0
    %p306 = por %p304, %p305
    %p307 = scmp.ne.s32.totalorder %s293, %s294
    %p308 = scmp.eq.s32.totalorder %s24, 1
    %p309 = por %p307, %p308
    %p311 = scmp.ne.s32.totalorder %s294, %s310
    %p312 = scmp.eq.s32.totalorder %s24, 0
    %p313 = por %p311, %p312
    %p314 = scmp.le.s32.totalorder 1, %s18
    %p315 = scmp.lt.s32.totalorder %s18, 3
    %p316 = pnand %p314, %p315
    %p317 = pneg %p316
    // Predicated region
    $region9: #{upsample_forward.1} parent=5 // pred_check
      _
    $region10: #{upsample_forward.1} parent=5 // pred_check_branch
      %319 = sbr.rel (%p316) target = $region12
    $region11: #{upsample_forward.1} parent=5 // pred_region
      %s320 = ssub.s32 %s18, 1
      // Predicated region
      $region13: #{upsample_forward.1} parent=11 // pred_check
        %p321 = pneg %p91
      $region14: #{upsample_forward.1} parent=11 // pred_check_branch
        %323 = sbr.rel (%p321) target = $region16
      $region15: #{upsample_forward.1} parent=11 // pred_region
        _
      $region16: #{upsample_forward.1} parent=11 // pred_fallthru
        _
      // Predicated region
      $region17: #{upsample_forward.1} parent=11 // pred_check
        %p324 = pneg %p112
      $region18: #{upsample_forward.1} parent=11 // pred_check_branch
        %326 = sbr.rel (%p324) target = $region20
      $region19: #{upsample_forward.1} parent=11 // pred_region
        _
      $region20: #{upsample_forward.1} parent=11 // pred_fallthru
        _
      // Predicated region
      $region21: #{upsample_forward.1} parent=11 // pred_check
        %p327 = pneg %p133
      $region22: #{upsample_forward.1} parent=11 // pred_check_branch
        %329 = sbr.rel (%p327) target = $region24
      $region23: #{upsample_forward.1} parent=11 // pred_region
        _
      $region24: #{upsample_forward.1} parent=11 // pred_fallthru
        _
      // Predicated region
      $region25: #{upsample_forward.1} parent=11 // pred_check
        %p330 = pneg %p154
      $region26: #{upsample_forward.1} parent=11 // pred_check_branch
        %332 = sbr.rel (%p330) target = $region28
      $region27: #{upsample_forward.1} parent=11 // pred_region
        _
      $region28: #{upsample_forward.1} parent=11 // pred_fallthru
        _
      // Predicated region
      $region29: #{upsample_forward.1} parent=11 // pred_check
        %p333 = pneg %p175
      $region30: #{upsample_forward.1} parent=11 // pred_check_branch
        %335 = sbr.rel (%p333) target = $region32
      $region31: #{upsample_forward.1} parent=11 // pred_region
        _
      $region32: #{upsample_forward.1} parent=11 // pred_fallthru
        _
      // Predicated region
      $region33: #{upsample_forward.1} parent=11 // pred_check
        %p336 = pneg %p196
      $region34: #{upsample_forward.1} parent=11 // pred_check_branch
        %338 = sbr.rel (%p336) target = $region36
      $region35: #{upsample_forward.1} parent=11 // pred_region
        _
      $region36: #{upsample_forward.1} parent=11 // pred_fallthru
        _
      // Predicated region
      $region37: #{upsample_forward.1} parent=11 // pred_check
        %p339 = pneg %p217
      $region38: #{upsample_forward.1} parent=11 // pred_check_branch
        %341 = sbr.rel (%p339) target = $region40
      $region39: #{upsample_forward.1} parent=11 // pred_region
        _
      $region40: #{upsample_forward.1} parent=11 // pred_fallthru
        _
      // Predicated region
      $region41: #{upsample_forward.1} parent=11 // pred_check
        %p342 = pneg %p238
      $region42: #{upsample_forward.1} parent=11 // pred_check_branch
        %344 = sbr.rel (%p342) target = $region44
      $region43: #{upsample_forward.1} parent=11 // pred_region
        _
      $region44: #{upsample_forward.1} parent=11 // pred_fallthru
        _
      // Predicated region
      $region45: #{upsample_forward.1} parent=11 // pred_check
        %p345 = pneg %p259
      $region46: #{upsample_forward.1} parent=11 // pred_check_branch
        %347 = sbr.rel (%p345) target = $region48
      $region47: #{upsample_forward.1} parent=11 // pred_region
        _
      $region48: #{upsample_forward.1} parent=11 // pred_fallthru
        _
      // Predicated region
      $region49: #{upsample_forward.1} parent=11 // pred_check
        %p348 = pneg %p280
      $region50: #{upsample_forward.1} parent=11 // pred_check_branch
        %350 = sbr.rel (%p348) target = $region52
      $region51: #{upsample_forward.1} parent=11 // pred_region
        _
      $region52: #{upsample_forward.1} parent=11 // pred_fallthru
        _
    $region12: #{upsample_forward.1} parent=5 // pred_fallthru
      _
    %p351 = scmp.lt.s32.totalorder %s18, 2
    // Predicated region
    $region53: #{upsample_forward.1} parent=5 // pred_check
      %p352 = pneg %p351
    $region54: #{upsample_forward.1} parent=5 // pred_check_branch
      %354 = sbr.rel (%p352) target = $region56
    $region55: #{upsample_forward.1} parent=5 // pred_region
      // Predicated region
      $region57: #{upsample_forward.1} parent=55 // pred_check
        %p355 = pneg %p38
      $region58: #{upsample_forward.1} parent=55 // pred_check_branch
        %357 = sbr.rel (%p355) target = $region60
      $region59: #{upsample_forward.1} parent=55 // pred_region
        %p358 = scmp.lt.s32.totalorder %s18, 1
        %s359 = scalar_select %p358, %s18, 1
        %s360 = smul.addr %s359, 8
        %s361 = scalar_lea.vmem %s0, %s360
      $region60: #{upsample_forward.1} parent=55 // pred_fallthru
        _
      // Predicated region
      $region61: #{upsample_forward.1} parent=55 // pred_check
        %p362 = pneg %p64
      $region62: #{upsample_forward.1} parent=55 // pred_check_branch
        %364 = sbr.rel (%p362) target = $region64
      $region63: #{upsample_forward.1} parent=55 // pred_region
        %p365 = scmp.lt.s32.totalorder %s18, 1
        %s366 = scalar_select %p365, %s18, 1
        %s367 = smul.addr %s366, 2
        %s368 = smul.addr %s367, 4
        %s369 = scalar_lea.vmem %s1, %s368
      $region64: #{upsample_forward.1} parent=55 // pred_fallthru
        _
    $region56: #{upsample_forward.1} parent=5 // pred_fallthru
      _
    %p370 = scmp.le.s32.totalorder 1, %s18
    %p371 = scmp.lt.s32.totalorder %s18, 3
    %p372 = pnand %p370, %p371
    %p373 = pneg %p372
    // Predicated region
    $region65: #{upsample_forward.1} parent=5 // pred_check
      _
    $region66: #{upsample_forward.1} parent=5 // pred_check_branch
      %375 = sbr.rel (%p372) target = $region68
    $region67: #{upsample_forward.1} parent=5 // pred_region
      %s376 = ssub.s32 %s18, 1
      %p377 = scmp.lt.s32.totalorder %s23, 1
      %s378 = scalar_select %p377, %s23, 1
      %s379 = smul.addr %s378, 8
      %s380 = scalar_lea.vmem %s0, %s379
      %p381 = pneg %p44
      %p382 = pneg %p41
      %p383 = scmp.lt.s32.totalorder %s23, 1
      %s384 = scalar_select %p383, %s23, 1
      %s385 = smul.addr %s384, 2
      %s386 = smul.addr %s385, 4
      %s387 = scalar_lea.vmem %s1, %s386
      %p388 = pneg %p70
      %p389 = pneg %p67
      %p390 = pneg %p91
      %p391 = pneg %p88
      %p392 = pneg %p112
      %p393 = pneg %p109
      %p394 = pneg %p133
      %p395 = pneg %p130
      %p396 = pneg %p154
      %p397 = pneg %p151
      %p398 = pneg %p175
      %p399 = pneg %p172
      %p400 = pneg %p196
      %p401 = pneg %p193
      %p402 = pneg %p217
      %p403 = pneg %p214
      %p404 = pneg %p238
      %p405 = pneg %p235
      %p406 = pneg %p259
      %p407 = pneg %p256
      %p408 = pneg %p280
      %p409 = pneg %p277
      %p410 = pneg %p306
      %p411 = pneg %p303
      %p412 = scmp.lt.s32.totalorder %s23, 1
      %s413 = scalar_select %p412, %s23, 1
      %s414 = smul.addr %s413, 2
      %s415 = smul.addr %s414, 4
      %s416 = scalar_lea.vmem %s12, %s415
      %p417 = scmp.lt.s32.totalorder %s23, 1
      %s418 = scalar_select %p417, %s23, 1
      %s419 = smul.addr %s418, 8
      %s420 = scalar_lea.vmem %s0, %s419
      %p421 = scmp.lt.s32.totalorder %s23, 1
      %s422 = scalar_select %p421, %s23, 1
      %s423 = smul.addr %s422, 2
      %s424 = smul.addr %s423, 4
      %s425 = scalar_lea.vmem %s1, %s424
      %p426 = scmp.lt.s32.totalorder %s23, 1
      %s427 = scalar_select %p426, %s23, 1
      %s428 = smul.addr %s427, 2
      %s429 = smul.addr %s428, 4
      %s430 = scalar_lea.vmem %s12, %s429
      %v431 = vld [vmem:[%s420] sm:$0xff]
      %v432 = vld [vmem:[%s425] sm:$0xff]
      %v433 = vld [vmem:[%s3] sm:$0xff]
      %v434 = vld [vmem:[%s4] sm:$0xff]
      %v435 = vld [vmem:[%s4 + $0x8] sm:$0xff]
      %v436 = vld [vmem:[%s4 + $0x10] sm:$0x1]
      %v437 = vld [vmem:[%s4 + $0x18] sm:$0x1]
      %v438 = vld [vmem:[%s2] sm:$0xff]
      %v439 = vld [vmem:[%s2 + $0x8] sm:$0xff]
      %v440 = vld [vmem:[%s2 + $0x10] sm:$0xff]
      %v441 = vld [vmem:[%s2 + $0x18] sm:$0xff]
      %v442 = vld [vmem:[%s2 + $0x20] sm:$0xff]
      %v443 = vld [vmem:[%s2 + $0x28] sm:$0xff]
      %v444 = vld [vmem:[%s2 + $0x30] sm:$0xff]
      %v445 = vld [vmem:[%s2 + $0x38] sm:$0xff]
      %v446 = vld [vmem:[%s2 + $0x40] sm:$0xff]
      %v447 = vld [vmem:[%s2 + $0x48] sm:$0xff]
      %v448 = vld [vmem:[%s2 + $0x50] sm:$0xff]
      %v449 = vld [vmem:[%s2 + $0x58] sm:$0xff]
      %v450 = vld [vmem:[%s2 + $0x60] sm:$0xff]
      %v451 = vld [vmem:[%s2 + $0x68] sm:$0xff]
      %v452 = vld [vmem:[%s2 + $0x70] sm:$0xff]
      %v453 = vld [vmem:[%s2 + $0x78] sm:$0xff]
      %vm454 = vcmask 523264
      %v456 = vsel %vm454, %v431, 0
      %458 = vmatprep.subr.mxu0 %v439
      %459 = vmatpush1.msra.mxu0 %v438
      %460 = vmatprep.subr.mxu0 %v441
      %461 = vmatpush1.msra.mxu0 %v440
      %462 = vmatprep.subr.mxu0 %v443
      %463 = vmatpush1.msra.mxu0 %v442
      %464 = vmatprep.subr.mxu0 %v445
      %465 = vmatpush1.msra.mxu0 %v444
      %466 = vmatprep.subr.mxu0 %v447
      %467 = vmatpush1.msra.mxu0 %v446
      %468 = vmatprep.subr.mxu0 %v449
      %469 = vmatpush1.msra.mxu0 %v448
      %470 = vmatprep.subr.mxu0 %v451
      %471 = vmatpush1.msra.mxu0 %v450
      %472 = vmatprep.subr.mxu0 %v453
      %473 = vmatpush1.msra.mxu0 %v452
      %474 = vmatprep.subr.mxu0 0.0
      %475 = vmatpush1.msra.mxu0 0.0
      %476 = vmatprep.subr.mxu0 0.0
      %477 = vmatpush1.msra.mxu0 0.0
      %478 = vmatprep.subr.mxu0 0.0
      %479 = vmatpush1.msra.mxu0 0.0
      %480 = vmatprep.subr.mxu0 0.0
      %481 = vmatpush1.msra.mxu0 0.0
      %482 = vmatprep.subr.mxu0 0.0
      %483 = vmatpush1.msra.mxu0 0.0
      %484 = vmatprep.subr.mxu0 0.0
      %485 = vmatpush1.msra.mxu0 0.0
      %486 = vmatprep.subr.mxu0 0.0
      %487 = vmatpush1.msra.mxu0 0.0
      %488 = vmatprep.subr.mxu0 0.0
      %489 = vmatpush1.msra.mxu0 0.0
      %490 = vmatprep.subr.mxu0 0.0
      %491 = vmatpush1.msra.mxu0 0.0
      %492 = vmatprep.subr.mxu0 0.0
      %493 = vmatpush1.msra.mxu0 0.0
      %494 = vmatprep.subr.mxu0 0.0
      %495 = vmatpush1.msra.mxu0 0.0
      %496 = vmatprep.subr.mxu0 0.0
      %497 = vmatpush1.msra.mxu0 0.0
      %498 = vmatprep.subr.mxu0 0.0
      %499 = vmatpush1.msra.mxu0 0.0
      %500 = vmatprep.subr.mxu0 0.0
      %501 = vmatpush1.msra.mxu0 0.0
      %502 = vmatprep.subr.mxu0 0.0
      %503 = vmatpush1.msra.mxu0 0.0
      %504 = vmatprep.subr.mxu0 0.0
      %505 = vmatpush1.msra.mxu0 0.0
      %506 = vmatprep.subr.mxu0 0.0
      %507 = vmatpush1.msra.mxu0 0.0
      %508 = vmatprep.subr.mxu0 0.0
      %509 = vmatpush1.msra.mxu0 0.0
      %510 = vmatprep.subr.mxu0 0.0
      %511 = vmatpush1.msra.mxu0 0.0
      %512 = vmatprep.subr.mxu0 0.0
      %513 = vmatpush1.msra.mxu0 0.0
      %514 = vmatprep.subr.mxu0 0.0
      %515 = vmatpush1.msra.mxu0 0.0
      %516 = vmatprep.subr.mxu0 0.0
      %517 = vmatpush1.msra.mxu0 0.0
      %518 = vmatprep.subr.mxu0 0.0
      %519 = vmatpush1.msra.mxu0 0.0
      %520 = vmatprep.subr.mxu0 0.0
      %521 = vmatpush1.msra.mxu0 0.0
      %522 = vmatprep.mubr.f32.mxu0 0.0
      %523 = vmatmul.mubr.f32.gmra.mrb[0].mxu0 %v456
      %v524 = vpop.f32.mrb[0].mxu0
      %v525 = vadd.f32 0.0, %v524
      %v526 = vpop.f32.mrb[0].mxu0
      %v527 = vadd.f32 0.0, %v526
      %528 = vdwg.mxu0
      %v529 = vld [vmem:[%s5] sm:$0xf]
      %vm530 = vcmask 64512
      %v532 = vsel %vm530, %v529, 0
      %534 = vmatprep.subr.mxu0 %v527
      %535 = vmatpush1.msra.mxu0 %v525
      %536 = vmatprep.subr.mxu0 0.0
      %537 = vmatpush1.msra.mxu0 0.0
      %538 = vmatprep.subr.mxu0 0.0
      %539 = vmatpush1.msra.mxu0 0.0
      %540 = vmatprep.subr.mxu0 0.0
      %541 = vmatpush1.msra.mxu0 0.0
      %542 = vmatprep.subr.mxu0 0.0
      %543 = vmatpush1.msra.mxu0 0.0
      %544 = vmatprep.subr.mxu0 0.0
      %545 = vmatpush1.msra.mxu0 0.0
      %546 = vmatprep.subr.mxu0 0.0
      %547 = vmatpush1.msra.mxu0 0.0
      %548 = vmatprep.subr.mxu0 0.0
      %549 = vmatpush1.msra.mxu0 0.0
      %550 = vmatprep.subr.mxu0 0.0
      %551 = vmatpush1.msra.mxu0 0.0
      %552 = vmatprep.subr.mxu0 0.0
      %553 = vmatpush1.msra.mxu0 0.0
      %554 = vmatprep.subr.mxu0 0.0
      %555 = vmatpush1.msra.mxu0 0.0
      %556 = vmatprep.subr.mxu0 0.0
      %557 = vmatpush1.msra.mxu0 0.0
      %558 = vmatprep.subr.mxu0 0.0
      %559 = vmatpush1.msra.mxu0 0.0
      %560 = vmatprep.subr.mxu0 0.0
      %561 = vmatpush1.msra.mxu0 0.0
      %562 = vmatprep.subr.mxu0 0.0
      %563 = vmatpush1.msra.mxu0 0.0
      %564 = vmatprep.subr.mxu0 0.0
      %565 = vmatpush1.msra.mxu0 0.0
      %566 = vmatprep.subr.mxu0 0.0
      %567 = vmatpush1.msra.mxu0 0.0
      %568 = vmatprep.subr.mxu0 0.0
      %569 = vmatpush1.msra.mxu0 0.0
      %570 = vmatprep.subr.mxu0 0.0
      %571 = vmatpush1.msra.mxu0 0.0
      %572 = vmatprep.subr.mxu0 0.0
      %573 = vmatpush1.msra.mxu0 0.0
      %574 = vmatprep.subr.mxu0 0.0
      %575 = vmatpush1.msra.mxu0 0.0
      %576 = vmatprep.subr.mxu0 0.0
      %577 = vmatpush1.msra.mxu0 0.0
      %578 = vmatprep.subr.mxu0 0.0
      %579 = vmatpush1.msra.mxu0 0.0
      %580 = vmatprep.subr.mxu0 0.0
      %581 = vmatpush1.msra.mxu0 0.0
      %582 = vmatprep.subr.mxu0 0.0
      %583 = vmatpush1.msra.mxu0 0.0
      %584 = vmatprep.subr.mxu0 0.0
      %585 = vmatpush1.msra.mxu0 0.0
      %586 = vmatprep.subr.mxu0 0.0
      %587 = vmatpush1.msra.mxu0 0.0
      %588 = vmatprep.subr.mxu0 0.0
      %589 = vmatpush1.msra.mxu0 0.0
      %590 = vmatprep.subr.mxu0 0.0
      %591 = vmatpush1.msra.mxu0 0.0
      %592 = vmatprep.subr.mxu0 0.0
      %593 = vmatpush1.msra.mxu0 0.0
      %594 = vmatprep.subr.mxu0 0.0
      %595 = vmatpush1.msra.mxu0 0.0
      %596 = vmatprep.subr.mxu0 0.0
      %597 = vmatpush1.msra.mxu0 0.0
      %598 = vmatprep.mubr.f32.mxu0 0.0
      %599 = vmatmul.mubr.f32.gmra.mrb[0].mxu0 %v532
      %v600 = vpop.f32.mrb[0].mxu0
      %v601 = vadd.f32 0.0, %v600
      %v602 = vpop.f32.mrb[0].mxu0
      %v603 = vadd.f32 0.0, %v602
      %604 = vdwg.mxu0
      %v606 = vlaneseq
      %v607 = vshrl.u32 %v606, 7
      %v608 = vsub.s32 0, %v607
      %v609 = vrot.slane %v433, %v608
      %v610 = vlaneseq
      %v611 = vshrl.u32 %v610, 7
      %v612 = vsub.s32 4, %v611
      %v613 = vrot.slane %v433, %v612
      %v616 = vlaneseq
      %v617 = vshrl.u32 %v616, 7
      %v618 = vsub.s32 0, %v617
      %v619 = vrot.slane %v609, %v618
      %v620 = vlaneseq
      %v621 = vshrl.u32 %v620, 7
      %v622 = vsub.s32 0, %v621
      %v623 = vrot.slane %v613, %v622
      %v624 = vmul.f32 %v601, %v619
      %v625 = vmul.f32 %v603, %v623
      %s626 = scalar_lea.vmem %s5, 4
      %v627 = vld [vmem:[%s626] sm:$0xf]
      %v629 = vsel %vm530, %v627, 0
      %631 = vmatprep.subr.mxu0 %v527
      %632 = vmatpush1.msra.mxu0 %v525
      %633 = vmatprep.subr.mxu0 0.0
      %634 = vmatpush1.msra.mxu0 0.0
      %635 = vmatprep.subr.mxu0 0.0
      %636 = vmatpush1.msra.mxu0 0.0
      %637 = vmatprep.subr.mxu0 0.0
      %638 = vmatpush1.msra.mxu0 0.0
      %639 = vmatprep.subr.mxu0 0.0
      %640 = vmatpush1.msra.mxu0 0.0
      %641 = vmatprep.subr.mxu0 0.0
      %642 = vmatpush1.msra.mxu0 0.0
      %643 = vmatprep.subr.mxu0 0.0
      %644 = vmatpush1.msra.mxu0 0.0
      %645 = vmatprep.subr.mxu0 0.0
      %646 = vmatpush1.msra.mxu0 0.0
      %647 = vmatprep.subr.mxu0 0.0
      %648 = vmatpush1.msra.mxu0 0.0
      %649 = vmatprep.subr.mxu0 0.0
      %650 = vmatpush1.msra.mxu0 0.0
      %651 = vmatprep.subr.mxu0 0.0
      %652 = vmatpush1.msra.mxu0 0.0
      %653 = vmatprep.subr.mxu0 0.0
      %654 = vmatpush1.msra.mxu0 0.0
      %655 = vmatprep.subr.mxu0 0.0
      %656 = vmatpush1.msra.mxu0 0.0
      %657 = vmatprep.subr.mxu0 0.0
      %658 = vmatpush1.msra.mxu0 0.0
      %659 = vmatprep.subr.mxu0 0.0
      %660 = vmatpush1.msra.mxu0 0.0
      %661 = vmatprep.subr.mxu0 0.0
      %662 = vmatpush1.msra.mxu0 0.0
      %663 = vmatprep.subr.mxu0 0.0
      %664 = vmatpush1.msra.mxu0 0.0
      %665 = vmatprep.subr.mxu0 0.0
      %666 = vmatpush1.msra.mxu0 0.0
      %667 = vmatprep.subr.mxu0 0.0
      %668 = vmatpush1.msra.mxu0 0.0
      %669 = vmatprep.subr.mxu0 0.0
      %670 = vmatpush1.msra.mxu0 0.0
      %671 = vmatprep.subr.mxu0 0.0
      %672 = vmatpush1.msra.mxu0 0.0
      %673 = vmatprep.subr.mxu0 0.0
      %674 = vmatpush1.msra.mxu0 0.0
      %675 = vmatprep.subr.mxu0 0.0
      %676 = vmatpush1.msra.mxu0 0.0
      %677 = vmatprep.subr.mxu0 0.0
      %678 = vmatpush1.msra.mxu0 0.0
      %679 = vmatprep.subr.mxu0 0.0
      %680 = vmatpush1.msra.mxu0 0.0
      %681 = vmatprep.subr.mxu0 0.0
      %682 = vmatpush1.msra.mxu0 0.0
      %683 = vmatprep.subr.mxu0 0.0
      %684 = vmatpush1.msra.mxu0 0.0
      %685 = vmatprep.subr.mxu0 0.0
      %686 = vmatpush1.msra.mxu0 0.0
      %687 = vmatprep.subr.mxu0 0.0
      %688 = vmatpush1.msra.mxu0 0.0
      %689 = vmatprep.subr.mxu0 0.0
      %690 = vmatpush1.msra.mxu0 0.0
      %691 = vmatprep.subr.mxu0 0.0
      %692 = vmatpush1.msra.mxu0 0.0
      %693 = vmatprep.subr.mxu0 0.0
      %694 = vmatpush1.msra.mxu0 0.0
      %695 = vmatprep.mubr.f32.mxu0 0.0
      %696 = vmatmul.mubr.f32.gmra.mrb[0].mxu0 %v629
      %v697 = vpop.f32.mrb[0].mxu0
      %v698 = vadd.f32 0.0, %v697
      %v699 = vpop.f32.mrb[0].mxu0
      %v700 = vadd.f32 0.0, %v699
      %701 = vdwg.mxu0
      %v702 = vlaneseq
      %v703 = vshrl.u32 %v702, 7
      %v704 = vsub.s32 1, %v703
      %v705 = vrot.slane %v433, %v704
      %v706 = vlaneseq
      %v707 = vshrl.u32 %v706, 7
      %v708 = vsub.s32 5, %v707
      %v709 = vrot.slane %v433, %v708
      %v712 = vlaneseq
      %v713 = vshrl.u32 %v712, 7
      %v714 = vsub.s32 1, %v713
      %v715 = vrot.slane %v705, %v714
      %v716 = vlaneseq
      %v717 = vshrl.u32 %v716, 7
      %v718 = vsub.s32 1, %v717
      %v719 = vrot.slane %v709, %v718
      %v720 = vmul.f32 %v698, %v715
      %v721 = vmul.f32 %v700, %v719
      %v722 = vadd.f32 %v624, %v720
      %v723 = vadd.f32 %v625, %v721
      %s724 = scalar_lea.vmem %s5, 8
      %v725 = vld [vmem:[%s724] sm:$0xf]
      %v727 = vsel %vm530, %v725, 0
      %729 = vmatprep.subr.mxu0 %v527
      %730 = vmatpush1.msra.mxu0 %v525
      %731 = vmatprep.subr.mxu0 0.0
      %732 = vmatpush1.msra.mxu0 0.0
      %733 = vmatprep.subr.mxu0 0.0
      %734 = vmatpush1.msra.mxu0 0.0
      %735 = vmatprep.subr.mxu0 0.0
      %736 = vmatpush1.msra.mxu0 0.0
      %737 = vmatprep.subr.mxu0 0.0
      %738 = vmatpush1.msra.mxu0 0.0
      %739 = vmatprep.subr.mxu0 0.0
      %740 = vmatpush1.msra.mxu0 0.0
      %741 = vmatprep.subr.mxu0 0.0
      %742 = vmatpush1.msra.mxu0 0.0
      %743 = vmatprep.subr.mxu0 0.0
      %744 = vmatpush1.msra.mxu0 0.0
      %745 = vmatprep.subr.mxu0 0.0
      %746 = vmatpush1.msra.mxu0 0.0
      %747 = vmatprep.subr.mxu0 0.0
      %748 = vmatpush1.msra.mxu0 0.0
      %749 = vmatprep.subr.mxu0 0.0
      %750 = vmatpush1.msra.mxu0 0.0
      %751 = vmatprep.subr.mxu0 0.0
      %752 = vmatpush1.msra.mxu0 0.0
      %753 = vmatprep.subr.mxu0 0.0
      %754 = vmatpush1.msra.mxu0 0.0
      %755 = vmatprep.subr.mxu0 0.0
      %756 = vmatpush1.msra.mxu0 0.0
      %757 = vmatprep.subr.mxu0 0.0
      %758 = vmatpush1.msra.mxu0 0.0
      %759 = vmatprep.subr.mxu0 0.0
      %760 = vmatpush1.msra.mxu0 0.0
      %761 = vmatprep.subr.mxu0 0.0
      %762 = vmatpush1.msra.mxu0 0.0
      %763 = vmatprep.subr.mxu0 0.0
      %764 = vmatpush1.msra.mxu0 0.0
      %765 = vmatprep.subr.mxu0 0.0
      %766 = vmatpush1.msra.mxu0 0.0
      %767 = vmatprep.subr.mxu0 0.0
      %768 = vmatpush1.msra.mxu0 0.0
      %769 = vmatprep.subr.mxu0 0.0
      %770 = vmatpush1.msra.mxu0 0.0
      %771 = vmatprep.subr.mxu0 0.0
      %772 = vmatpush1.msra.mxu0 0.0
      %773 = vmatprep.subr.mxu0 0.0
      %774 = vmatpush1.msra.mxu0 0.0
      %775 = vmatprep.subr.mxu0 0.0
      %776 = vmatpush1.msra.mxu0 0.0
      %777 = vmatprep.subr.mxu0 0.0
      %778 = vmatpush1.msra.mxu0 0.0
      %779 = vmatprep.subr.mxu0 0.0
      %780 = vmatpush1.msra.mxu0 0.0
      %781 = vmatprep.subr.mxu0 0.0
      %782 = vmatpush1.msra.mxu0 0.0
      %783 = vmatprep.subr.mxu0 0.0
      %784 = vmatpush1.msra.mxu0 0.0
      %785 = vmatprep.subr.mxu0 0.0
      %786 = vmatpush1.msra.mxu0 0.0
      %787 = vmatprep.subr.mxu0 0.0
      %788 = vmatpush1.msra.mxu0 0.0
      %789 = vmatprep.subr.mxu0 0.0
      %790 = vmatpush1.msra.mxu0 0.0
      %791 = vmatprep.subr.mxu0 0.0
      %792 = vmatpush1.msra.mxu0 0.0
      %793 = vmatprep.mubr.f32.mxu0 0.0
      %794 = vmatmul.mubr.f32.gmra.mrb[0].mxu0 %v727
      %v795 = vpop.f32.mrb[0].mxu0
      %v796 = vadd.f32 0.0, %v795
      %v797 = vpop.f32.mrb[0].mxu0
      %v798 = vadd.f32 0.0, %v797
      %799 = vdwg.mxu0
      %v800 = vlaneseq
      %v801 = vshrl.u32 %v800, 7
      %v802 = vsub.s32 2, %v801
      %v803 = vrot.slane %v433, %v802
      %v804 = vlaneseq
      %v805 = vshrl.u32 %v804, 7
      %v806 = vsub.s32 6, %v805
      %v807 = vrot.slane %v433, %v806
      %v810 = vlaneseq
      %v811 = vshrl.u32 %v810, 7
      %v812 = vsub.s32 2, %v811
      %v813 = vrot.slane %v803, %v812
      %v814 = vlaneseq
      %v815 = vshrl.u32 %v814, 7
      %v816 = vsub.s32 2, %v815
      %v817 = vrot.slane %v807, %v816
      %v818 = vmul.f32 %v796, %v813
      %v819 = vmul.f32 %v798, %v817
      %v820 = vadd.f32 %v722, %v818
      %v821 = vadd.f32 %v723, %v819
      %s822 = scalar_lea.vmem %s5, 12
      %v823 = vld [vmem:[%s822] sm:$0xf]
      %v825 = vsel %vm530, %v823, 0
      %827 = vmatprep.subr.mxu0 %v527
      %828 = vmatpush1.msra.mxu0 %v525
      %829 = vmatprep.subr.mxu0 0.0
      %830 = vmatpush1.msra.mxu0 0.0
      %831 = vmatprep.subr.mxu0 0.0
      %832 = vmatpush1.msra.mxu0 0.0
      %833 = vmatprep.subr.mxu0 0.0
      %834 = vmatpush1.msra.mxu0 0.0
      %835 = vmatprep.subr.mxu0 0.0
      %836 = vmatpush1.msra.mxu0 0.0
      %837 = vmatprep.subr.mxu0 0.0
      %838 = vmatpush1.msra.mxu0 0.0
      %839 = vmatprep.subr.mxu0 0.0
      %840 = vmatpush1.msra.mxu0 0.0
      %841 = vmatprep.subr.mxu0 0.0
      %842 = vmatpush1.msra.mxu0 0.0
      %843 = vmatprep.subr.mxu0 0.0
      %844 = vmatpush1.msra.mxu0 0.0
      %845 = vmatprep.subr.mxu0 0.0
      %846 = vmatpush1.msra.mxu0 0.0
      %847 = vmatprep.subr.mxu0 0.0
      %848 = vmatpush1.msra.mxu0 0.0
      %849 = vmatprep.subr.mxu0 0.0
      %850 = vmatpush1.msra.mxu0 0.0
      %851 = vmatprep.subr.mxu0 0.0
      %852 = vmatpush1.msra.mxu0 0.0
      %853 = vmatprep.subr.mxu0 0.0
      %854 = vmatpush1.msra.mxu0 0.0
      %855 = vmatprep.subr.mxu0 0.0
      %856 = vmatpush1.msra.mxu0 0.0
      %857 = vmatprep.subr.mxu0 0.0
      %858 = vmatpush1.msra.mxu0 0.0
      %859 = vmatprep.subr.mxu0 0.0
      %860 = vmatpush1.msra.mxu0 0.0
      %861 = vmatprep.subr.mxu0 0.0
      %862 = vmatpush1.msra.mxu0 0.0
      %863 = vmatprep.subr.mxu0 0.0
      %864 = vmatpush1.msra.mxu0 0.0
      %865 = vmatprep.subr.mxu0 0.0
      %866 = vmatpush1.msra.mxu0 0.0
      %867 = vmatprep.subr.mxu0 0.0
      %868 = vmatpush1.msra.mxu0 0.0
      %869 = vmatprep.subr.mxu0 0.0
      %870 = vmatpush1.msra.mxu0 0.0
      %871 = vmatprep.subr.mxu0 0.0
      %872 = vmatpush1.msra.mxu0 0.0
      %873 = vmatprep.subr.mxu0 0.0
      %874 = vmatpush1.msra.mxu0 0.0
      %875 = vmatprep.subr.mxu0 0.0
      %876 = vmatpush1.msra.mxu0 0.0
      %877 = vmatprep.subr.mxu0 0.0
      %878 = vmatpush1.msra.mxu0 0.0
      %879 = vmatprep.subr.mxu0 0.0
      %880 = vmatpush1.msra.mxu0 0.0
      %881 = vmatprep.subr.mxu0 0.0
      %882 = vmatpush1.msra.mxu0 0.0
      %883 = vmatprep.subr.mxu0 0.0
      %884 = vmatpush1.msra.mxu0 0.0
      %885 = vmatprep.subr.mxu0 0.0
      %886 = vmatpush1.msra.mxu0 0.0
      %887 = vmatprep.subr.mxu0 0.0
      %888 = vmatpush1.msra.mxu0 0.0
      %889 = vmatprep.subr.mxu0 0.0
      %890 = vmatpush1.msra.mxu0 0.0
      %891 = vmatprep.mubr.f32.mxu0 0.0
      %892 = vmatmul.mubr.f32.gmra.mrb[0].mxu0 %v825
      %v893 = vpop.f32.mrb[0].mxu0
      %v894 = vadd.f32 0.0, %v893
      %v895 = vpop.f32.mrb[0].mxu0
      %v896 = vadd.f32 0.0, %v895
      %897 = vdwg.mxu0
      %v898 = vlaneseq
      %v899 = vshrl.u32 %v898, 7
      %v900 = vsub.s32 3, %v899
      %v901 = vrot.slane %v433, %v900
      %v902 = vlaneseq
      %v903 = vshrl.u32 %v902, 7
      %v904 = vsub.s32 7, %v903
      %v905 = vrot.slane %v433, %v904
      %v908 = vlaneseq
      %v909 = vshrl.u32 %v908, 7
      %v910 = vsub.s32 3, %v909
      %v911 = vrot.slane %v901, %v910
      %v912 = vlaneseq
      %v913 = vshrl.u32 %v912, 7
      %v914 = vsub.s32 3, %v913
      %v915 = vrot.slane %v905, %v914
      %v916 = vmul.f32 %v894, %v911
      %v917 = vmul.f32 %v896, %v915
      %v918 = vadd.f32 %v820, %v916
      %v919 = vadd.f32 %v821, %v917
      %v920 = vld [vmem:[%s6] sm:$0xf]
      %922 = vset.pattern.permute.xlu0 0
      %923 = vperm.xlu0 %922, %v920
      %v924 = vpop.permute.xlu0 %923
      %v926 = vadd.f32 %v918, %v924
      %v927 = vadd.f32 %v919, %v924
      %v928 = vld [vmem:[%s7] sm:$0xf]
      %929 = vrot.lane.b32.xlu0 %v926, 17
      %v930 = vpop.permute.xlu0 %929
      %931 = vrot.lane.b32.xlu0 %v927, 17
      %v932 = vpop.permute.xlu0 %931
      %v933 = vlaneseq
      %v934 = vand.u32 %v933, 127
      %vm935 = vcmp.lt.s32.totalorder %v934, 17
      %v936 = vsel %vm935, %v930, %v932
      %v937 = vsel %vm935, %v932, %v930
      %v938 = vlaneseq
      %v939 = vshrl.u32 %v938, 7
      %v940 = vsub.s32 0, %v939
      %v941 = vrot.slane %v434, %v940
      %v942 = vlaneseq
      %v943 = vshrl.u32 %v942, 7
      %v944 = vsub.s32 0, %v943
      %v945 = vrot.slane %v435, %v944
      %v946 = vmul.f32 %v937, %v941
      %v947 = vmul.f32 %v936, %v945
      %v948 = vld [vmem:[%s8] sm:$0xf]
      %v950 = vcombine.high %v432, %v432
      %952 = vrot.lane.b32.xlu0 %v432, 17
      %v953 = vpop.permute.xlu0 %952
      %954 = vrot.lane.b32.xlu0 %v950, 17
      %v955 = vpop.permute.xlu0 %954
      %v956 = vsel %vm935, %v953, %v955
      %v957 = vsel %vm935, %v955, %v953
      %v958 = vmul.f32 %v957, %v941
      %v959 = vmul.f32 %v956, %v945
      %vm960 = vcmask 31744
      %v962 = vsel %vm960, %v948, 0
      %vm964 = vcmask 1043456
      %v966 = vsel %vm964, %v958, 0
      %v969 = vsel %vm964, %v959, 0
      %971 = vmatprep.subr.mxu0 %v969
      %972 = vmatpush1.msra.mxu0 %v966
      %973 = vmatprep.subr.mxu0 0.0
      %974 = vmatpush1.msra.mxu0 0.0
      %975 = vmatprep.subr.mxu0 0.0
      %976 = vmatpush1.msra.mxu0 0.0
      %977 = vmatprep.subr.mxu0 0.0
      %978 = vmatpush1.msra.mxu0 0.0
      %979 = vmatprep.subr.mxu0 0.0
      %980 = vmatpush1.msra.mxu0 0.0
      %981 = vmatprep.subr.mxu0 0.0
      %982 = vmatpush1.msra.mxu0 0.0
      %983 = vmatprep.subr.mxu0 0.0
      %984 = vmatpush1.msra.mxu0 0.0
      %985 = vmatprep.subr.mxu0 0.0
      %986 = vmatpush1.msra.mxu0 0.0
      %987 = vmatprep.subr.mxu0 0.0
      %988 = vmatpush1.msra.mxu0 0.0
      %989 = vmatprep.subr.mxu0 0.0
      %990 = vmatpush1.msra.mxu0 0.0
      %991 = vmatprep.subr.mxu0 0.0
      %992 = vmatpush1.msra.mxu0 0.0
      %993 = vmatprep.subr.mxu0 0.0
      %994 = vmatpush1.msra.mxu0 0.0
      %995 = vmatprep.subr.mxu0 0.0
      %996 = vmatpush1.msra.mxu0 0.0
      %997 = vmatprep.subr.mxu0 0.0
      %998 = vmatpush1.msra.mxu0 0.0
      %999 = vmatprep.subr.mxu0 0.0
      %1000 = vmatpush1.msra.mxu0 0.0
      %1001 = vmatprep.subr.mxu0 0.0
      %1002 = vmatpush1.msra.mxu0 0.0
      %1003 = vmatprep.subr.mxu0 0.0
      %1004 = vmatpush1.msra.mxu0 0.0
      %1005 = vmatprep.subr.mxu0 0.0
      %1006 = vmatpush1.msra.mxu0 0.0
      %1007 = vmatprep.subr.mxu0 0.0
      %1008 = vmatpush1.msra.mxu0 0.0
      %1009 = vmatprep.subr.mxu0 0.0
      %1010 = vmatpush1.msra.mxu0 0.0
      %1011 = vmatprep.subr.mxu0 0.0
      %1012 = vmatpush1.msra.mxu0 0.0
      %1013 = vmatprep.subr.mxu0 0.0
      %1014 = vmatpush1.msra.mxu0 0.0
      %1015 = vmatprep.subr.mxu0 0.0
      %1016 = vmatpush1.msra.mxu0 0.0
      %1017 = vmatprep.subr.mxu0 0.0
      %1018 = vmatpush1.msra.mxu0 0.0
      %1019 = vmatprep.subr.mxu0 0.0
      %1020 = vmatpush1.msra.mxu0 0.0
      %1021 = vmatprep.subr.mxu0 0.0
      %1022 = vmatpush1.msra.mxu0 0.0
      %1023 = vmatprep.subr.mxu0 0.0
      %1024 = vmatpush1.msra.mxu0 0.0
      %1025 = vmatprep.subr.mxu0 0.0
      %1026 = vmatpush1.msra.mxu0 0.0
      %1027 = vmatprep.subr.mxu0 0.0
      %1028 = vmatpush1.msra.mxu0 0.0
      %1029 = vmatprep.subr.mxu0 0.0
      %1030 = vmatpush1.msra.mxu0 0.0
      %1031 = vmatprep.subr.mxu0 0.0
      %1032 = vmatpush1.msra.mxu0 0.0
      %1033 = vmatprep.subr.mxu0 0.0
      %1034 = vmatpush1.msra.mxu0 0.0
      %1035 = vmatprep.mubr.f32.mxu0 0.0
      %1036 = vmatmul.mubr.f32.gmra.mrb[0].mxu0 %v962
      %v1037 = vpop.f32.mrb[0].mxu0
      %v1038 = vadd.f32 0.0, %v1037
      %v1039 = vpop.f32.mrb[0].mxu0
      %v1040 = vadd.f32 0.0, %v1039
      %1041 = vdwg.mxu0
      %v1043 = vsel %vm960, %v928, 0
      %v1046 = vsel %vm964, %v946, 0
      %v1049 = vsel %vm964, %v947, 0
      %1051 = vmatprep.subr.mxu0 %v1049
      %1052 = vmatpush1.msra.mxu0 %v1046
      %1053 = vmatprep.subr.mxu0 0.0
      %1054 = vmatpush1.msra.mxu0 0.0
      %1055 = vmatprep.subr.mxu0 0.0
      %1056 = vmatpush1.msra.mxu0 0.0
      %1057 = vmatprep.subr.mxu0 0.0
      %1058 = vmatpush1.msra.mxu0 0.0
      %1059 = vmatprep.subr.mxu0 0.0
      %1060 = vmatpush1.msra.mxu0 0.0
      %1061 = vmatprep.subr.mxu0 0.0
      %1062 = vmatpush1.msra.mxu0 0.0
      %1063 = vmatprep.subr.mxu0 0.0
      %1064 = vmatpush1.msra.mxu0 0.0
      %1065 = vmatprep.subr.mxu0 0.0
      %1066 = vmatpush1.msra.mxu0 0.0
      %1067 = vmatprep.subr.mxu0 0.0
      %1068 = vmatpush1.msra.mxu0 0.0
      %1069 = vmatprep.subr.mxu0 0.0
      %1070 = vmatpush1.msra.mxu0 0.0
      %1071 = vmatprep.subr.mxu0 0.0
      %1072 = vmatpush1.msra.mxu0 0.0
      %1073 = vmatprep.subr.mxu0 0.0
      %1074 = vmatpush1.msra.mxu0 0.0
      %1075 = vmatprep.subr.mxu0 0.0
      %1076 = vmatpush1.msra.mxu0 0.0
      %1077 = vmatprep.subr.mxu0 0.0
      %1078 = vmatpush1.msra.mxu0 0.0
      %1079 = vmatprep.subr.mxu0 0.0
      %1080 = vmatpush1.msra.mxu0 0.0
      %1081 = vmatprep.subr.mxu0 0.0
      %1082 = vmatpush1.msra.mxu0 0.0
      %1083 = vmatprep.subr.mxu0 0.0
      %1084 = vmatpush1.msra.mxu0 0.0
      %1085 = vmatprep.subr.mxu0 0.0
      %1086 = vmatpush1.msra.mxu0 0.0
      %1087 = vmatprep.subr.mxu0 0.0
      %1088 = vmatpush1.msra.mxu0 0.0
      %1089 = vmatprep.subr.mxu0 0.0
      %1090 = vmatpush1.msra.mxu0 0.0
      %1091 = vmatprep.subr.mxu0 0.0
      %1092 = vmatpush1.msra.mxu0 0.0
      %1093 = vmatprep.subr.mxu0 0.0
      %1094 = vmatpush1.msra.mxu0 0.0
      %1095 = vmatprep.subr.mxu0 0.0
      %1096 = vmatpush1.msra.mxu0 0.0
      %1097 = vmatprep.subr.mxu0 0.0
      %1098 = vmatpush1.msra.mxu0 0.0
      %1099 = vmatprep.subr.mxu0 0.0
      %1100 = vmatpush1.msra.mxu0 0.0
      %1101 = vmatprep.subr.mxu0 0.0
      %1102 = vmatpush1.msra.mxu0 0.0
      %1103 = vmatprep.subr.mxu0 0.0
      %1104 = vmatpush1.msra.mxu0 0.0
      %1105 = vmatprep.subr.mxu0 0.0
      %1106 = vmatpush1.msra.mxu0 0.0
      %1107 = vmatprep.subr.mxu0 0.0
      %1108 = vmatpush1.msra.mxu0 0.0
      %1109 = vmatprep.subr.mxu0 0.0
      %1110 = vmatpush1.msra.mxu0 0.0
      %1111 = vmatprep.subr.mxu0 0.0
      %1112 = vmatpush1.msra.mxu0 0.0
      %1113 = vmatprep.subr.mxu0 0.0
      %1114 = vmatpush1.msra.mxu0 0.0
      %1115 = vmatprep.mubr.f32.mxu0 0.0
      %1116 = vmatmul.mubr.f32.gmra.mrb[0].mxu0 %v1043
      %v1117 = vpop.f32.mrb[0].mxu0
      %v1118 = vadd.f32 %v1038, %v1117
      %v1119 = vpop.f32.mrb[0].mxu0
      %v1120 = vadd.f32 %v1040, %v1119
      %1121 = vdwg.mxu0
      %s1122 = scalar_lea.vmem %s7, 4
      %v1123 = vld [vmem:[%s1122] sm:$0xf]
      %1124 = vrot.lane.b32.xlu0 %v926, 16
      %v1125 = vpop.permute.xlu0 %1124
      %1126 = vrot.lane.b32.xlu0 %v927, 16
      %v1127 = vpop.permute.xlu0 %1126
      %vm1128 = vcmp.lt.s32.totalorder %v934, 16
      %v1129 = vsel %vm1128, %v1125, %v1127
      %v1130 = vsel %vm1128, %v1127, %v1125
      %v1131 = vlaneseq
      %v1132 = vshrl.u32 %v1131, 7
      %v1133 = vsub.s32 1, %v1132
      %v1134 = vrot.slane %v434, %v1133
      %v1135 = vlaneseq
      %v1136 = vshrl.u32 %v1135, 7
      %v1137 = vsub.s32 1, %v1136
      %v1138 = vrot.slane %v435, %v1137
      %v1139 = vmul.f32 %v1130, %v1134
      %v1140 = vmul.f32 %v1129, %v1138
      %s1141 = scalar_lea.vmem %s8, 4
      %v1142 = vld [vmem:[%s1141] sm:$0xf]
      %1143 = vrot.lane.b32.xlu0 %v432, 16
      %v1144 = vpop.permute.xlu0 %1143
      %1145 = vrot.lane.b32.xlu0 %v950, 16
      %v1146 = vpop.permute.xlu0 %1145
      %v1147 = vsel %vm1128, %v1144, %v1146
      %v1148 = vsel %vm1128, %v1146, %v1144
      %v1149 = vmul.f32 %v1148, %v1134
      %v1150 = vmul.f32 %v1147, %v1138
      %v1152 = vsel %vm960, %v1142, 0
      %v1155 = vsel %vm964, %v1149, 0
      %v1158 = vsel %vm964, %v1150, 0
      %1160 = vmatprep.subr.mxu0 %v1158
      %1161 = vmatpush1.msra.mxu0 %v1155
      %1162 = vmatprep.subr.mxu0 0.0
      %1163 = vmatpush1.msra.mxu0 0.0
      %1164 = vmatprep.subr.mxu0 0.0
      %1165 = vmatpush1.msra.mxu0 0.0
      %1166 = vmatprep.subr.mxu0 0.0
      %1167 = vmatpush1.msra.mxu0 0.0
      %1168 = vmatprep.subr.mxu0 0.0
      %1169 = vmatpush1.msra.mxu0 0.0
      %1170 = vmatprep.subr.mxu0 0.0
      %1171 = vmatpush1.msra.mxu0 0.0
      %1172 = vmatprep.subr.mxu0 0.0
      %1173 = vmatpush1.msra.mxu0 0.0
      %1174 = vmatprep.subr.mxu0 0.0
      %1175 = vmatpush1.msra.mxu0 0.0
      %1176 = vmatprep.subr.mxu0 0.0
      %1177 = vmatpush1.msra.mxu0 0.0
      %1178 = vmatprep.subr.mxu0 0.0
      %1179 = vmatpush1.msra.mxu0 0.0
      %1180 = vmatprep.subr.mxu0 0.0
      %1181 = vmatpush1.msra.mxu0 0.0
      %1182 = vmatprep.subr.mxu0 0.0
      %1183 = vmatpush1.msra.mxu0 0.0
      %1184 = vmatprep.subr.mxu0 0.0
      %1185 = vmatpush1.msra.mxu0 0.0
      %1186 = vmatprep.subr.mxu0 0.0
      %1187 = vmatpush1.msra.mxu0 0.0
      %1188 = vmatprep.subr.mxu0 0.0
      %1189 = vmatpush1.msra.mxu0 0.0
      %1190 = vmatprep.subr.mxu0 0.0
      %1191 = vmatpush1.msra.mxu0 0.0
      %1192 = vmatprep.subr.mxu0 0.0
      %1193 = vmatpush1.msra.mxu0 0.0
      %1194 = vmatprep.subr.mxu0 0.0
      %1195 = vmatpush1.msra.mxu0 0.0
      %1196 = vmatprep.subr.mxu0 0.0
      %1197 = vmatpush1.msra.mxu0 0.0
      %1198 = vmatprep.subr.mxu0 0.0
      %1199 = vmatpush1.msra.mxu0 0.0
      %1200 = vmatprep.subr.mxu0 0.0
      %1201 = vmatpush1.msra.mxu0 0.0
      %1202 = vmatprep.subr.mxu0 0.0
      %1203 = vmatpush1.msra.mxu0 0.0
      %1204 = vmatprep.subr.mxu0 0.0
      %1205 = vmatpush1.msra.mxu0 0.0
      %1206 = vmatprep.subr.mxu0 0.0
      %1207 = vmatpush1.msra.mxu0 0.0
      %1208 = vmatprep.subr.mxu0 0.0
      %1209 = vmatpush1.msra.mxu0 0.0
      %1210 = vmatprep.subr.mxu0 0.0
      %1211 = vmatpush1.msra.mxu0 0.0
      %1212 = vmatprep.subr.mxu0 0.0
      %1213 = vmatpush1.msra.mxu0 0.0
      %1214 = vmatprep.subr.mxu0 0.0
      %1215 = vmatpush1.msra.mxu0 0.0
      %1216 = vmatprep.subr.mxu0 0.0
      %1217 = vmatpush1.msra.mxu0 0.0
      %1218 = vmatprep.subr.mxu0 0.0
      %1219 = vmatpush1.msra.mxu0 0.0
      %1220 = vmatprep.subr.mxu0 0.0
      %1221 = vmatpush1.msra.mxu0 0.0
      %1222 = vmatprep.subr.mxu0 0.0
      %1223 = vmatpush1.msra.mxu0 0.0
      %1224 = vmatprep.mubr.f32.mxu0 0.0
      %1225 = vmatmul.mubr.f32.gmra.mrb[0].mxu0 %v1152
      %v1226 = vpop.f32.mrb[0].mxu0
      %v1227 = vadd.f32 0.0, %v1226
      %v1228 = vpop.f32.mrb[0].mxu0
      %v1229 = vadd.f32 0.0, %v1228
      %1230 = vdwg.mxu0
      %v1232 = vsel %vm960, %v1123, 0
      %v1235 = vsel %vm964, %v1139, 0
      %v1238 = vsel %vm964, %v1140, 0
      %1240 = vmatprep.subr.mxu0 %v1238
      %1241 = vmatpush1.msra.mxu0 %v1235
      %1242 = vmatprep.subr.mxu0 0.0
      %1243 = vmatpush1.msra.mxu0 0.0
      %1244 = vmatprep.subr.mxu0 0.0
      %1245 = vmatpush1.msra.mxu0 0.0
      %1246 = vmatprep.subr.mxu0 0.0
      %1247 = vmatpush1.msra.mxu0 0.0
      %1248 = vmatprep.subr.mxu0 0.0
      %1249 = vmatpush1.msra.mxu0 0.0
      %1250 = vmatprep.subr.mxu0 0.0
      %1251 = vmatpush1.msra.mxu0 0.0
      %1252 = vmatprep.subr.mxu0 0.0
      %1253 = vmatpush1.msra.mxu0 0.0
      %1254 = vmatprep.subr.mxu0 0.0
      %1255 = vmatpush1.msra.mxu0 0.0
      %1256 = vmatprep.subr.mxu0 0.0
      %1257 = vmatpush1.msra.mxu0 0.0
      %1258 = vmatprep.subr.mxu0 0.0
      %1259 = vmatpush1.msra.mxu0 0.0
      %1260 = vmatprep.subr.mxu0 0.0
      %1261 = vmatpush1.msra.mxu0 0.0
      %1262 = vmatprep.subr.mxu0 0.0
      %1263 = vmatpush1.msra.mxu0 0.0
      %1264 = vmatprep.subr.mxu0 0.0
      %1265 = vmatpush1.msra.mxu0 0.0
      %1266 = vmatprep.subr.mxu0 0.0
      %1267 = vmatpush1.msra.mxu0 0.0
      %1268 = vmatprep.subr.mxu0 0.0
      %1269 = vmatpush1.msra.mxu0 0.0
      %1270 = vmatprep.subr.mxu0 0.0
      %1271 = vmatpush1.msra.mxu0 0.0
      %1272 = vmatprep.subr.mxu0 0.0
      %1273 = vmatpush1.msra.mxu0 0.0
      %1274 = vmatprep.subr.mxu0 0.0
      %1275 = vmatpush1.msra.mxu0 0.0
      %1276 = vmatprep.subr.mxu0 0.0
      %1277 = vmatpush1.msra.mxu0 0.0
      %1278 = vmatprep.subr.mxu0 0.0
      %1279 = vmatpush1.msra.mxu0 0.0
      %1280 = vmatprep.subr.mxu0 0.0
      %1281 = vmatpush1.msra.mxu0 0.0
      %1282 = vmatprep.subr.mxu0 0.0
      %1283 = vmatpush1.msra.mxu0 0.0
      %1284 = vmatprep.subr.mxu0 0.0
      %1285 = vmatpush1.msra.mxu0 0.0
      %1286 = vmatprep.subr.mxu0 0.0
      %1287 = vmatpush1.msra.mxu0 0.0
      %1288 = vmatprep.subr.mxu0 0.0
      %1289 = vmatpush1.msra.mxu0 0.0
      %1290 = vmatprep.subr.mxu0 0.0
      %1291 = vmatpush1.msra.mxu0 0.0
      %1292 = vmatprep.subr.mxu0 0.0
      %1293 = vmatpush1.msra.mxu0 0.0
      %1294 = vmatprep.subr.mxu0 0.0
      %1295 = vmatpush1.msra.mxu0 0.0
      %1296 = vmatprep.subr.mxu0 0.0
      %1297 = vmatpush1.msra.mxu0 0.0
      %1298 = vmatprep.subr.mxu0 0.0
      %1299 = vmatpush1.msra.mxu0 0.0
      %1300 = vmatprep.subr.mxu0 0.0
      %1301 = vmatpush1.msra.mxu0 0.0
      %1302 = vmatprep.subr.mxu0 0.0
      %1303 = vmatpush1.msra.mxu0 0.0
      %1304 = vmatprep.mubr.f32.mxu0 0.0
      %1305 = vmatmul.mubr.f32.gmra.mrb[0].mxu0 %v1232
      %v1306 = vpop.f32.mrb[0].mxu0
      %v1307 = vadd.f32 %v1227, %v1306
      %v1308 = vpop.f32.mrb[0].mxu0
      %v1309 = vadd.f32 %v1229, %v1308
      %1310 = vdwg.mxu0
      %v1311 = vadd.f32 %v1118, %v1307
      %v1312 = vadd.f32 %v1120, %v1309
      %s1313 = scalar_lea.vmem %s7, 8
      %v1314 = vld [vmem:[%s1313] sm:$0xf]
      %1315 = vrot.lane.b32.xlu0 %v926, 15
      %v1316 = vpop.permute.xlu0 %1315
      %1317 = vrot.lane.b32.xlu0 %v927, 15
      %v1318 = vpop.permute.xlu0 %1317
      %vm1319 = vcmp.lt.s32.totalorder %v934, 15
      %v1320 = vsel %vm1319, %v1316, %v1318
      %v1321 = vsel %vm1319, %v1318, %v1316
      %v1322 = vlaneseq
      %v1323 = vshrl.u32 %v1322, 7
      %v1324 = vsub.s32 2, %v1323
      %v1325 = vrot.slane %v434, %v1324
      %v1326 = vlaneseq
      %v1327 = vshrl.u32 %v1326, 7
      %v1328 = vsub.s32 2, %v1327
      %v1329 = vrot.slane %v435, %v1328
      %v1330 = vmul.f32 %v1321, %v1325
      %v1331 = vmul.f32 %v1320, %v1329
      %s1332 = scalar_lea.vmem %s8, 8
      %v1333 = vld [vmem:[%s1332] sm:$0xf]
      %1334 = vrot.lane.b32.xlu0 %v432, 15
      %v1335 = vpop.permute.xlu0 %1334
      %1336 = vrot.lane.b32.xlu0 %v950, 15
      %v1337 = vpop.permute.xlu0 %1336
      %v1338 = vsel %vm1319, %v1335, %v1337
      %v1339 = vsel %vm1319, %v1337, %v1335
      %v1340 = vmul.f32 %v1339, %v1325
      %v1341 = vmul.f32 %v1338, %v1329
      %v1343 = vsel %vm960, %v1333, 0
      %v1346 = vsel %vm964, %v1340, 0
      %v1349 = vsel %vm964, %v1341, 0
      %1351 = vmatprep.subr.mxu0 %v1349
      %1352 = vmatpush1.msra.mxu0 %v1346
      %1353 = vmatprep.subr.mxu0 0.0
      %1354 = vmatpush1.msra.mxu0 0.0
      %1355 = vmatprep.subr.mxu0 0.0
      %1356 = vmatpush1.msra.mxu0 0.0
      %1357 = vmatprep.subr.mxu0 0.0
      %1358 = vmatpush1.msra.mxu0 0.0
      %1359 = vmatprep.subr.mxu0 0.0
      %1360 = vmatpush1.msra.mxu0 0.0
      %1361 = vmatprep.subr.mxu0 0.0
      %1362 = vmatpush1.msra.mxu0 0.0
      %1363 = vmatprep.subr.mxu0 0.0
      %1364 = vmatpush1.msra.mxu0 0.0
      %1365 = vmatprep.subr.mxu0 0.0
      %1366 = vmatpush1.msra.mxu0 0.0
      %1367 = vmatprep.subr.mxu0 0.0
      %1368 = vmatpush1.msra.mxu0 0.0
      %1369 = vmatprep.subr.mxu0 0.0
      %1370 = vmatpush1.msra.mxu0 0.0
      %1371 = vmatprep.subr.mxu0 0.0
      %1372 = vmatpush1.msra.mxu0 0.0
      %1373 = vmatprep.subr.mxu0 0.0
      %1374 = vmatpush1.msra.mxu0 0.0
      %1375 = vmatprep.subr.mxu0 0.0
      %1376 = vmatpush1.msra.mxu0 0.0
      %1377 = vmatprep.subr.mxu0 0.0
      %1378 = vmatpush1.msra.mxu0 0.0
      %1379 = vmatprep.subr.mxu0 0.0
      %1380 = vmatpush1.msra.mxu0 0.0
      %1381 = vmatprep.subr.mxu0 0.0
      %1382 = vmatpush1.msra.mxu0 0.0
      %1383 = vmatprep.subr.mxu0 0.0
      %1384 = vmatpush1.msra.mxu0 0.0
      %1385 = vmatprep.subr.mxu0 0.0
      %1386 = vmatpush1.msra.mxu0 0.0
      %1387 = vmatprep.subr.mxu0 0.0
      %1388 = vmatpush1.msra.mxu0 0.0
      %1389 = vmatprep.subr.mxu0 0.0
      %1390 = vmatpush1.msra.mxu0 0.0
      %1391 = vmatprep.subr.mxu0 0.0
      %1392 = vmatpush1.msra.mxu0 0.0
      %1393 = vmatprep.subr.mxu0 0.0
      %1394 = vmatpush1.msra.mxu0 0.0
      %1395 = vmatprep.subr.mxu0 0.0
      %1396 = vmatpush1.msra.mxu0 0.0
      %1397 = vmatprep.subr.mxu0 0.0
      %1398 = vmatpush1.msra.mxu0 0.0
      %1399 = vmatprep.subr.mxu0 0.0
      %1400 = vmatpush1.msra.mxu0 0.0
      %1401 = vmatprep.subr.mxu0 0.0
      %1402 = vmatpush1.msra.mxu0 0.0
      %1403 = vmatprep.subr.mxu0 0.0
      %1404 = vmatpush1.msra.mxu0 0.0
      %1405 = vmatprep.subr.mxu0 0.0
      %1406 = vmatpush1.msra.mxu0 0.0
      %1407 = vmatprep.subr.mxu0 0.0
      %1408 = vmatpush1.msra.mxu0 0.0
      %1409 = vmatprep.subr.mxu0 0.0
      %1410 = vmatpush1.msra.mxu0 0.0
      %1411 = vmatprep.subr.mxu0 0.0
      %1412 = vmatpush1.msra.mxu0 0.0
      %1413 = vmatprep.subr.mxu0 0.0
      %1414 = vmatpush1.msra.mxu0 0.0
      %1415 = vmatprep.mubr.f32.mxu0 0.0
      %1416 = vmatmul.mubr.f32.gmra.mrb[0].mxu0 %v1343
      %v1417 = vpop.f32.mrb[0].mxu0
      %v1418 = vadd.f32 0.0, %v1417
      %v1419 = vpop.f32.mrb[0].mxu0
      %v1420 = vadd.f32 0.0, %v1419
      %1421 = vdwg.mxu0
      %v1423 = vsel %vm960, %v1314, 0
      %v1426 = vsel %vm964, %v1330, 0
      %v1429 = vsel %vm964, %v1331, 0
      %1431 = vmatprep.subr.mxu0 %v1429
      %1432 = vmatpush1.msra.mxu0 %v1426
      %1433 = vmatprep.subr.mxu0 0.0
      %1434 = vmatpush1.msra.mxu0 0.0
      %1435 = vmatprep.subr.mxu0 0.0
      %1436 = vmatpush1.msra.mxu0 0.0
      %1437 = vmatprep.subr.mxu0 0.0
      %1438 = vmatpush1.msra.mxu0 0.0
      %1439 = vmatprep.subr.mxu0 0.0
      %1440 = vmatpush1.msra.mxu0 0.0
      %1441 = vmatprep.subr.mxu0 0.0
      %1442 = vmatpush1.msra.mxu0 0.0
      %1443 = vmatprep.subr.mxu0 0.0
      %1444 = vmatpush1.msra.mxu0 0.0
      %1445 = vmatprep.subr.mxu0 0.0
      %1446 = vmatpush1.msra.mxu0 0.0
      %1447 = vmatprep.subr.mxu0 0.0
      %1448 = vmatpush1.msra.mxu0 0.0
      %1449 = vmatprep.subr.mxu0 0.0
      %1450 = vmatpush1.msra.mxu0 0.0
      %1451 = vmatprep.subr.mxu0 0.0
      %1452 = vmatpush1.msra.mxu0 0.0
      %1453 = vmatprep.subr.mxu0 0.0
      %1454 = vmatpush1.msra.mxu0 0.0
      %1455 = vmatprep.subr.mxu0 0.0
      %1456 = vmatpush1.msra.mxu0 0.0
      %1457 = vmatprep.subr.mxu0 0.0
      %1458 = vmatpush1.msra.mxu0 0.0
      %1459 = vmatprep.subr.mxu0 0.0
      %1460 = vmatpush1.msra.mxu0 0.0
      %1461 = vmatprep.subr.mxu0 0.0
      %1462 = vmatpush1.msra.mxu0 0.0
      %1463 = vmatprep.subr.mxu0 0.0
      %1464 = vmatpush1.msra.mxu0 0.0
      %1465 = vmatprep.subr.mxu0 0.0
      %1466 = vmatpush1.msra.mxu0 0.0
      %1467 = vmatprep.subr.mxu0 0.0
      %1468 = vmatpush1.msra.mxu0 0.0
      %1469 = vmatprep.subr.mxu0 0.0
      %1470 = vmatpush1.msra.mxu0 0.0
      %1471 = vmatprep.subr.mxu0 0.0
      %1472 = vmatpush1.msra.mxu0 0.0
      %1473 = vmatprep.subr.mxu0 0.0
      %1474 = vmatpush1.msra.mxu0 0.0
      %1475 = vmatprep.subr.mxu0 0.0
      %1476 = vmatpush1.msra.mxu0 0.0
      %1477 = vmatprep.subr.mxu0 0.0
      %1478 = vmatpush1.msra.mxu0 0.0
      %1479 = vmatprep.subr.mxu0 0.0
      %1480 = vmatpush1.msra.mxu0 0.0
      %1481 = vmatprep.subr.mxu0 0.0
      %1482 = vmatpush1.msra.mxu0 0.0
      %1483 = vmatprep.subr.mxu0 0.0
      %1484 = vmatpush1.msra.mxu0 0.0
      %1485 = vmatprep.subr.mxu0 0.0
      %1486 = vmatpush1.msra.mxu0 0.0
      %1487 = vmatprep.subr.mxu0 0.0
      %1488 = vmatpush1.msra.mxu0 0.0
      %1489 = vmatprep.subr.mxu0 0.0
      %1490 = vmatpush1.msra.mxu0 0.0
      %1491 = vmatprep.subr.mxu0 0.0
      %1492 = vmatpush1.msra.mxu0 0.0
      %1493 = vmatprep.subr.mxu0 0.0
      %1494 = vmatpush1.msra.mxu0 0.0
      %1495 = vmatprep.mubr.f32.mxu0 0.0
      %1496 = vmatmul.mubr.f32.gmra.mrb[0].mxu0 %v1423
      %v1497 = vpop.f32.mrb[0].mxu0
      %v1498 = vadd.f32 %v1418, %v1497
      %v1499 = vpop.f32.mrb[0].mxu0
      %v1500 = vadd.f32 %v1420, %v1499
      %1501 = vdwg.mxu0
      %v1502 = vadd.f32 %v1311, %v1498
      %v1503 = vadd.f32 %v1312, %v1500
      %s1504 = scalar_lea.vmem %s7, 12
      %v1505 = vld [vmem:[%s1504] sm:$0xf]
      %1506 = vrot.lane.b32.xlu0 %v926, 1
      %v1507 = vpop.permute.xlu0 %1506
      %1508 = vrot.lane.b32.xlu0 %v927, 1
      %v1509 = vpop.permute.xlu0 %1508
      %vm1510 = vcmp.lt.s32.totalorder %v934, 1
      %v1511 = vsel %vm1510, %v1507, %v1509
      %v1512 = vsel %vm1510, %v1509, %v1507
      %v1513 = vlaneseq
      %v1514 = vshrl.u32 %v1513, 7
      %v1515 = vsub.s32 3, %v1514
      %v1516 = vrot.slane %v434, %v1515
      %v1517 = vlaneseq
      %v1518 = vshrl.u32 %v1517, 7
      %v1519 = vsub.s32 3, %v1518
      %v1520 = vrot.slane %v435, %v1519
      %v1521 = vmul.f32 %v1512, %v1516
      %v1522 = vmul.f32 %v1511, %v1520
      %s1523 = scalar_lea.vmem %s8, 12
      %v1524 = vld [vmem:[%s1523] sm:$0xf]
      %1525 = vrot.lane.b32.xlu0 %v432, 1
      %v1526 = vpop.permute.xlu0 %1525
      %1527 = vrot.lane.b32.xlu0 %v950, 1
      %v1528 = vpop.permute.xlu0 %1527
      %v1529 = vsel %vm1510, %v1526, %v1528
      %v1530 = vsel %vm1510, %v1528, %v1526
      %v1531 = vmul.f32 %v1530, %v1516
      %v1532 = vmul.f32 %v1529, %v1520
      %v1534 = vsel %vm960, %v1524, 0
      %v1537 = vsel %vm964, %v1531, 0
      %v1540 = vsel %vm964, %v1532, 0
      %1542 = vmatprep.subr.mxu0 %v1540
      %1543 = vmatpush1.msra.mxu0 %v1537
      %1544 = vmatprep.subr.mxu0 0.0
      %1545 = vmatpush1.msra.mxu0 0.0
      %1546 = vmatprep.subr.mxu0 0.0
      %1547 = vmatpush1.msra.mxu0 0.0
      %1548 = vmatprep.subr.mxu0 0.0
      %1549 = vmatpush1.msra.mxu0 0.0
      %1550 = vmatprep.subr.mxu0 0.0
      %1551 = vmatpush1.msra.mxu0 0.0
      %1552 = vmatprep.subr.mxu0 0.0
      %1553 = vmatpush1.msra.mxu0 0.0
      %1554 = vmatprep.subr.mxu0 0.0
      %1555 = vmatpush1.msra.mxu0 0.0
      %1556 = vmatprep.subr.mxu0 0.0
      %1557 = vmatpush1.msra.mxu0 0.0
      %1558 = vmatprep.subr.mxu0 0.0
      %1559 = vmatpush1.msra.mxu0 0.0
      %1560 = vmatprep.subr.mxu0 0.0
      %1561 = vmatpush1.msra.mxu0 0.0
      %1562 = vmatprep.subr.mxu0 0.0
      %1563 = vmatpush1.msra.mxu0 0.0
      %1564 = vmatprep.subr.mxu0 0.0
      %1565 = vmatpush1.msra.mxu0 0.0
      %1566 = vmatprep.subr.mxu0 0.0
      %1567 = vmatpush1.msra.mxu0 0.0
      %1568 = vmatprep.subr.mxu0 0.0
      %1569 = vmatpush1.msra.mxu0 0.0
      %1570 = vmatprep.subr.mxu0 0.0
      %1571 = vmatpush1.msra.mxu0 0.0
      %1572 = vmatprep.subr.mxu0 0.0
      %1573 = vmatpush1.msra.mxu0 0.0
      %1574 = vmatprep.subr.mxu0 0.0
      %1575 = vmatpush1.msra.mxu0 0.0
      %1576 = vmatprep.subr.mxu0 0.0
      %1577 = vmatpush1.msra.mxu0 0.0
      %1578 = vmatprep.subr.mxu0 0.0
      %1579 = vmatpush1.msra.mxu0 0.0
      %1580 = vmatprep.subr.mxu0 0.0
      %1581 = vmatpush1.msra.mxu0 0.0
      %1582 = vmatprep.subr.mxu0 0.0
      %1583 = vmatpush1.msra.mxu0 0.0
      %1584 = vmatprep.subr.mxu0 0.0
      %1585 = vmatpush1.msra.mxu0 0.0
      %1586 = vmatprep.subr.mxu0 0.0
      %1587 = vmatpush1.msra.mxu0 0.0
      %1588 = vmatprep.subr.mxu0 0.0
      %1589 = vmatpush1.msra.mxu0 0.0
      %1590 = vmatprep.subr.mxu0 0.0
      %1591 = vmatpush1.msra.mxu0 0.0
      %1592 = vmatprep.subr.mxu0 0.0
      %1593 = vmatpush1.msra.mxu0 0.0
      %1594 = vmatprep.subr.mxu0 0.0
      %1595 = vmatpush1.msra.mxu0 0.0
      %1596 = vmatprep.subr.mxu0 0.0
      %1597 = vmatpush1.msra.mxu0 0.0
      %1598 = vmatprep.subr.mxu0 0.0
      %1599 = vmatpush1.msra.mxu0 0.0
      %1600 = vmatprep.subr.mxu0 0.0
      %1601 = vmatpush1.msra.mxu0 0.0
      %1602 = vmatprep.subr.mxu0 0.0
      %1603 = vmatpush1.msra.mxu0 0.0
      %1604 = vmatprep.subr.mxu0 0.0
      %1605 = vmatpush1.msra.mxu0 0.0
      %1606 = vmatprep.mubr.f32.mxu0 0.0
      %1607 = vmatmul.mubr.f32.gmra.mrb[0].mxu0 %v1534
      %v1608 = vpop.f32.mrb[0].mxu0
      %v1609 = vadd.f32 0.0, %v1608
      %v1610 = vpop.f32.mrb[0].mxu0
      %v1611 = vadd.f32 0.0, %v1610
      %1612 = vdwg.mxu0
      %v1614 = vsel %vm960, %v1505, 0
      %v1617 = vsel %vm964, %v1521, 0
      %v1620 = vsel %vm964, %v1522, 0
      %1622 = vmatprep.subr.mxu0 %v1620
      %1623 = vmatpush1.msra.mxu0 %v1617
      %1624 = vmatprep.subr.mxu0 0.0
      %1625 = vmatpush1.msra.mxu0 0.0
      %1626 = vmatprep.subr.mxu0 0.0
      %1627 = vmatpush1.msra.mxu0 0.0
      %1628 = vmatprep.subr.mxu0 0.0
      %1629 = vmatpush1.msra.mxu0 0.0
      %1630 = vmatprep.subr.mxu0 0.0
      %1631 = vmatpush1.msra.mxu0 0.0
      %1632 = vmatprep.subr.mxu0 0.0
      %1633 = vmatpush1.msra.mxu0 0.0
      %1634 = vmatprep.subr.mxu0 0.0
      %1635 = vmatpush1.msra.mxu0 0.0
      %1636 = vmatprep.subr.mxu0 0.0
      %1637 = vmatpush1.msra.mxu0 0.0
      %1638 = vmatprep.subr.mxu0 0.0
      %1639 = vmatpush1.msra.mxu0 0.0
      %1640 = vmatprep.subr.mxu0 0.0
      %1641 = vmatpush1.msra.mxu0 0.0
      %1642 = vmatprep.subr.mxu0 0.0
      %1643 = vmatpush1.msra.mxu0 0.0
      %1644 = vmatprep.subr.mxu0 0.0
      %1645 = vmatpush1.msra.mxu0 0.0
      %1646 = vmatprep.subr.mxu0 0.0
      %1647 = vmatpush1.msra.mxu0 0.0
      %1648 = vmatprep.subr.mxu0 0.0
      %1649 = vmatpush1.msra.mxu0 0.0
      %1650 = vmatprep.subr.mxu0 0.0
      %1651 = vmatpush1.msra.mxu0 0.0
      %1652 = vmatprep.subr.mxu0 0.0
      %1653 = vmatpush1.msra.mxu0 0.0
      %1654 = vmatprep.subr.mxu0 0.0
      %1655 = vmatpush1.msra.mxu0 0.0
      %1656 = vmatprep.subr.mxu0 0.0
      %1657 = vmatpush1.msra.mxu0 0.0
      %1658 = vmatprep.subr.mxu0 0.0
      %1659 = vmatpush1.msra.mxu0 0.0
      %1660 = vmatprep.subr.mxu0 0.0
      %1661 = vmatpush1.msra.mxu0 0.0
      %1662 = vmatprep.subr.mxu0 0.0
      %1663 = vmatpush1.msra.mxu0 0.0
      %1664 = vmatprep.subr.mxu0 0.0
      %1665 = vmatpush1.msra.mxu0 0.0
      %1666 = vmatprep.subr.mxu0 0.0
      %1667 = vmatpush1.msra.mxu0 0.0
      %1668 = vmatprep.subr.mxu0 0.0
      %1669 = vmatpush1.msra.mxu0 0.0
      %1670 = vmatprep.subr.mxu0 0.0
      %1671 = vmatpush1.msra.mxu0 0.0
      %1672 = vmatprep.subr.mxu0 0.0
      %1673 = vmatpush1.msra.mxu0 0.0
      %1674 = vmatprep.subr.mxu0 0.0
      %1675 = vmatpush1.msra.mxu0 0.0
      %1676 = vmatprep.subr.mxu0 0.0
      %1677 = vmatpush1.msra.mxu0 0.0
      %1678 = vmatprep.subr.mxu0 0.0
      %1679 = vmatpush1.msra.mxu0 0.0
      %1680 = vmatprep.subr.mxu0 0.0
      %1681 = vmatpush1.msra.mxu0 0.0
      %1682 = vmatprep.subr.mxu0 0.0
      %1683 = vmatpush1.msra.mxu0 0.0
      %1684 = vmatprep.subr.mxu0 0.0
      %1685 = vmatpush1.msra.mxu0 0.0
      %1686 = vmatprep.mubr.f32.mxu0 0.0
      %1687 = vmatmul.mubr.f32.gmra.mrb[0].mxu0 %v1614
      %v1688 = vpop.f32.mrb[0].mxu0
      %v1689 = vadd.f32 %v1609, %v1688
      %v1690 = vpop.f32.mrb[0].mxu0
      %v1691 = vadd.f32 %v1611, %v1690
      %1692 = vdwg.mxu0
      %v1693 = vadd.f32 %v1502, %v1689
      %v1694 = vadd.f32 %v1503, %v1691
      %s1695 = scalar_lea.vmem %s7, 16
      %v1696 = vld [vmem:[%s1695] sm:$0xf]
      %v1697 = vlaneseq
      %v1698 = vshrl.u32 %v1697, 7
      %v1699 = vsub.s32 4, %v1698
      %v1700 = vrot.slane %v434, %v1699
      %v1701 = vlaneseq
      %v1702 = vshrl.u32 %v1701, 7
      %v1703 = vsub.s32 4, %v1702
      %v1704 = vrot.slane %v435, %v1703
      %v1705 = vmul.f32 %v926, %v1700
      %v1706 = vmul.f32 %v927, %v1704
      %s1707 = scalar_lea.vmem %s8, 16
      %v1708 = vld [vmem:[%s1707] sm:$0xf]
      %v1711 = vcombine.low %v1700, %v1704
      %v1713 = vmul.f32 %v432, %v1711
      %v1715 = vcombine.high %v1713, %v1713
      %v1717 = vsel %vm960, %v1708, 0
      %v1719 = vsel %vm964, %v1713, 0
      %v1721 = vsel %vm964, %v1715, 0
      %1723 = vmatprep.subr.mxu0 %v1721
      %1724 = vmatpush1.msra.mxu0 %v1719
      %1725 = vmatprep.subr.mxu0 0.0
      %1726 = vmatpush1.msra.mxu0 0.0
      %1727 = vmatprep.subr.mxu0 0.0
      %1728 = vmatpush1.msra.mxu0 0.0
      %1729 = vmatprep.subr.mxu0 0.0
      %1730 = vmatpush1.msra.mxu0 0.0
      %1731 = vmatprep.subr.mxu0 0.0
      %1732 = vmatpush1.msra.mxu0 0.0
      %1733 = vmatprep.subr.mxu0 0.0
      %1734 = vmatpush1.msra.mxu0 0.0
      %1735 = vmatprep.subr.mxu0 0.0
      %1736 = vmatpush1.msra.mxu0 0.0
      %1737 = vmatprep.subr.mxu0 0.0
      %1738 = vmatpush1.msra.mxu0 0.0
      %1739 = vmatprep.subr.mxu0 0.0
      %1740 = vmatpush1.msra.mxu0 0.0
      %1741 = vmatprep.subr.mxu0 0.0
      %1742 = vmatpush1.msra.mxu0 0.0
      %1743 = vmatprep.subr.mxu0 0.0
      %1744 = vmatpush1.msra.mxu0 0.0
      %1745 = vmatprep.subr.mxu0 0.0
      %1746 = vmatpush1.msra.mxu0 0.0
      %1747 = vmatprep.subr.mxu0 0.0
      %1748 = vmatpush1.msra.mxu0 0.0
      %1749 = vmatprep.subr.mxu0 0.0
      %1750 = vmatpush1.msra.mxu0 0.0
      %1751 = vmatprep.subr.mxu0 0.0
      %1752 = vmatpush1.msra.mxu0 0.0
      %1753 = vmatprep.subr.mxu0 0.0
      %1754 = vmatpush1.msra.mxu0 0.0
      %1755 = vmatprep.subr.mxu0 0.0
      %1756 = vmatpush1.msra.mxu0 0.0
      %1757 = vmatprep.subr.mxu0 0.0
      %1758 = vmatpush1.msra.mxu0 0.0
      %1759 = vmatprep.subr.mxu0 0.0
      %1760 = vmatpush1.msra.mxu0 0.0
      %1761 = vmatprep.subr.mxu0 0.0
      %1762 = vmatpush1.msra.mxu0 0.0
      %1763 = vmatprep.subr.mxu0 0.0
      %1764 = vmatpush1.msra.mxu0 0.0
      %1765 = vmatprep.subr.mxu0 0.0
      %1766 = vmatpush1.msra.mxu0 0.0
      %1767 = vmatprep.subr.mxu0 0.0
      %1768 = vmatpush1.msra.mxu0 0.0
      %1769 = vmatprep.subr.mxu0 0.0
      %1770 = vmatpush1.msra.mxu0 0.0
      %1771 = vmatprep.subr.mxu0 0.0
      %1772 = vmatpush1.msra.mxu0 0.0
      %1773 = vmatprep.subr.mxu0 0.0
      %1774 = vmatpush1.msra.mxu0 0.0
      %1775 = vmatprep.subr.mxu0 0.0
      %1776 = vmatpush1.msra.mxu0 0.0
      %1777 = vmatprep.subr.mxu0 0.0
      %1778 = vmatpush1.msra.mxu0 0.0
      %1779 = vmatprep.subr.mxu0 0.0
      %1780 = vmatpush1.msra.mxu0 0.0
      %1781 = vmatprep.subr.mxu0 0.0
      %1782 = vmatpush1.msra.mxu0 0.0
      %1783 = vmatprep.subr.mxu0 0.0
      %1784 = vmatpush1.msra.mxu0 0.0
      %1785 = vmatprep.subr.mxu0 0.0
      %1786 = vmatpush1.msra.mxu0 0.0
      %1787 = vmatprep.mubr.f32.mxu0 0.0
      %1788 = vmatmul.mubr.f32.gmra.mrb[0].mxu0 %v1717
      %v1789 = vpop.f32.mrb[0].mxu0
      %v1790 = vadd.f32 0.0, %v1789
      %v1791 = vpop.f32.mrb[0].mxu0
      %v1792 = vadd.f32 0.0, %v1791
      %1793 = vdwg.mxu0
      %v1795 = vsel %vm960, %v1696, 0
      %v1798 = vsel %vm964, %v1705, 0
      %v1801 = vsel %vm964, %v1706, 0
      %1803 = vmatprep.subr.mxu0 %v1801
      %1804 = vmatpush1.msra.mxu0 %v1798
      %1805 = vmatprep.subr.mxu0 0.0
      %1806 = vmatpush1.msra.mxu0 0.0
      %1807 = vmatprep.subr.mxu0 0.0
      %1808 = vmatpush1.msra.mxu0 0.0
      %1809 = vmatprep.subr.mxu0 0.0
      %1810 = vmatpush1.msra.mxu0 0.0
      %1811 = vmatprep.subr.mxu0 0.0
      %1812 = vmatpush1.msra.mxu0 0.0
      %1813 = vmatprep.subr.mxu0 0.0
      %1814 = vmatpush1.msra.mxu0 0.0
      %1815 = vmatprep.subr.mxu0 0.0
      %1816 = vmatpush1.msra.mxu0 0.0
      %1817 = vmatprep.subr.mxu0 0.0
      %1818 = vmatpush1.msra.mxu0 0.0
      %1819 = vmatprep.subr.mxu0 0.0
      %1820 = vmatpush1.msra.mxu0 0.0
      %1821 = vmatprep.subr.mxu0 0.0
      %1822 = vmatpush1.msra.mxu0 0.0
      %1823 = vmatprep.subr.mxu0 0.0
      %1824 = vmatpush1.msra.mxu0 0.0
      %1825 = vmatprep.subr.mxu0 0.0
      %1826 = vmatpush1.msra.mxu0 0.0
      %1827 = vmatprep.subr.mxu0 0.0
      %1828 = vmatpush1.msra.mxu0 0.0
      %1829 = vmatprep.subr.mxu0 0.0
      %1830 = vmatpush1.msra.mxu0 0.0
      %1831 = vmatprep.subr.mxu0 0.0
      %1832 = vmatpush1.msra.mxu0 0.0
      %1833 = vmatprep.subr.mxu0 0.0
      %1834 = vmatpush1.msra.mxu0 0.0
      %1835 = vmatprep.subr.mxu0 0.0
      %1836 = vmatpush1.msra.mxu0 0.0
      %1837 = vmatprep.subr.mxu0 0.0
      %1838 = vmatpush1.msra.mxu0 0.0
      %1839 = vmatprep.subr.mxu0 0.0
      %1840 = vmatpush1.msra.mxu0 0.0
      %1841 = vmatprep.subr.mxu0 0.0
      %1842 = vmatpush1.msra.mxu0 0.0
      %1843 = vmatprep.subr.mxu0 0.0
      %1844 = vmatpush1.msra.mxu0 0.0
      %1845 = vmatprep.subr.mxu0 0.0
      %1846 = vmatpush1.msra.mxu0 0.0
      %1847 = vmatprep.subr.mxu0 0.0
      %1848 = vmatpush1.msra.mxu0 0.0
      %1849 = vmatprep.subr.mxu0 0.0
      %1850 = vmatpush1.msra.mxu0 0.0
      %1851 = vmatprep.subr.mxu0 0.0
      %1852 = vmatpush1.msra.mxu0 0.0
      %1853 = vmatprep.subr.mxu0 0.0
      %1854 = vmatpush1.msra.mxu0 0.0
      %1855 = vmatprep.subr.mxu0 0.0
      %1856 = vmatpush1.msra.mxu0 0.0
      %1857 = vmatprep.subr.mxu0 0.0
      %1858 = vmatpush1.msra.mxu0 0.0
      %1859 = vmatprep.subr.mxu0 0.0
      %1860 = vmatpush1.msra.mxu0 0.0
      %1861 = vmatprep.subr.mxu0 0.0
      %1862 = vmatpush1.msra.mxu0 0.0
      %1863 = vmatprep.subr.mxu0 0.0
      %1864 = vmatpush1.msra.mxu0 0.0
      %1865 = vmatprep.subr.mxu0 0.0
      %1866 = vmatpush1.msra.mxu0 0.0
      %1867 = vmatprep.mubr.f32.mxu0 0.0
      %1868 = vmatmul.mubr.f32.gmra.mrb[0].mxu0 %v1795
      %v1869 = vpop.f32.mrb[0].mxu0
      %v1870 = vadd.f32 %v1790, %v1869
      %v1871 = vpop.f32.mrb[0].mxu0
      %v1872 = vadd.f32 %v1792, %v1871
      %1873 = vdwg.mxu0
      %v1874 = vadd.f32 %v1693, %v1870
      %v1875 = vadd.f32 %v1694, %v1872
      %s1876 = scalar_lea.vmem %s7, 20
      %v1877 = vld [vmem:[%s1876] sm:$0xf]
      %1878 = vrot.lane.b32.xlu0 %v926, 127
      %v1879 = vpop.permute.xlu0 %1878
      %1880 = vrot.lane.b32.xlu0 %v927, 127
      %v1881 = vpop.permute.xlu0 %1880
      %vm1882 = vcmp.lt.s32.totalorder %v934, 127
      %v1883 = vsel %vm1882, %v1879, %v1881
      %v1884 = vsel %vm1882, %v1881, %v1879
      %v1885 = vlaneseq
      %v1886 = vshrl.u32 %v1885, 7
      %v1887 = vsub.s32 5, %v1886
      %v1888 = vrot.slane %v434, %v1887
      %v1889 = vlaneseq
      %v1890 = vshrl.u32 %v1889, 7
      %v1891 = vsub.s32 5, %v1890
      %v1892 = vrot.slane %v435, %v1891
      %v1893 = vmul.f32 %v1883, %v1888
      %v1894 = vmul.f32 %v1884, %v1892
      %s1895 = scalar_lea.vmem %s8, 20
      %v1896 = vld [vmem:[%s1895] sm:$0xf]
      %1897 = vrot.lane.b32.xlu0 %v432, 127
      %v1898 = vpop.permute.xlu0 %1897
      %1899 = vrot.lane.b32.xlu0 %v950, 127
      %v1900 = vpop.permute.xlu0 %1899
      %v1901 = vsel %vm1882, %v1898, %v1900
      %v1902 = vsel %vm1882, %v1900, %v1898
      %v1903 = vmul.f32 %v1901, %v1888
      %v1904 = vmul.f32 %v1902, %v1892
      %v1906 = vsel %vm960, %v1896, 0
      %v1909 = vsel %vm964, %v1903, 0
      %v1912 = vsel %vm964, %v1904, 0
      %1914 = vmatprep.subr.mxu0 %v1912
      %1915 = vmatpush1.msra.mxu0 %v1909
      %1916 = vmatprep.subr.mxu0 0.0
      %1917 = vmatpush1.msra.mxu0 0.0
      %1918 = vmatprep.subr.mxu0 0.0
      %1919 = vmatpush1.msra.mxu0 0.0
      %1920 = vmatprep.subr.mxu0 0.0
      %1921 = vmatpush1.msra.mxu0 0.0
      %1922 = vmatprep.subr.mxu0 0.0
      %1923 = vmatpush1.msra.mxu0 0.0
      %1924 = vmatprep.subr.mxu0 0.0
      %1925 = vmatpush1.msra.mxu0 0.0
      %1926 = vmatprep.subr.mxu0 0.0
      %1927 = vmatpush1.msra.mxu0 0.0
      %1928 = vmatprep.subr.mxu0 0.0
      %1929 = vmatpush1.msra.mxu0 0.0
      %1930 = vmatprep.subr.mxu0 0.0
      %1931 = vmatpush1.msra.mxu0 0.0
      %1932 = vmatprep.subr.mxu0 0.0
      %1933 = vmatpush1.msra.mxu0 0.0
      %1934 = vmatprep.subr.mxu0 0.0
      %1935 = vmatpush1.msra.mxu0 0.0
      %1936 = vmatprep.subr.mxu0 0.0
      %1937 = vmatpush1.msra.mxu0 0.0
      %1938 = vmatprep.subr.mxu0 0.0
      %1939 = vmatpush1.msra.mxu0 0.0
      %1940 = vmatprep.subr.mxu0 0.0
      %1941 = vmatpush1.msra.mxu0 0.0
      %1942 = vmatprep.subr.mxu0 0.0
      %1943 = vmatpush1.msra.mxu0 0.0
      %1944 = vmatprep.subr.mxu0 0.0
      %1945 = vmatpush1.msra.mxu0 0.0
      %1946 = vmatprep.subr.mxu0 0.0
      %1947 = vmatpush1.msra.mxu0 0.0
      %1948 = vmatprep.subr.mxu0 0.0
      %1949 = vmatpush1.msra.mxu0 0.0
      %1950 = vmatprep.subr.mxu0 0.0
      %1951 = vmatpush1.msra.mxu0 0.0
      %1952 = vmatprep.subr.mxu0 0.0
      %1953 = vmatpush1.msra.mxu0 0.0
      %1954 = vmatprep.subr.mxu0 0.0
      %1955 = vmatpush1.msra.mxu0 0.0
      %1956 = vmatprep.subr.mxu0 0.0
      %1957 = vmatpush1.msra.mxu0 0.0
      %1958 = vmatprep.subr.mxu0 0.0
      %1959 = vmatpush1.msra.mxu0 0.0
      %1960 = vmatprep.subr.mxu0 0.0
      %1961 = vmatpush1.msra.mxu0 0.0
      %1962 = vmatprep.subr.mxu0 0.0
      %1963 = vmatpush1.msra.mxu0 0.0
      %1964 = vmatprep.subr.mxu0 0.0
      %1965 = vmatpush1.msra.mxu0 0.0
      %1966 = vmatprep.subr.mxu0 0.0
      %1967 = vmatpush1.msra.mxu0 0.0
      %1968 = vmatprep.subr.mxu0 0.0
      %1969 = vmatpush1.msra.mxu0 0.0
      %1970 = vmatprep.subr.mxu0 0.0
      %1971 = vmatpush1.msra.mxu0 0.0
      %1972 = vmatprep.subr.mxu0 0.0
      %1973 = vmatpush1.msra.mxu0 0.0
      %1974 = vmatprep.subr.mxu0 0.0
      %1975 = vmatpush1.msra.mxu0 0.0
      %1976 = vmatprep.subr.mxu0 0.0
      %1977 = vmatpush1.msra.mxu0 0.0
      %1978 = vmatprep.mubr.f32.mxu0 0.0
      %1979 = vmatmul.mubr.f32.gmra.mrb[0].mxu0 %v1906
      %v1980 = vpop.f32.mrb[0].mxu0
      %v1981 = vadd.f32 0.0, %v1980
      %v1982 = vpop.f32.mrb[0].mxu0
      %v1983 = vadd.f32 0.0, %v1982
      %1984 = vdwg.mxu0
      %v1986 = vsel %vm960, %v1877, 0
      %v1989 = vsel %vm964, %v1893, 0
      %v1992 = vsel %vm964, %v1894, 0
      %1994 = vmatprep.subr.mxu0 %v1992
      %1995 = vmatpush1.msra.mxu0 %v1989
      %1996 = vmatprep.subr.mxu0 0.0
      %1997 = vmatpush1.msra.mxu0 0.0
      %1998 = vmatprep.subr.mxu0 0.0
      %1999 = vmatpush1.msra.mxu0 0.0
      %2000 = vmatprep.subr.mxu0 0.0
      %2001 = vmatpush1.msra.mxu0 0.0
      %2002 = vmatprep.subr.mxu0 0.0
      %2003 = vmatpush1.msra.mxu0 0.0
      %2004 = vmatprep.subr.mxu0 0.0
      %2005 = vmatpush1.msra.mxu0 0.0
      %2006 = vmatprep.subr.mxu0 0.0
      %2007 = vmatpush1.msra.mxu0 0.0
      %2008 = vmatprep.subr.mxu0 0.0
      %2009 = vmatpush1.msra.mxu0 0.0
      %2010 = vmatprep.subr.mxu0 0.0
      %2011 = vmatpush1.msra.mxu0 0.0
      %2012 = vmatprep.subr.mxu0 0.0
      %2013 = vmatpush1.msra.mxu0 0.0
      %2014 = vmatprep.subr.mxu0 0.0
      %2015 = vmatpush1.msra.mxu0 0.0
      %2016 = vmatprep.subr.mxu0 0.0
      %2017 = vmatpush1.msra.mxu0 0.0
      %2018 = vmatprep.subr.mxu0 0.0
      %2019 = vmatpush1.msra.mxu0 0.0
      %2020 = vmatprep.subr.mxu0 0.0
      %2021 = vmatpush1.msra.mxu0 0.0
      %2022 = vmatprep.subr.mxu0 0.0
      %2023 = vmatpush1.msra.mxu0 0.0
      %2024 = vmatprep.subr.mxu0 0.0
      %2025 = vmatpush1.msra.mxu0 0.0
      %2026 = vmatprep.subr.mxu0 0.0
      %2027 = vmatpush1.msra.mxu0 0.0
      %2028 = vmatprep.subr.mxu0 0.0
      %2029 = vmatpush1.msra.mxu0 0.0
      %2030 = vmatprep.subr.mxu0 0.0
      %2031 = vmatpush1.msra.mxu0 0.0
      %2032 = vmatprep.subr.mxu0 0.0
      %2033 = vmatpush1.msra.mxu0 0.0
      %2034 = vmatprep.subr.mxu0 0.0
      %2035 = vmatpush1.msra.mxu0 0.0
      %2036 = vmatprep.subr.mxu0 0.0
      %2037 = vmatpush1.msra.mxu0 0.0
      %2038 = vmatprep.subr.mxu0 0.0
      %2039 = vmatpush1.msra.mxu0 0.0
      %2040 = vmatprep.subr.mxu0 0.0
      %2041 = vmatpush1.msra.mxu0 0.0
      %2042 = vmatprep.subr.mxu0 0.0
      %2043 = vmatpush1.msra.mxu0 0.0
      %2044 = vmatprep.subr.mxu0 0.0
      %2045 = vmatpush1.msra.mxu0 0.0
      %2046 = vmatprep.subr.mxu0 0.0
      %2047 = vmatpush1.msra.mxu0 0.0
      %2048 = vmatprep.subr.mxu0 0.0
      %2049 = vmatpush1.msra.mxu0 0.0
      %2050 = vmatprep.subr.mxu0 0.0
      %2051 = vmatpush1.msra.mxu0 0.0
      %2052 = vmatprep.subr.mxu0 0.0
      %2053 = vmatpush1.msra.mxu0 0.0
      %2054 = vmatprep.subr.mxu0 0.0
      %2055 = vmatpush1.msra.mxu0 0.0
      %2056 = vmatprep.subr.mxu0 0.0
      %2057 = vmatpush1.msra.mxu0 0.0
      %2058 = vmatprep.mubr.f32.mxu0 0.0
      %2059 = vmatmul.mubr.f32.gmra.mrb[0].mxu0 %v1986
      %v2060 = vpop.f32.mrb[0].mxu0
      %v2061 = vadd.f32 %v1981, %v2060
      %v2062 = vpop.f32.mrb[0].mxu0
      %v2063 = vadd.f32 %v1983, %v2062
      %2064 = vdwg.mxu0
      %v2065 = vadd.f32 %v1874, %v2061
      %v2066 = vadd.f32 %v1875, %v2063
      %s2067 = scalar_lea.vmem %s7, 24
      %v2068 = vld [vmem:[%s2067] sm:$0xf]
      %2069 = vrot.lane.b32.xlu0 %v926, 113
      %v2070 = vpop.permute.xlu0 %2069
      %2071 = vrot.lane.b32.xlu0 %v927, 113
      %v2072 = vpop.permute.xlu0 %2071
      %vm2073 = vcmp.lt.s32.totalorder %v934, 113
      %v2074 = vsel %vm2073, %v2070, %v2072
      %v2075 = vsel %vm2073, %v2072, %v2070
      %v2076 = vlaneseq
      %v2077 = vshrl.u32 %v2076, 7
      %v2078 = vsub.s32 6, %v2077
      %v2079 = vrot.slane %v434, %v2078
      %v2080 = vlaneseq
      %v2081 = vshrl.u32 %v2080, 7
      %v2082 = vsub.s32 6, %v2081
      %v2083 = vrot.slane %v435, %v2082
      %v2084 = vmul.f32 %v2074, %v2079
      %v2085 = vmul.f32 %v2075, %v2083
      %s2086 = scalar_lea.vmem %s8, 24
      %v2087 = vld [vmem:[%s2086] sm:$0xf]
      %2088 = vrot.lane.b32.xlu0 %v432, 113
      %v2089 = vpop.permute.xlu0 %2088
      %2090 = vrot.lane.b32.xlu0 %v950, 113
      %v2091 = vpop.permute.xlu0 %2090
      %v2092 = vsel %vm2073, %v2089, %v2091
      %v2093 = vsel %vm2073, %v2091, %v2089
      %v2094 = vmul.f32 %v2092, %v2079
      %v2095 = vmul.f32 %v2093, %v2083
      %v2097 = vsel %vm960, %v2087, 0
      %v2100 = vsel %vm964, %v2094, 0
      %v2103 = vsel %vm964, %v2095, 0
      %2105 = vmatprep.subr.mxu0 %v2103
      %2106 = vmatpush1.msra.mxu0 %v2100
      %2107 = vmatprep.subr.mxu0 0.0
      %2108 = vmatpush1.msra.mxu0 0.0
      %2109 = vmatprep.subr.mxu0 0.0
      %2110 = vmatpush1.msra.mxu0 0.0
      %2111 = vmatprep.subr.mxu0 0.0
      %2112 = vmatpush1.msra.mxu0 0.0
      %2113 = vmatprep.subr.mxu0 0.0
      %2114 = vmatpush1.msra.mxu0 0.0
      %2115 = vmatprep.subr.mxu0 0.0
      %2116 = vmatpush1.msra.mxu0 0.0
      %2117 = vmatprep.subr.mxu0 0.0
      %2118 = vmatpush1.msra.mxu0 0.0
      %2119 = vmatprep.subr.mxu0 0.0
      %2120 = vmatpush1.msra.mxu0 0.0
      %2121 = vmatprep.subr.mxu0 0.0
      %2122 = vmatpush1.msra.mxu0 0.0
      %2123 = vmatprep.subr.mxu0 0.0
      %2124 = vmatpush1.msra.mxu0 0.0
      %2125 = vmatprep.subr.mxu0 0.0
      %2126 = vmatpush1.msra.mxu0 0.0
      %2127 = vmatprep.subr.mxu0 0.0
      %2128 = vmatpush1.msra.mxu0 0.0
      %2129 = vmatprep.subr.mxu0 0.0
      %2130 = vmatpush1.msra.mxu0 0.0
      %2131 = vmatprep.subr.mxu0 0.0
      %2132 = vmatpush1.msra.mxu0 0.0
      %2133 = vmatprep.subr.mxu0 0.0
      %2134 = vmatpush1.msra.mxu0 0.0
      %2135 = vmatprep.subr.mxu0 0.0
      %2136 = vmatpush1.msra.mxu0 0.0
      %2137 = vmatprep.subr.mxu0 0.0
      %2138 = vmatpush1.msra.mxu0 0.0
      %2139 = vmatprep.subr.mxu0 0.0
      %2140 = vmatpush1.msra.mxu0 0.0
      %2141 = vmatprep.subr.mxu0 0.0
      %2142 = vmatpush1.msra.mxu0 0.0
      %2143 = vmatprep.subr.mxu0 0.0
      %2144 = vmatpush1.msra.mxu0 0.0
      %2145 = vmatprep.subr.mxu0 0.0
      %2146 = vmatpush1.msra.mxu0 0.0
      %2147 = vmatprep.subr.mxu0 0.0
      %2148 = vmatpush1.msra.mxu0 0.0
      %2149 = vmatprep.subr.mxu0 0.0
      %2150 = vmatpush1.msra.mxu0 0.0
      %2151 = vmatprep.subr.mxu0 0.0
      %2152 = vmatpush1.msra.mxu0 0.0
      %2153 = vmatprep.subr.mxu0 0.0
      %2154 = vmatpush1.msra.mxu0 0.0
      %2155 = vmatprep.subr.mxu0 0.0
      %2156 = vmatpush1.msra.mxu0 0.0
      %2157 = vmatprep.subr.mxu0 0.0
      %2158 = vmatpush1.msra.mxu0 0.0
      %2159 = vmatprep.subr.mxu0 0.0
      %2160 = vmatpush1.msra.mxu0 0.0
      %2161 = vmatprep.subr.mxu0 0.0
      %2162 = vmatpush1.msra.mxu0 0.0
      %2163 = vmatprep.subr.mxu0 0.0
      %2164 = vmatpush1.msra.mxu0 0.0
      %2165 = vmatprep.subr.mxu0 0.0
      %2166 = vmatpush1.msra.mxu0 0.0
      %2167 = vmatprep.subr.mxu0 0.0
      %2168 = vmatpush1.msra.mxu0 0.0
      %2169 = vmatprep.mubr.f32.mxu0 0.0
      %2170 = vmatmul.mubr.f32.gmra.mrb[0].mxu0 %v2097
      %v2171 = vpop.f32.mrb[0].mxu0
      %v2172 = vadd.f32 0.0, %v2171
      %v2173 = vpop.f32.mrb[0].mxu0
      %v2174 = vadd.f32 0.0, %v2173
      %2175 = vdwg.mxu0
      %v2177 = vsel %vm960, %v2068, 0
      %v2180 = vsel %vm964, %v2084, 0
      %v2183 = vsel %vm964, %v2085, 0
      %2185 = vmatprep.subr.mxu0 %v2183
      %2186 = vmatpush1.msra.mxu0 %v2180
      %2187 = vmatprep.subr.mxu0 0.0
      %2188 = vmatpush1.msra.mxu0 0.0
      %2189 = vmatprep.subr.mxu0 0.0
      %2190 = vmatpush1.msra.mxu0 0.0
      %2191 = vmatprep.subr.mxu0 0.0
      %2192 = vmatpush1.msra.mxu0 0.0
      %2193 = vmatprep.subr.mxu0 0.0
      %2194 = vmatpush1.msra.mxu0 0.0
      %2195 = vmatprep.subr.mxu0 0.0
      %2196 = vmatpush1.msra.mxu0 0.0
      %2197 = vmatprep.subr.mxu0 0.0
      %2198 = vmatpush1.msra.mxu0 0.0
      %2199 = vmatprep.subr.mxu0 0.0
      %2200 = vmatpush1.msra.mxu0 0.0
      %2201 = vmatprep.subr.mxu0 0.0
      %2202 = vmatpush1.msra.mxu0 0.0
      %2203 = vmatprep.subr.mxu0 0.0
      %2204 = vmatpush1.msra.mxu0 0.0
      %2205 = vmatprep.subr.mxu0 0.0
      %2206 = vmatpush1.msra.mxu0 0.0
      %2207 = vmatprep.subr.mxu0 0.0
      %2208 = vmatpush1.msra.mxu0 0.0
      %2209 = vmatprep.subr.mxu0 0.0
      %2210 = vmatpush1.msra.mxu0 0.0
      %2211 = vmatprep.subr.mxu0 0.0
      %2212 = vmatpush1.msra.mxu0 0.0
      %2213 = vmatprep.subr.mxu0 0.0
      %2214 = vmatpush1.msra.mxu0 0.0
      %2215 = vmatprep.subr.mxu0 0.0
      %2216 = vmatpush1.msra.mxu0 0.0
      %2217 = vmatprep.subr.mxu0 0.0
      %2218 = vmatpush1.msra.mxu0 0.0
      %2219 = vmatprep.subr.mxu0 0.0
      %2220 = vmatpush1.msra.mxu0 0.0
      %2221 = vmatprep.subr.mxu0 0.0
      %2222 = vmatpush1.msra.mxu0 0.0
      %2223 = vmatprep.subr.mxu0 0.0
      %2224 = vmatpush1.msra.mxu0 0.0
      %2225 = vmatprep.subr.mxu0 0.0
      %2226 = vmatpush1.msra.mxu0 0.0
      %2227 = vmatprep.subr.mxu0 0.0
      %2228 = vmatpush1.msra.mxu0 0.0
      %2229 = vmatprep.subr.mxu0 0.0
      %2230 = vmatpush1.msra.mxu0 0.0
      %2231 = vmatprep.subr.mxu0 0.0
      %2232 = vmatpush1.msra.mxu0 0.0
      %2233 = vmatprep.subr.mxu0 0.0
      %2234 = vmatpush1.msra.mxu0 0.0
      %2235 = vmatprep.subr.mxu0 0.0
      %2236 = vmatpush1.msra.mxu0 0.0
      %2237 = vmatprep.subr.mxu0 0.0
      %2238 = vmatpush1.msra.mxu0 0.0
      %2239 = vmatprep.subr.mxu0 0.0
      %2240 = vmatpush1.msra.mxu0 0.0
      %2241 = vmatprep.subr.mxu0 0.0
      %2242 = vmatpush1.msra.mxu0 0.0
      %2243 = vmatprep.subr.mxu0 0.0
      %2244 = vmatpush1.msra.mxu0 0.0
      %2245 = vmatprep.subr.mxu0 0.0
      %2246 = vmatpush1.msra.mxu0 0.0
      %2247 = vmatprep.subr.mxu0 0.0
      %2248 = vmatpush1.msra.mxu0 0.0
      %2249 = vmatprep.mubr.f32.mxu0 0.0
      %2250 = vmatmul.mubr.f32.gmra.mrb[0].mxu0 %v2177
      %v2251 = vpop.f32.mrb[0].mxu0
      %v2252 = vadd.f32 %v2172, %v2251
      %v2253 = vpop.f32.mrb[0].mxu0
      %v2254 = vadd.f32 %v2174, %v2253
      %2255 = vdwg.mxu0
      %v2256 = vadd.f32 %v2065, %v2252
      %v2257 = vadd.f32 %v2066, %v2254
      %s2258 = scalar_lea.vmem %s7, 28
      %v2259 = vld [vmem:[%s2258] sm:$0xf]
      %2260 = vrot.lane.b32.xlu0 %v926, 112
      %v2261 = vpop.permute.xlu0 %2260
      %2262 = vrot.lane.b32.xlu0 %v927, 112
      %v2263 = vpop.permute.xlu0 %2262
      %vm2264 = vcmp.lt.s32.totalorder %v934, 112
      %v2265 = vsel %vm2264, %v2261, %v2263
      %v2266 = vsel %vm2264, %v2263, %v2261
      %v2267 = vlaneseq
      %v2268 = vshrl.u32 %v2267, 7
      %v2269 = vsub.s32 7, %v2268
      %v2270 = vrot.slane %v434, %v2269
      %v2271 = vlaneseq
      %v2272 = vshrl.u32 %v2271, 7
      %v2273 = vsub.s32 7, %v2272
      %v2274 = vrot.slane %v435, %v2273
      %v2275 = vmul.f32 %v2265, %v2270
      %v2276 = vmul.f32 %v2266, %v2274
      %s2277 = scalar_lea.vmem %s8, 28
      %v2278 = vld [vmem:[%s2277] sm:$0xf]
      %2279 = vrot.lane.b32.xlu0 %v432, 112
      %v2280 = vpop.permute.xlu0 %2279
      %2281 = vrot.lane.b32.xlu0 %v950, 112
      %v2282 = vpop.permute.xlu0 %2281
      %v2283 = vsel %vm2264, %v2280, %v2282
      %v2284 = vsel %vm2264, %v2282, %v2280
      %v2285 = vmul.f32 %v2283, %v2270
      %v2286 = vmul.f32 %v2284, %v2274
      %v2288 = vsel %vm960, %v2278, 0
      %v2291 = vsel %vm964, %v2285, 0
      %v2294 = vsel %vm964, %v2286, 0
      %2296 = vmatprep.subr.mxu0 %v2294
      %2297 = vmatpush1.msra.mxu0 %v2291
      %2298 = vmatprep.subr.mxu0 0.0
      %2299 = vmatpush1.msra.mxu0 0.0
      %2300 = vmatprep.subr.mxu0 0.0
      %2301 = vmatpush1.msra.mxu0 0.0
      %2302 = vmatprep.subr.mxu0 0.0
      %2303 = vmatpush1.msra.mxu0 0.0
      %2304 = vmatprep.subr.mxu0 0.0
      %2305 = vmatpush1.msra.mxu0 0.0
      %2306 = vmatprep.subr.mxu0 0.0
      %2307 = vmatpush1.msra.mxu0 0.0
      %2308 = vmatprep.subr.mxu0 0.0
      %2309 = vmatpush1.msra.mxu0 0.0
      %2310 = vmatprep.subr.mxu0 0.0
      %2311 = vmatpush1.msra.mxu0 0.0
      %2312 = vmatprep.subr.mxu0 0.0
      %2313 = vmatpush1.msra.mxu0 0.0
      %2314 = vmatprep.subr.mxu0 0.0
      %2315 = vmatpush1.msra.mxu0 0.0
      %2316 = vmatprep.subr.mxu0 0.0
      %2317 = vmatpush1.msra.mxu0 0.0
      %2318 = vmatprep.subr.mxu0 0.0
      %2319 = vmatpush1.msra.mxu0 0.0
      %2320 = vmatprep.subr.mxu0 0.0
      %2321 = vmatpush1.msra.mxu0 0.0
      %2322 = vmatprep.subr.mxu0 0.0
      %2323 = vmatpush1.msra.mxu0 0.0
      %2324 = vmatprep.subr.mxu0 0.0
      %2325 = vmatpush1.msra.mxu0 0.0
      %2326 = vmatprep.subr.mxu0 0.0
      %2327 = vmatpush1.msra.mxu0 0.0
      %2328 = vmatprep.subr.mxu0 0.0
      %2329 = vmatpush1.msra.mxu0 0.0
      %2330 = vmatprep.subr.mxu0 0.0
      %2331 = vmatpush1.msra.mxu0 0.0
      %2332 = vmatprep.subr.mxu0 0.0
      %2333 = vmatpush1.msra.mxu0 0.0
      %2334 = vmatprep.subr.mxu0 0.0
      %2335 = vmatpush1.msra.mxu0 0.0
      %2336 = vmatprep.subr.mxu0 0.0
      %2337 = vmatpush1.msra.mxu0 0.0
      %2338 = vmatprep.subr.mxu0 0.0
      %2339 = vmatpush1.msra.mxu0 0.0
      %2340 = vmatprep.subr.mxu0 0.0
      %2341 = vmatpush1.msra.mxu0 0.0
      %2342 = vmatprep.subr.mxu0 0.0
      %2343 = vmatpush1.msra.mxu0 0.0
      %2344 = vmatprep.subr.mxu0 0.0
      %2345 = vmatpush1.msra.mxu0 0.0
      %2346 = vmatprep.subr.mxu0 0.0
      %2347 = vmatpush1.msra.mxu0 0.0
      %2348 = vmatprep.subr.mxu0 0.0
      %2349 = vmatpush1.msra.mxu0 0.0
      %2350 = vmatprep.subr.mxu0 0.0
      %2351 = vmatpush1.msra.mxu0 0.0
      %2352 = vmatprep.subr.mxu0 0.0
      %2353 = vmatpush1.msra.mxu0 0.0
      %2354 = vmatprep.subr.mxu0 0.0
      %2355 = vmatpush1.msra.mxu0 0.0
      %2356 = vmatprep.subr.mxu0 0.0
      %2357 = vmatpush1.msra.mxu0 0.0
      %2358 = vmatprep.subr.mxu0 0.0
      %2359 = vmatpush1.msra.mxu0 0.0
      %2360 = vmatprep.mubr.f32.mxu0 0.0
      %2361 = vmatmul.mubr.f32.gmra.mrb[0].mxu0 %v2288
      %v2362 = vpop.f32.mrb[0].mxu0
      %v2363 = vadd.f32 0.0, %v2362
      %v2364 = vpop.f32.mrb[0].mxu0
      %v2365 = vadd.f32 0.0, %v2364
      %2366 = vdwg.mxu0
      %v2368 = vsel %vm960, %v2259, 0
      %v2371 = vsel %vm964, %v2275, 0
      %v2374 = vsel %vm964, %v2276, 0
      %2376 = vmatprep.subr.mxu0 %v2374
      %2377 = vmatpush1.msra.mxu0 %v2371
      %2378 = vmatprep.subr.mxu0 0.0
      %2379 = vmatpush1.msra.mxu0 0.0
      %2380 = vmatprep.subr.mxu0 0.0
      %2381 = vmatpush1.msra.mxu0 0.0
      %2382 = vmatprep.subr.mxu0 0.0
      %2383 = vmatpush1.msra.mxu0 0.0
      %2384 = vmatprep.subr.mxu0 0.0
      %2385 = vmatpush1.msra.mxu0 0.0
      %2386 = vmatprep.subr.mxu0 0.0
      %2387 = vmatpush1.msra.mxu0 0.0
      %2388 = vmatprep.subr.mxu0 0.0
      %2389 = vmatpush1.msra.mxu0 0.0
      %2390 = vmatprep.subr.mxu0 0.0
      %2391 = vmatpush1.msra.mxu0 0.0
      %2392 = vmatprep.subr.mxu0 0.0
      %2393 = vmatpush1.msra.mxu0 0.0
      %2394 = vmatprep.subr.mxu0 0.0
      %2395 = vmatpush1.msra.mxu0 0.0
      %2396 = vmatprep.subr.mxu0 0.0
      %2397 = vmatpush1.msra.mxu0 0.0
      %2398 = vmatprep.subr.mxu0 0.0
      %2399 = vmatpush1.msra.mxu0 0.0
      %2400 = vmatprep.subr.mxu0 0.0
      %2401 = vmatpush1.msra.mxu0 0.0
      %2402 = vmatprep.subr.mxu0 0.0
      %2403 = vmatpush1.msra.mxu0 0.0
      %2404 = vmatprep.subr.mxu0 0.0
      %2405 = vmatpush1.msra.mxu0 0.0
      %2406 = vmatprep.subr.mxu0 0.0
      %2407 = vmatpush1.msra.mxu0 0.0
      %2408 = vmatprep.subr.mxu0 0.0
      %2409 = vmatpush1.msra.mxu0 0.0
      %2410 = vmatprep.subr.mxu0 0.0
      %2411 = vmatpush1.msra.mxu0 0.0
      %2412 = vmatprep.subr.mxu0 0.0
      %2413 = vmatpush1.msra.mxu0 0.0
      %2414 = vmatprep.subr.mxu0 0.0
      %2415 = vmatpush1.msra.mxu0 0.0
      %2416 = vmatprep.subr.mxu0 0.0
      %2417 = vmatpush1.msra.mxu0 0.0
      %2418 = vmatprep.subr.mxu0 0.0
      %2419 = vmatpush1.msra.mxu0 0.0
      %2420 = vmatprep.subr.mxu0 0.0
      %2421 = vmatpush1.msra.mxu0 0.0
      %2422 = vmatprep.subr.mxu0 0.0
      %2423 = vmatpush1.msra.mxu0 0.0
      %2424 = vmatprep.subr.mxu0 0.0
      %2425 = vmatpush1.msra.mxu0 0.0
      %2426 = vmatprep.subr.mxu0 0.0
      %2427 = vmatpush1.msra.mxu0 0.0
      %2428 = vmatprep.subr.mxu0 0.0
      %2429 = vmatpush1.msra.mxu0 0.0
      %2430 = vmatprep.subr.mxu0 0.0
      %2431 = vmatpush1.msra.mxu0 0.0
      %2432 = vmatprep.subr.mxu0 0.0
      %2433 = vmatpush1.msra.mxu0 0.0
      %2434 = vmatprep.subr.mxu0 0.0
      %2435 = vmatpush1.msra.mxu0 0.0
      %2436 = vmatprep.subr.mxu0 0.0
      %2437 = vmatpush1.msra.mxu0 0.0
      %2438 = vmatprep.subr.mxu0 0.0
      %2439 = vmatpush1.msra.mxu0 0.0
      %2440 = vmatprep.mubr.f32.mxu0 0.0
      %2441 = vmatmul.mubr.f32.gmra.mrb[0].mxu0 %v2368
      %v2442 = vpop.f32.mrb[0].mxu0
      %v2443 = vadd.f32 %v2363, %v2442
      %v2444 = vpop.f32.mrb[0].mxu0
      %v2445 = vadd.f32 %v2365, %v2444
      %2446 = vdwg.mxu0
      %v2447 = vadd.f32 %v2256, %v2443
      %v2448 = vadd.f32 %v2257, %v2445
      %s2449 = scalar_lea.vmem %s7, 32
      %v2450 = vld [vmem:[%s2449] sm:$0xf]
      %2451 = vrot.lane.b32.xlu0 %v926, 111
      %v2452 = vpop.permute.xlu0 %2451
      %2453 = vrot.lane.b32.xlu0 %v927, 111
      %v2454 = vpop.permute.xlu0 %2453
      %vm2455 = vcmp.lt.s32.totalorder %v934, 111
      %v2456 = vsel %vm2455, %v2452, %v2454
      %v2457 = vsel %vm2455, %v2454, %v2452
      %v2458 = vlaneseq
      %v2459 = vshrl.u32 %v2458, 7
      %v2460 = vsub.s32 0, %v2459
      %v2461 = vrot.slane %v436, %v2460
      %v2462 = vlaneseq
      %v2463 = vshrl.u32 %v2462, 7
      %v2464 = vsub.s32 0, %v2463
      %v2465 = vrot.slane %v437, %v2464
      %v2466 = vmul.f32 %v2456, %v2461
      %v2467 = vmul.f32 %v2457, %v2465
      %s2468 = scalar_lea.vmem %s8, 32
      %v2469 = vld [vmem:[%s2468] sm:$0xf]
      %2470 = vrot.lane.b32.xlu0 %v432, 111
      %v2471 = vpop.permute.xlu0 %2470
      %2472 = vrot.lane.b32.xlu0 %v950, 111
      %v2473 = vpop.permute.xlu0 %2472
      %v2474 = vsel %vm2455, %v2471, %v2473
      %v2475 = vsel %vm2455, %v2473, %v2471
      %v2476 = vmul.f32 %v2474, %v2461
      %v2477 = vmul.f32 %v2475, %v2465
      %v2479 = vsel %vm960, %v2469, 0
      %v2482 = vsel %vm964, %v2476, 0
      %v2485 = vsel %vm964, %v2477, 0
      %2487 = vmatprep.subr.mxu0 %v2485
      %2488 = vmatpush1.msra.mxu0 %v2482
      %2489 = vmatprep.subr.mxu0 0.0
      %2490 = vmatpush1.msra.mxu0 0.0
      %2491 = vmatprep.subr.mxu0 0.0
      %2492 = vmatpush1.msra.mxu0 0.0
      %2493 = vmatprep.subr.mxu0 0.0
      %2494 = vmatpush1.msra.mxu0 0.0
      %2495 = vmatprep.subr.mxu0 0.0
      %2496 = vmatpush1.msra.mxu0 0.0
      %2497 = vmatprep.subr.mxu0 0.0
      %2498 = vmatpush1.msra.mxu0 0.0
      %2499 = vmatprep.subr.mxu0 0.0
      %2500 = vmatpush1.msra.mxu0 0.0
      %2501 = vmatprep.subr.mxu0 0.0
      %2502 = vmatpush1.msra.mxu0 0.0
      %2503 = vmatprep.subr.mxu0 0.0
      %2504 = vmatpush1.msra.mxu0 0.0
      %2505 = vmatprep.subr.mxu0 0.0
      %2506 = vmatpush1.msra.mxu0 0.0
      %2507 = vmatprep.subr.mxu0 0.0
      %2508 = vmatpush1.msra.mxu0 0.0
      %2509 = vmatprep.subr.mxu0 0.0
      %2510 = vmatpush1.msra.mxu0 0.0
      %2511 = vmatprep.subr.mxu0 0.0
      %2512 = vmatpush1.msra.mxu0 0.0
      %2513 = vmatprep.subr.mxu0 0.0
      %2514 = vmatpush1.msra.mxu0 0.0
      %2515 = vmatprep.subr.mxu0 0.0
      %2516 = vmatpush1.msra.mxu0 0.0
      %2517 = vmatprep.subr.mxu0 0.0
      %2518 = vmatpush1.msra.mxu0 0.0
      %2519 = vmatprep.subr.mxu0 0.0
      %2520 = vmatpush1.msra.mxu0 0.0
      %2521 = vmatprep.subr.mxu0 0.0
      %2522 = vmatpush1.msra.mxu0 0.0
      %2523 = vmatprep.subr.mxu0 0.0
      %2524 = vmatpush1.msra.mxu0 0.0
      %2525 = vmatprep.subr.mxu0 0.0
      %2526 = vmatpush1.msra.mxu0 0.0
      %2527 = vmatprep.subr.mxu0 0.0
      %2528 = vmatpush1.msra.mxu0 0.0
      %2529 = vmatprep.subr.mxu0 0.0
      %2530 = vmatpush1.msra.mxu0 0.0
      %2531 = vmatprep.subr.mxu0 0.0
      %2532 = vmatpush1.msra.mxu0 0.0
      %2533 = vmatprep.subr.mxu0 0.0
      %2534 = vmatpush1.msra.mxu0 0.0
      %2535 = vmatprep.subr.mxu0 0.0
      %2536 = vmatpush1.msra.mxu0 0.0
      %2537 = vmatprep.subr.mxu0 0.0
      %2538 = vmatpush1.msra.mxu0 0.0
      %2539 = vmatprep.subr.mxu0 0.0
      %2540 = vmatpush1.msra.mxu0 0.0
      %2541 = vmatprep.subr.mxu0 0.0
      %2542 = vmatpush1.msra.mxu0 0.0
      %2543 = vmatprep.subr.mxu0 0.0
      %2544 = vmatpush1.msra.mxu0 0.0
      %2545 = vmatprep.subr.mxu0 0.0
      %2546 = vmatpush1.msra.mxu0 0.0
      %2547 = vmatprep.subr.mxu0 0.0
      %2548 = vmatpush1.msra.mxu0 0.0
      %2549 = vmatprep.subr.mxu0 0.0
      %2550 = vmatpush1.msra.mxu0 0.0
      %2551 = vmatprep.mubr.f32.mxu0 0.0
      %2552 = vmatmul.mubr.f32.gmra.mrb[0].mxu0 %v2479
      %v2553 = vpop.f32.mrb[0].mxu0
      %v2554 = vadd.f32 0.0, %v2553
      %v2555 = vpop.f32.mrb[0].mxu0
      %v2556 = vadd.f32 0.0, %v2555
      %2557 = vdwg.mxu0
      %v2559 = vsel %vm960, %v2450, 0
      %v2562 = vsel %vm964, %v2466, 0
      %v2565 = vsel %vm964, %v2467, 0
      %2567 = vmatprep.subr.mxu0 %v2565
      %2568 = vmatpush1.msra.mxu0 %v2562
      %2569 = vmatprep.subr.mxu0 0.0
      %2570 = vmatpush1.msra.mxu0 0.0
      %2571 = vmatprep.subr.mxu0 0.0
      %2572 = vmatpush1.msra.mxu0 0.0
      %2573 = vmatprep.subr.mxu0 0.0
      %2574 = vmatpush1.msra.mxu0 0.0
      %2575 = vmatprep.subr.mxu0 0.0
      %2576 = vmatpush1.msra.mxu0 0.0
      %2577 = vmatprep.subr.mxu0 0.0
      %2578 = vmatpush1.msra.mxu0 0.0
      %2579 = vmatprep.subr.mxu0 0.0
      %2580 = vmatpush1.msra.mxu0 0.0
      %2581 = vmatprep.subr.mxu0 0.0
      %2582 = vmatpush1.msra.mxu0 0.0
      %2583 = vmatprep.subr.mxu0 0.0
      %2584 = vmatpush1.msra.mxu0 0.0
      %2585 = vmatprep.subr.mxu0 0.0
      %2586 = vmatpush1.msra.mxu0 0.0
      %2587 = vmatprep.subr.mxu0 0.0
      %2588 = vmatpush1.msra.mxu0 0.0
      %2589 = vmatprep.subr.mxu0 0.0
      %2590 = vmatpush1.msra.mxu0 0.0
      %2591 = vmatprep.subr.mxu0 0.0
      %2592 = vmatpush1.msra.mxu0 0.0
      %2593 = vmatprep.subr.mxu0 0.0
      %2594 = vmatpush1.msra.mxu0 0.0
      %2595 = vmatprep.subr.mxu0 0.0
      %2596 = vmatpush1.msra.mxu0 0.0
      %2597 = vmatprep.subr.mxu0 0.0
      %2598 = vmatpush1.msra.mxu0 0.0
      %2599 = vmatprep.subr.mxu0 0.0
      %2600 = vmatpush1.msra.mxu0 0.0
      %2601 = vmatprep.subr.mxu0 0.0
      %2602 = vmatpush1.msra.mxu0 0.0
      %2603 = vmatprep.subr.mxu0 0.0
      %2604 = vmatpush1.msra.mxu0 0.0
      %2605 = vmatprep.subr.mxu0 0.0
      %2606 = vmatpush1.msra.mxu0 0.0
      %2607 = vmatprep.subr.mxu0 0.0
      %2608 = vmatpush1.msra.mxu0 0.0
      %2609 = vmatprep.subr.mxu0 0.0
      %2610 = vmatpush1.msra.mxu0 0.0
      %2611 = vmatprep.subr.mxu0 0.0
      %2612 = vmatpush1.msra.mxu0 0.0
      %2613 = vmatprep.subr.mxu0 0.0
      %2614 = vmatpush1.msra.mxu0 0.0
      %2615 = vmatprep.subr.mxu0 0.0
      %2616 = vmatpush1.msra.mxu0 0.0
      %2617 = vmatprep.subr.mxu0 0.0
      %2618 = vmatpush1.msra.mxu0 0.0
      %2619 = vmatprep.subr.mxu0 0.0
      %2620 = vmatpush1.msra.mxu0 0.0
      %2621 = vmatprep.subr.mxu0 0.0
      %2622 = vmatpush1.msra.mxu0 0.0
      %2623 = vmatprep.subr.mxu0 0.0
      %2624 = vmatpush1.msra.mxu0 0.0
      %2625 = vmatprep.subr.mxu0 0.0
      %2626 = vmatpush1.msra.mxu0 0.0
      %2627 = vmatprep.subr.mxu0 0.0
      %2628 = vmatpush1.msra.mxu0 0.0
      %2629 = vmatprep.subr.mxu0 0.0
      %2630 = vmatpush1.msra.mxu0 0.0
      %2631 = vmatprep.mubr.f32.mxu0 0.0
      %2632 = vmatmul.mubr.f32.gmra.mrb[0].mxu0 %v2559
      %v2633 = vpop.f32.mrb[0].mxu0
      %v2634 = vadd.f32 %v2554, %v2633
      %v2635 = vpop.f32.mrb[0].mxu0
      %v2636 = vadd.f32 %v2556, %v2635
      %2637 = vdwg.mxu0
      %v2638 = vadd.f32 %v2447, %v2634
      %v2639 = vadd.f32 %v2448, %v2636
      %v2640 = vld [vmem:[%s9] sm:$0xf]
      %2642 = vset.pattern.permute.xlu0 0
      %2643 = vperm.xlu0 %2642, %v2640
      %v2644 = vpop.permute.xlu0 %2643
      %v2646 = vadd.f32 %v2638, %v2644
      %v2647 = vadd.f32 %v2639, %v2644
      %v2648 = vmax.f32 %v2646, 0.0
      %v2649 = vmax.f32 %v2647, 0.0
      %v2650 = vld [vmem:[%s10] sm:$0xf]
      %2651 = vrot.lane.b32.xlu0 %v2648, 17
      %v2652 = vpop.permute.xlu0 %2651
      %2653 = vrot.lane.b32.xlu0 %v2649, 17
      %v2654 = vpop.permute.xlu0 %2653
      %v2655 = vsel %vm935, %v2652, %v2654
      %v2656 = vsel %vm935, %v2654, %v2652
      %v2657 = vmul.f32 %v2656, %v941
      %v2658 = vmul.f32 %v2655, %v945
      %s2659 = scalar_lea.vmem %s10, 4
      %v2660 = vld [vmem:[%s2659] sm:$0xf]
      %2661 = vrot.lane.b32.xlu0 %v2648, 16
      %v2662 = vpop.permute.xlu0 %2661
      %2663 = vrot.lane.b32.xlu0 %v2649, 16
      %v2664 = vpop.permute.xlu0 %2663
      %v2665 = vsel %vm1128, %v2662, %v2664
      %v2666 = vsel %vm1128, %v2664, %v2662
      %v2667 = vmul.f32 %v2666, %v1134
      %v2668 = vmul.f32 %v2665, %v1138
      %v2670 = vsel %vm960, %v2660, 0
      %v2673 = vsel %vm964, %v2667, 0
      %v2676 = vsel %vm964, %v2668, 0
      %2678 = vmatprep.subr.mxu0 %v2676
      %2679 = vmatpush1.msra.mxu0 %v2673
      %2680 = vmatprep.subr.mxu0 0.0
      %2681 = vmatpush1.msra.mxu0 0.0
      %2682 = vmatprep.subr.mxu0 0.0
      %2683 = vmatpush1.msra.mxu0 0.0
      %2684 = vmatprep.subr.mxu0 0.0
      %2685 = vmatpush1.msra.mxu0 0.0
      %2686 = vmatprep.subr.mxu0 0.0
      %2687 = vmatpush1.msra.mxu0 0.0
      %2688 = vmatprep.subr.mxu0 0.0
      %2689 = vmatpush1.msra.mxu0 0.0
      %2690 = vmatprep.subr.mxu0 0.0
      %2691 = vmatpush1.msra.mxu0 0.0
      %2692 = vmatprep.subr.mxu0 0.0
      %2693 = vmatpush1.msra.mxu0 0.0
      %2694 = vmatprep.subr.mxu0 0.0
      %2695 = vmatpush1.msra.mxu0 0.0
      %2696 = vmatprep.subr.mxu0 0.0
      %2697 = vmatpush1.msra.mxu0 0.0
      %2698 = vmatprep.subr.mxu0 0.0
      %2699 = vmatpush1.msra.mxu0 0.0
      %2700 = vmatprep.subr.mxu0 0.0
      %2701 = vmatpush1.msra.mxu0 0.0
      %2702 = vmatprep.subr.mxu0 0.0
      %2703 = vmatpush1.msra.mxu0 0.0
      %2704 = vmatprep.subr.mxu0 0.0
      %2705 = vmatpush1.msra.mxu0 0.0
      %2706 = vmatprep.subr.mxu0 0.0
      %2707 = vmatpush1.msra.mxu0 0.0
      %2708 = vmatprep.subr.mxu0 0.0
      %2709 = vmatpush1.msra.mxu0 0.0
      %2710 = vmatprep.subr.mxu0 0.0
      %2711 = vmatpush1.msra.mxu0 0.0
      %2712 = vmatprep.subr.mxu0 0.0
      %2713 = vmatpush1.msra.mxu0 0.0
      %2714 = vmatprep.subr.mxu0 0.0
      %2715 = vmatpush1.msra.mxu0 0.0
      %2716 = vmatprep.subr.mxu0 0.0
      %2717 = vmatpush1.msra.mxu0 0.0
      %2718 = vmatprep.subr.mxu0 0.0
      %2719 = vmatpush1.msra.mxu0 0.0
      %2720 = vmatprep.subr.mxu0 0.0
      %2721 = vmatpush1.msra.mxu0 0.0
      %2722 = vmatprep.subr.mxu0 0.0
      %2723 = vmatpush1.msra.mxu0 0.0
      %2724 = vmatprep.subr.mxu0 0.0
      %2725 = vmatpush1.msra.mxu0 0.0
      %2726 = vmatprep.subr.mxu0 0.0
      %2727 = vmatpush1.msra.mxu0 0.0
      %2728 = vmatprep.subr.mxu0 0.0
      %2729 = vmatpush1.msra.mxu0 0.0
      %2730 = vmatprep.subr.mxu0 0.0
      %2731 = vmatpush1.msra.mxu0 0.0
      %2732 = vmatprep.subr.mxu0 0.0
      %2733 = vmatpush1.msra.mxu0 0.0
      %2734 = vmatprep.subr.mxu0 0.0
      %2735 = vmatpush1.msra.mxu0 0.0
      %2736 = vmatprep.subr.mxu0 0.0
      %2737 = vmatpush1.msra.mxu0 0.0
      %2738 = vmatprep.subr.mxu0 0.0
      %2739 = vmatpush1.msra.mxu0 0.0
      %2740 = vmatprep.subr.mxu0 0.0
      %2741 = vmatpush1.msra.mxu0 0.0
      %2742 = vmatprep.mubr.f32.mxu0 0.0
      %2743 = vmatmul.mubr.f32.gmra.mrb[0].mxu0 %v2670
      %v2744 = vpop.f32.mrb[0].mxu0
      %v2745 = vadd.f32 0.0, %v2744
      %v2746 = vpop.f32.mrb[0].mxu0
      %v2747 = vadd.f32 0.0, %v2746
      %2748 = vdwg.mxu0
      %v2750 = vsel %vm960, %v2650, 0
      %v2753 = vsel %vm964, %v2657, 0
      %v2756 = vsel %vm964, %v2658, 0
      %2758 = vmatprep.subr.mxu0 %v2756
      %2759 = vmatpush1.msra.mxu0 %v2753
      %2760 = vmatprep.subr.mxu0 0.0
      %2761 = vmatpush1.msra.mxu0 0.0
      %2762 = vmatprep.subr.mxu0 0.0
      %2763 = vmatpush1.msra.mxu0 0.0
      %2764 = vmatprep.subr.mxu0 0.0
      %2765 = vmatpush1.msra.mxu0 0.0
      %2766 = vmatprep.subr.mxu0 0.0
      %2767 = vmatpush1.msra.mxu0 0.0
      %2768 = vmatprep.subr.mxu0 0.0
      %2769 = vmatpush1.msra.mxu0 0.0
      %2770 = vmatprep.subr.mxu0 0.0
      %2771 = vmatpush1.msra.mxu0 0.0
      %2772 = vmatprep.subr.mxu0 0.0
      %2773 = vmatpush1.msra.mxu0 0.0
      %2774 = vmatprep.subr.mxu0 0.0
      %2775 = vmatpush1.msra.mxu0 0.0
      %2776 = vmatprep.subr.mxu0 0.0
      %2777 = vmatpush1.msra.mxu0 0.0
      %2778 = vmatprep.subr.mxu0 0.0
      %2779 = vmatpush1.msra.mxu0 0.0
      %2780 = vmatprep.subr.mxu0 0.0
      %2781 = vmatpush1.msra.mxu0 0.0
      %2782 = vmatprep.subr.mxu0 0.0
      %2783 = vmatpush1.msra.mxu0 0.0
      %2784 = vmatprep.subr.mxu0 0.0
      %2785 = vmatpush1.msra.mxu0 0.0
      %2786 = vmatprep.subr.mxu0 0.0
      %2787 = vmatpush1.msra.mxu0 0.0
      %2788 = vmatprep.subr.mxu0 0.0
      %2789 = vmatpush1.msra.mxu0 0.0
      %2790 = vmatprep.subr.mxu0 0.0
      %2791 = vmatpush1.msra.mxu0 0.0
      %2792 = vmatprep.subr.mxu0 0.0
      %2793 = vmatpush1.msra.mxu0 0.0
      %2794 = vmatprep.subr.mxu0 0.0
      %2795 = vmatpush1.msra.mxu0 0.0
      %2796 = vmatprep.subr.mxu0 0.0
      %2797 = vmatpush1.msra.mxu0 0.0
      %2798 = vmatprep.subr.mxu0 0.0
      %2799 = vmatpush1.msra.mxu0 0.0
      %2800 = vmatprep.subr.mxu0 0.0
      %2801 = vmatpush1.msra.mxu0 0.0
      %2802 = vmatprep.subr.mxu0 0.0
      %2803 = vmatpush1.msra.mxu0 0.0
      %2804 = vmatprep.subr.mxu0 0.0
      %2805 = vmatpush1.msra.mxu0 0.0
      %2806 = vmatprep.subr.mxu0 0.0
      %2807 = vmatpush1.msra.mxu0 0.0
      %2808 = vmatprep.subr.mxu0 0.0
      %2809 = vmatpush1.msra.mxu0 0.0
      %2810 = vmatprep.subr.mxu0 0.0
      %2811 = vmatpush1.msra.mxu0 0.0
      %2812 = vmatprep.subr.mxu0 0.0
      %2813 = vmatpush1.msra.mxu0 0.0
      %2814 = vmatprep.subr.mxu0 0.0
      %2815 = vmatpush1.msra.mxu0 0.0
      %2816 = vmatprep.subr.mxu0 0.0
      %2817 = vmatpush1.msra.mxu0 0.0
      %2818 = vmatprep.subr.mxu0 0.0
      %2819 = vmatpush1.msra.mxu0 0.0
      %2820 = vmatprep.subr.mxu0 0.0
      %2821 = vmatpush1.msra.mxu0 0.0
      %2822 = vmatprep.mubr.f32.mxu0 0.0
      %2823 = vmatmul.mubr.f32.gmra.mrb[0].mxu0 %v2750
      %v2824 = vpop.f32.mrb[0].mxu0
      %v2825 = vadd.f32 %v2745, %v2824
      %v2826 = vpop.f32.mrb[0].mxu0
      %v2827 = vadd.f32 %v2747, %v2826
      %2828 = vdwg.mxu0
      %s2829 = scalar_lea.vmem %s10, 8
      %v2830 = vld [vmem:[%s2829] sm:$0xf]
      %2831 = vrot.lane.b32.xlu0 %v2648, 15
      %v2832 = vpop.permute.xlu0 %2831
      %2833 = vrot.lane.b32.xlu0 %v2649, 15
      %v2834 = vpop.permute.xlu0 %2833
      %v2835 = vsel %vm1319, %v2832, %v2834
      %v2836 = vsel %vm1319, %v2834, %v2832
      %v2837 = vmul.f32 %v2836, %v1325
      %v2838 = vmul.f32 %v2835, %v1329
      %v2840 = vsel %vm960, %v2830, 0
      %v2843 = vsel %vm964, %v2837, 0
      %v2846 = vsel %vm964, %v2838, 0
      %2848 = vmatprep.subr.mxu0 %v2846
      %2849 = vmatpush1.msra.mxu0 %v2843
      %2850 = vmatprep.subr.mxu0 0.0
      %2851 = vmatpush1.msra.mxu0 0.0
      %2852 = vmatprep.subr.mxu0 0.0
      %2853 = vmatpush1.msra.mxu0 0.0
      %2854 = vmatprep.subr.mxu0 0.0
      %2855 = vmatpush1.msra.mxu0 0.0
      %2856 = vmatprep.subr.mxu0 0.0
      %2857 = vmatpush1.msra.mxu0 0.0
      %2858 = vmatprep.subr.mxu0 0.0
      %2859 = vmatpush1.msra.mxu0 0.0
      %2860 = vmatprep.subr.mxu0 0.0
      %2861 = vmatpush1.msra.mxu0 0.0
      %2862 = vmatprep.subr.mxu0 0.0
      %2863 = vmatpush1.msra.mxu0 0.0
      %2864 = vmatprep.subr.mxu0 0.0
      %2865 = vmatpush1.msra.mxu0 0.0
      %2866 = vmatprep.subr.mxu0 0.0
      %2867 = vmatpush1.msra.mxu0 0.0
      %2868 = vmatprep.subr.mxu0 0.0
      %2869 = vmatpush1.msra.mxu0 0.0
      %2870 = vmatprep.subr.mxu0 0.0
      %2871 = vmatpush1.msra.mxu0 0.0
      %2872 = vmatprep.subr.mxu0 0.0
      %2873 = vmatpush1.msra.mxu0 0.0
      %2874 = vmatprep.subr.mxu0 0.0
      %2875 = vmatpush1.msra.mxu0 0.0
      %2876 = vmatprep.subr.mxu0 0.0
      %2877 = vmatpush1.msra.mxu0 0.0
      %2878 = vmatprep.subr.mxu0 0.0
      %2879 = vmatpush1.msra.mxu0 0.0
      %2880 = vmatprep.subr.mxu0 0.0
      %2881 = vmatpush1.msra.mxu0 0.0
      %2882 = vmatprep.subr.mxu0 0.0
      %2883 = vmatpush1.msra.mxu0 0.0
      %2884 = vmatprep.subr.mxu0 0.0
      %2885 = vmatpush1.msra.mxu0 0.0
      %2886 = vmatprep.subr.mxu0 0.0
      %2887 = vmatpush1.msra.mxu0 0.0
      %2888 = vmatprep.subr.mxu0 0.0
      %2889 = vmatpush1.msra.mxu0 0.0
      %2890 = vmatprep.subr.mxu0 0.0
      %2891 = vmatpush1.msra.mxu0 0.0
      %2892 = vmatprep.subr.mxu0 0.0
      %2893 = vmatpush1.msra.mxu0 0.0
      %2894 = vmatprep.subr.mxu0 0.0
      %2895 = vmatpush1.msra.mxu0 0.0
      %2896 = vmatprep.subr.mxu0 0.0
      %2897 = vmatpush1.msra.mxu0 0.0
      %2898 = vmatprep.subr.mxu0 0.0
      %2899 = vmatpush1.msra.mxu0 0.0
      %2900 = vmatprep.subr.mxu0 0.0
      %2901 = vmatpush1.msra.mxu0 0.0
      %2902 = vmatprep.subr.mxu0 0.0
      %2903 = vmatpush1.msra.mxu0 0.0
      %2904 = vmatprep.subr.mxu0 0.0
      %2905 = vmatpush1.msra.mxu0 0.0
      %2906 = vmatprep.subr.mxu0 0.0
      %2907 = vmatpush1.msra.mxu0 0.0
      %2908 = vmatprep.subr.mxu0 0.0
      %2909 = vmatpush1.msra.mxu0 0.0
      %2910 = vmatprep.subr.mxu0 0.0
      %2911 = vmatpush1.msra.mxu0 0.0
      %2912 = vmatprep.mubr.f32.mxu0 0.0
      %2913 = vmatmul.mubr.f32.gmra.mrb[0].mxu0 %v2840
      %v2914 = vpop.f32.mrb[0].mxu0
      %v2915 = vadd.f32 0.0, %v2914
      %v2916 = vpop.f32.mrb[0].mxu0
      %v2917 = vadd.f32 0.0, %v2916
      %2918 = vdwg.mxu0
      %v2919 = vadd.f32 %v2825, %v2915
      %v2920 = vadd.f32 %v2827, %v2917
      %s2921 = scalar_lea.vmem %s10, 12
      %v2922 = vld [vmem:[%s2921] sm:$0xf]
      %2923 = vrot.lane.b32.xlu0 %v2648, 1
      %v2924 = vpop.permute.xlu0 %2923
      %2925 = vrot.lane.b32.xlu0 %v2649, 1
      %v2926 = vpop.permute.xlu0 %2925
      %v2927 = vsel %vm1510, %v2924, %v2926
      %v2928 = vsel %vm1510, %v2926, %v2924
      %v2929 = vmul.f32 %v2928, %v1516
      %v2930 = vmul.f32 %v2927, %v1520
      %v2932 = vsel %vm960, %v2922, 0
      %v2935 = vsel %vm964, %v2929, 0
      %v2938 = vsel %vm964, %v2930, 0
      %2940 = vmatprep.subr.mxu0 %v2938
      %2941 = vmatpush1.msra.mxu0 %v2935
      %2942 = vmatprep.subr.mxu0 0.0
      %2943 = vmatpush1.msra.mxu0 0.0
      %2944 = vmatprep.subr.mxu0 0.0
      %2945 = vmatpush1.msra.mxu0 0.0
      %2946 = vmatprep.subr.mxu0 0.0
      %2947 = vmatpush1.msra.mxu0 0.0
      %2948 = vmatprep.subr.mxu0 0.0
      %2949 = vmatpush1.msra.mxu0 0.0
      %2950 = vmatprep.subr.mxu0 0.0
      %2951 = vmatpush1.msra.mxu0 0.0
      %2952 = vmatprep.subr.mxu0 0.0
      %2953 = vmatpush1.msra.mxu0 0.0
      %2954 = vmatprep.subr.mxu0 0.0
      %2955 = vmatpush1.msra.mxu0 0.0
      %2956 = vmatprep.subr.mxu0 0.0
      %2957 = vmatpush1.msra.mxu0 0.0
      %2958 = vmatprep.subr.mxu0 0.0
      %2959 = vmatpush1.msra.mxu0 0.0
      %2960 = vmatprep.subr.mxu0 0.0
      %2961 = vmatpush1.msra.mxu0 0.0
      %2962 = vmatprep.subr.mxu0 0.0
      %2963 = vmatpush1.msra.mxu0 0.0
      %2964 = vmatprep.subr.mxu0 0.0
      %2965 = vmatpush1.msra.mxu0 0.0
      %2966 = vmatprep.subr.mxu0 0.0
      %2967 = vmatpush1.msra.mxu0 0.0
      %2968 = vmatprep.subr.mxu0 0.0
      %2969 = vmatpush1.msra.mxu0 0.0
      %2970 = vmatprep.subr.mxu0 0.0
      %2971 = vmatpush1.msra.mxu0 0.0
      %2972 = vmatprep.subr.mxu0 0.0
      %2973 = vmatpush1.msra.mxu0 0.0
      %2974 = vmatprep.subr.mxu0 0.0
      %2975 = vmatpush1.msra.mxu0 0.0
      %2976 = vmatprep.subr.mxu0 0.0
      %2977 = vmatpush1.msra.mxu0 0.0
      %2978 = vmatprep.subr.mxu0 0.0
      %2979 = vmatpush1.msra.mxu0 0.0
      %2980 = vmatprep.subr.mxu0 0.0
      %2981 = vmatpush1.msra.mxu0 0.0
      %2982 = vmatprep.subr.mxu0 0.0
      %2983 = vmatpush1.msra.mxu0 0.0
      %2984 = vmatprep.subr.mxu0 0.0
      %2985 = vmatpush1.msra.mxu0 0.0
      %2986 = vmatprep.subr.mxu0 0.0
      %2987 = vmatpush1.msra.mxu0 0.0
      %2988 = vmatprep.subr.mxu0 0.0
      %2989 = vmatpush1.msra.mxu0 0.0
      %2990 = vmatprep.subr.mxu0 0.0
      %2991 = vmatpush1.msra.mxu0 0.0
      %2992 = vmatprep.subr.mxu0 0.0
      %2993 = vmatpush1.msra.mxu0 0.0
      %2994 = vmatprep.subr.mxu0 0.0
      %2995 = vmatpush1.msra.mxu0 0.0
      %2996 = vmatprep.subr.mxu0 0.0
      %2997 = vmatpush1.msra.mxu0 0.0
      %2998 = vmatprep.subr.mxu0 0.0
      %2999 = vmatpush1.msra.mxu0 0.0
      %3000 = vmatprep.subr.mxu0 0.0
      %3001 = vmatpush1.msra.mxu0 0.0
      %3002 = vmatprep.subr.mxu0 0.0
      %3003 = vmatpush1.msra.mxu0 0.0
      %3004 = vmatprep.mubr.f32.mxu0 0.0
      %3005 = vmatmul.mubr.f32.gmra.mrb[0].mxu0 %v2932
      %v3006 = vpop.f32.mrb[0].mxu0
      %v3007 = vadd.f32 0.0, %v3006
      %v3008 = vpop.f32.mrb[0].mxu0
      %v3009 = vadd.f32 0.0, %v3008
      %3010 = vdwg.mxu0
      %v3011 = vadd.f32 %v2919, %v3007
      %v3012 = vadd.f32 %v2920, %v3009
      %s3013 = scalar_lea.vmem %s10, 16
      %v3014 = vld [vmem:[%s3013] sm:$0xf]
      %v3015 = vmul.f32 %v2648, %v1700
      %v3016 = vmul.f32 %v2649, %v1704
      %v3018 = vsel %vm960, %v3014, 0
      %v3021 = vsel %vm964, %v3015, 0
      %v3024 = vsel %vm964, %v3016, 0
      %3026 = vmatprep.subr.mxu0 %v3024
      %3027 = vmatpush1.msra.mxu0 %v3021
      %3028 = vmatprep.subr.mxu0 0.0
      %3029 = vmatpush1.msra.mxu0 0.0
      %3030 = vmatprep.subr.mxu0 0.0
      %3031 = vmatpush1.msra.mxu0 0.0
      %3032 = vmatprep.subr.mxu0 0.0
      %3033 = vmatpush1.msra.mxu0 0.0
      %3034 = vmatprep.subr.mxu0 0.0
      %3035 = vmatpush1.msra.mxu0 0.0
      %3036 = vmatprep.subr.mxu0 0.0
      %3037 = vmatpush1.msra.mxu0 0.0
      %3038 = vmatprep.subr.mxu0 0.0
      %3039 = vmatpush1.msra.mxu0 0.0
      %3040 = vmatprep.subr.mxu0 0.0
      %3041 = vmatpush1.msra.mxu0 0.0
      %3042 = vmatprep.subr.mxu0 0.0
      %3043 = vmatpush1.msra.mxu0 0.0
      %3044 = vmatprep.subr.mxu0 0.0
      %3045 = vmatpush1.msra.mxu0 0.0
      %3046 = vmatprep.subr.mxu0 0.0
      %3047 = vmatpush1.msra.mxu0 0.0
      %3048 = vmatprep.subr.mxu0 0.0
      %3049 = vmatpush1.msra.mxu0 0.0
      %3050 = vmatprep.subr.mxu0 0.0
      %3051 = vmatpush1.msra.mxu0 0.0
      %3052 = vmatprep.subr.mxu0 0.0
      %3053 = vmatpush1.msra.mxu0 0.0
      %3054 = vmatprep.subr.mxu0 0.0
      %3055 = vmatpush1.msra.mxu0 0.0
      %3056 = vmatprep.subr.mxu0 0.0
      %3057 = vmatpush1.msra.mxu0 0.0
      %3058 = vmatprep.subr.mxu0 0.0
      %3059 = vmatpush1.msra.mxu0 0.0
      %3060 = vmatprep.subr.mxu0 0.0
      %3061 = vmatpush1.msra.mxu0 0.0
      %3062 = vmatprep.subr.mxu0 0.0
      %3063 = vmatpush1.msra.mxu0 0.0
      %3064 = vmatprep.subr.mxu0 0.0
      %3065 = vmatpush1.msra.mxu0 0.0
      %3066 = vmatprep.subr.mxu0 0.0
      %3067 = vmatpush1.msra.mxu0 0.0
      %3068 = vmatprep.subr.mxu0 0.0
      %3069 = vmatpush1.msra.mxu0 0.0
      %3070 = vmatprep.subr.mxu0 0.0
      %3071 = vmatpush1.msra.mxu0 0.0
      %3072 = vmatprep.subr.mxu0 0.0
      %3073 = vmatpush1.msra.mxu0 0.0
      %3074 = vmatprep.subr.mxu0 0.0
      %3075 = vmatpush1.msra.mxu0 0.0
      %3076 = vmatprep.subr.mxu0 0.0
      %3077 = vmatpush1.msra.mxu0 0.0
      %3078 = vmatprep.subr.mxu0 0.0
      %3079 = vmatpush1.msra.mxu0 0.0
      %3080 = vmatprep.subr.mxu0 0.0
      %3081 = vmatpush1.msra.mxu0 0.0
      %3082 = vmatprep.subr.mxu0 0.0
      %3083 = vmatpush1.msra.mxu0 0.0
      %3084 = vmatprep.subr.mxu0 0.0
      %3085 = vmatpush1.msra.mxu0 0.0
      %3086 = vmatprep.subr.mxu0 0.0
      %3087 = vmatpush1.msra.mxu0 0.0
      %3088 = vmatprep.subr.mxu0 0.0
      %3089 = vmatpush1.msra.mxu0 0.0
      %3090 = vmatprep.mubr.f32.mxu0 0.0
      %3091 = vmatmul.mubr.f32.gmra.mrb[0].mxu0 %v3018
      %v3092 = vpop.f32.mrb[0].mxu0
      %v3093 = vadd.f32 0.0, %v3092
      %v3094 = vpop.f32.mrb[0].mxu0
      %v3095 = vadd.f32 0.0, %v3094
      %3096 = vdwg.mxu0
      %v3097 = vadd.f32 %v3011, %v3093
      %v3098 = vadd.f32 %v3012, %v3095
      %s3099 = scalar_lea.vmem %s10, 20
      %v3100 = vld [vmem:[%s3099] sm:$0xf]
      %3101 = vrot.lane.b32.xlu0 %v2648, 127
      %v3102 = vpop.permute.xlu0 %3101
      %3103 = vrot.lane.b32.xlu0 %v2649, 127
      %v3104 = vpop.permute.xlu0 %3103
      %v3105 = vsel %vm1882, %v3102, %v3104
      %v3106 = vsel %vm1882, %v3104, %v3102
      %v3107 = vmul.f32 %v3105, %v1888
      %v3108 = vmul.f32 %v3106, %v1892
      %v3110 = vsel %vm960, %v3100, 0
      %v3113 = vsel %vm964, %v3107, 0
      %v3116 = vsel %vm964, %v3108, 0
      %3118 = vmatprep.subr.mxu0 %v3116
      %3119 = vmatpush1.msra.mxu0 %v3113
      %3120 = vmatprep.subr.mxu0 0.0
      %3121 = vmatpush1.msra.mxu0 0.0
      %3122 = vmatprep.subr.mxu0 0.0
      %3123 = vmatpush1.msra.mxu0 0.0
      %3124 = vmatprep.subr.mxu0 0.0
      %3125 = vmatpush1.msra.mxu0 0.0
      %3126 = vmatprep.subr.mxu0 0.0
      %3127 = vmatpush1.msra.mxu0 0.0
      %3128 = vmatprep.subr.mxu0 0.0
      %3129 = vmatpush1.msra.mxu0 0.0
      %3130 = vmatprep.subr.mxu0 0.0
      %3131 = vmatpush1.msra.mxu0 0.0
      %3132 = vmatprep.subr.mxu0 0.0
      %3133 = vmatpush1.msra.mxu0 0.0
      %3134 = vmatprep.subr.mxu0 0.0
      %3135 = vmatpush1.msra.mxu0 0.0
      %3136 = vmatprep.subr.mxu0 0.0
      %3137 = vmatpush1.msra.mxu0 0.0
      %3138 = vmatprep.subr.mxu0 0.0
      %3139 = vmatpush1.msra.mxu0 0.0
      %3140 = vmatprep.subr.mxu0 0.0
      %3141 = vmatpush1.msra.mxu0 0.0
      %3142 = vmatprep.subr.mxu0 0.0
      %3143 = vmatpush1.msra.mxu0 0.0
      %3144 = vmatprep.subr.mxu0 0.0
      %3145 = vmatpush1.msra.mxu0 0.0
      %3146 = vmatprep.subr.mxu0 0.0
      %3147 = vmatpush1.msra.mxu0 0.0
      %3148 = vmatprep.subr.mxu0 0.0
      %3149 = vmatpush1.msra.mxu0 0.0
      %3150 = vmatprep.subr.mxu0 0.0
      %3151 = vmatpush1.msra.mxu0 0.0
      %3152 = vmatprep.subr.mxu0 0.0
      %3153 = vmatpush1.msra.mxu0 0.0
      %3154 = vmatprep.subr.mxu0 0.0
      %3155 = vmatpush1.msra.mxu0 0.0
      %3156 = vmatprep.subr.mxu0 0.0
      %3157 = vmatpush1.msra.mxu0 0.0
      %3158 = vmatprep.subr.mxu0 0.0
      %3159 = vmatpush1.msra.mxu0 0.0
      %3160 = vmatprep.subr.mxu0 0.0
      %3161 = vmatpush1.msra.mxu0 0.0
      %3162 = vmatprep.subr.mxu0 0.0
      %3163 = vmatpush1.msra.mxu0 0.0
      %3164 = vmatprep.subr.mxu0 0.0
      %3165 = vmatpush1.msra.mxu0 0.0
      %3166 = vmatprep.subr.mxu0 0.0
      %3167 = vmatpush1.msra.mxu0 0.0
      %3168 = vmatprep.subr.mxu0 0.0
      %3169 = vmatpush1.msra.mxu0 0.0
      %3170 = vmatprep.subr.mxu0 0.0
      %3171 = vmatpush1.msra.mxu0 0.0
      %3172 = vmatprep.subr.mxu0 0.0
      %3173 = vmatpush1.msra.mxu0 0.0
      %3174 = vmatprep.subr.mxu0 0.0
      %3175 = vmatpush1.msra.mxu0 0.0
      %3176 = vmatprep.subr.mxu0 0.0
      %3177 = vmatpush1.msra.mxu0 0.0
      %3178 = vmatprep.subr.mxu0 0.0
      %3179 = vmatpush1.msra.mxu0 0.0
      %3180 = vmatprep.subr.mxu0 0.0
      %3181 = vmatpush1.msra.mxu0 0.0
      %3182 = vmatprep.mubr.f32.mxu0 0.0
      %3183 = vmatmul.mubr.f32.gmra.mrb[0].mxu0 %v3110
      %v3184 = vpop.f32.mrb[0].mxu0
      %v3185 = vadd.f32 0.0, %v3184
      %v3186 = vpop.f32.mrb[0].mxu0
      %v3187 = vadd.f32 0.0, %v3186
      %3188 = vdwg.mxu0
      %v3189 = vadd.f32 %v3097, %v3185
      %v3190 = vadd.f32 %v3098, %v3187
      %s3191 = scalar_lea.vmem %s10, 24
      %v3192 = vld [vmem:[%s3191] sm:$0xf]
      %3193 = vrot.lane.b32.xlu0 %v2648, 113
      %v3194 = vpop.permute.xlu0 %3193
      %3195 = vrot.lane.b32.xlu0 %v2649, 113
      %v3196 = vpop.permute.xlu0 %3195
      %v3197 = vsel %vm2073, %v3194, %v3196
      %v3198 = vsel %vm2073, %v3196, %v3194
      %v3199 = vmul.f32 %v3197, %v2079
      %v3200 = vmul.f32 %v3198, %v2083
      %v3202 = vsel %vm960, %v3192, 0
      %v3205 = vsel %vm964, %v3199, 0
      %v3208 = vsel %vm964, %v3200, 0
      %3210 = vmatprep.subr.mxu0 %v3208
      %3211 = vmatpush1.msra.mxu0 %v3205
      %3212 = vmatprep.subr.mxu0 0.0
      %3213 = vmatpush1.msra.mxu0 0.0
      %3214 = vmatprep.subr.mxu0 0.0
      %3215 = vmatpush1.msra.mxu0 0.0
      %3216 = vmatprep.subr.mxu0 0.0
      %3217 = vmatpush1.msra.mxu0 0.0
      %3218 = vmatprep.subr.mxu0 0.0
      %3219 = vmatpush1.msra.mxu0 0.0
      %3220 = vmatprep.subr.mxu0 0.0
      %3221 = vmatpush1.msra.mxu0 0.0
      %3222 = vmatprep.subr.mxu0 0.0
      %3223 = vmatpush1.msra.mxu0 0.0
      %3224 = vmatprep.subr.mxu0 0.0
      %3225 = vmatpush1.msra.mxu0 0.0
      %3226 = vmatprep.subr.mxu0 0.0
      %3227 = vmatpush1.msra.mxu0 0.0
      %3228 = vmatprep.subr.mxu0 0.0
      %3229 = vmatpush1.msra.mxu0 0.0
      %3230 = vmatprep.subr.mxu0 0.0
      %3231 = vmatpush1.msra.mxu0 0.0
      %3232 = vmatprep.subr.mxu0 0.0
      %3233 = vmatpush1.msra.mxu0 0.0
      %3234 = vmatprep.subr.mxu0 0.0
      %3235 = vmatpush1.msra.mxu0 0.0
      %3236 = vmatprep.subr.mxu0 0.0
      %3237 = vmatpush1.msra.mxu0 0.0
      %3238 = vmatprep.subr.mxu0 0.0
      %3239 = vmatpush1.msra.mxu0 0.0
      %3240 = vmatprep.subr.mxu0 0.0
      %3241 = vmatpush1.msra.mxu0 0.0
      %3242 = vmatprep.subr.mxu0 0.0
      %3243 = vmatpush1.msra.mxu0 0.0
      %3244 = vmatprep.subr.mxu0 0.0
      %3245 = vmatpush1.msra.mxu0 0.0
      %3246 = vmatprep.subr.mxu0 0.0
      %3247 = vmatpush1.msra.mxu0 0.0
      %3248 = vmatprep.subr.mxu0 0.0
      %3249 = vmatpush1.msra.mxu0 0.0
      %3250 = vmatprep.subr.mxu0 0.0
      %3251 = vmatpush1.msra.mxu0 0.0
      %3252 = vmatprep.subr.mxu0 0.0
      %3253 = vmatpush1.msra.mxu0 0.0
      %3254 = vmatprep.subr.mxu0 0.0
      %3255 = vmatpush1.msra.mxu0 0.0
      %3256 = vmatprep.subr.mxu0 0.0
      %3257 = vmatpush1.msra.mxu0 0.0
      %3258 = vmatprep.subr.mxu0 0.0
      %3259 = vmatpush1.msra.mxu0 0.0
      %3260 = vmatprep.subr.mxu0 0.0
      %3261 = vmatpush1.msra.mxu0 0.0
      %3262 = vmatprep.subr.mxu0 0.0
      %3263 = vmatpush1.msra.mxu0 0.0
      %3264 = vmatprep.subr.mxu0 0.0
      %3265 = vmatpush1.msra.mxu0 0.0
      %3266 = vmatprep.subr.mxu0 0.0
      %3267 = vmatpush1.msra.mxu0 0.0
      %3268 = vmatprep.subr.mxu0 0.0
      %3269 = vmatpush1.msra.mxu0 0.0
      %3270 = vmatprep.subr.mxu0 0.0
      %3271 = vmatpush1.msra.mxu0 0.0
      %3272 = vmatprep.subr.mxu0 0.0
      %3273 = vmatpush1.msra.mxu0 0.0
      %3274 = vmatprep.mubr.f32.mxu0 0.0
      %3275 = vmatmul.mubr.f32.gmra.mrb[0].mxu0 %v3202
      %v3276 = vpop.f32.mrb[0].mxu0
      %v3277 = vadd.f32 0.0, %v3276
      %v3278 = vpop.f32.mrb[0].mxu0
      %v3279 = vadd.f32 0.0, %v3278
      %3280 = vdwg.mxu0
      %v3281 = vadd.f32 %v3189, %v3277
      %v3282 = vadd.f32 %v3190, %v3279
      %s3283 = scalar_lea.vmem %s10, 28
      %v3284 = vld [vmem:[%s3283] sm:$0xf]
      %3285 = vrot.lane.b32.xlu0 %v2648, 112
      %v3286 = vpop.permute.xlu0 %3285
      %3287 = vrot.lane.b32.xlu0 %v2649, 112
      %v3288 = vpop.permute.xlu0 %3287
      %v3289 = vsel %vm2264, %v3286, %v3288
      %v3290 = vsel %vm2264, %v3288, %v3286
      %v3291 = vmul.f32 %v3289, %v2270
      %v3292 = vmul.f32 %v3290, %v2274
      %v3294 = vsel %vm960, %v3284, 0
      %v3297 = vsel %vm964, %v3291, 0
      %v3300 = vsel %vm964, %v3292, 0
      %3302 = vmatprep.subr.mxu0 %v3300
      %3303 = vmatpush1.msra.mxu0 %v3297
      %3304 = vmatprep.subr.mxu0 0.0
      %3305 = vmatpush1.msra.mxu0 0.0
      %3306 = vmatprep.subr.mxu0 0.0
      %3307 = vmatpush1.msra.mxu0 0.0
      %3308 = vmatprep.subr.mxu0 0.0
      %3309 = vmatpush1.msra.mxu0 0.0
      %3310 = vmatprep.subr.mxu0 0.0
      %3311 = vmatpush1.msra.mxu0 0.0
      %3312 = vmatprep.subr.mxu0 0.0
      %3313 = vmatpush1.msra.mxu0 0.0
      %3314 = vmatprep.subr.mxu0 0.0
      %3315 = vmatpush1.msra.mxu0 0.0
      %3316 = vmatprep.subr.mxu0 0.0
      %3317 = vmatpush1.msra.mxu0 0.0
      %3318 = vmatprep.subr.mxu0 0.0
      %3319 = vmatpush1.msra.mxu0 0.0
      %3320 = vmatprep.subr.mxu0 0.0
      %3321 = vmatpush1.msra.mxu0 0.0
      %3322 = vmatprep.subr.mxu0 0.0
      %3323 = vmatpush1.msra.mxu0 0.0
      %3324 = vmatprep.subr.mxu0 0.0
      %3325 = vmatpush1.msra.mxu0 0.0
      %3326 = vmatprep.subr.mxu0 0.0
      %3327 = vmatpush1.msra.mxu0 0.0
      %3328 = vmatprep.subr.mxu0 0.0
      %3329 = vmatpush1.msra.mxu0 0.0
      %3330 = vmatprep.subr.mxu0 0.0
      %3331 = vmatpush1.msra.mxu0 0.0
      %3332 = vmatprep.subr.mxu0 0.0
      %3333 = vmatpush1.msra.mxu0 0.0
      %3334 = vmatprep.subr.mxu0 0.0
      %3335 = vmatpush1.msra.mxu0 0.0
      %3336 = vmatprep.subr.mxu0 0.0
      %3337 = vmatpush1.msra.mxu0 0.0
      %3338 = vmatprep.subr.mxu0 0.0
      %3339 = vmatpush1.msra.mxu0 0.0
      %3340 = vmatprep.subr.mxu0 0.0
      %3341 = vmatpush1.msra.mxu0 0.0
      %3342 = vmatprep.subr.mxu0 0.0
      %3343 = vmatpush1.msra.mxu0 0.0
      %3344 = vmatprep.subr.mxu0 0.0
      %3345 = vmatpush1.msra.mxu0 0.0
      %3346 = vmatprep.subr.mxu0 0.0
      %3347 = vmatpush1.msra.mxu0 0.0
      %3348 = vmatprep.subr.mxu0 0.0
      %3349 = vmatpush1.msra.mxu0 0.0
      %3350 = vmatprep.subr.mxu0 0.0
      %3351 = vmatpush1.msra.mxu0 0.0
      %3352 = vmatprep.subr.mxu0 0.0
      %3353 = vmatpush1.msra.mxu0 0.0
      %3354 = vmatprep.subr.mxu0 0.0
      %3355 = vmatpush1.msra.mxu0 0.0
      %3356 = vmatprep.subr.mxu0 0.0
      %3357 = vmatpush1.msra.mxu0 0.0
      %3358 = vmatprep.subr.mxu0 0.0
      %3359 = vmatpush1.msra.mxu0 0.0
      %3360 = vmatprep.subr.mxu0 0.0
      %3361 = vmatpush1.msra.mxu0 0.0
      %3362 = vmatprep.subr.mxu0 0.0
      %3363 = vmatpush1.msra.mxu0 0.0
      %3364 = vmatprep.subr.mxu0 0.0
      %3365 = vmatpush1.msra.mxu0 0.0
      %3366 = vmatprep.mubr.f32.mxu0 0.0
      %3367 = vmatmul.mubr.f32.gmra.mrb[0].mxu0 %v3294
      %v3368 = vpop.f32.mrb[0].mxu0
      %v3369 = vadd.f32 0.0, %v3368
      %v3370 = vpop.f32.mrb[0].mxu0
      %v3371 = vadd.f32 0.0, %v3370
      %3372 = vdwg.mxu0
      %v3373 = vadd.f32 %v3281, %v3369
      %v3374 = vadd.f32 %v3282, %v3371
      %s3375 = scalar_lea.vmem %s10, 32
      %v3376 = vld [vmem:[%s3375] sm:$0xf]
      %3377 = vrot.lane.b32.xlu0 %v2648, 111
      %v3378 = vpop.permute.xlu0 %3377
      %3379 = vrot.lane.b32.xlu0 %v2649, 111
      %v3380 = vpop.permute.xlu0 %3379
      %v3381 = vsel %vm2455, %v3378, %v3380
      %v3382 = vsel %vm2455, %v3380, %v3378
      %v3383 = vmul.f32 %v3381, %v2461
      %v3384 = vmul.f32 %v3382, %v2465
      %v3386 = vsel %vm960, %v3376, 0
      %v3389 = vsel %vm964, %v3383, 0
      %v3392 = vsel %vm964, %v3384, 0
      %3394 = vmatprep.subr.mxu0 %v3392
      %3395 = vmatpush1.msra.mxu0 %v3389
      %3396 = vmatprep.subr.mxu0 0.0
      %3397 = vmatpush1.msra.mxu0 0.0
      %3398 = vmatprep.subr.mxu0 0.0
      %3399 = vmatpush1.msra.mxu0 0.0
      %3400 = vmatprep.subr.mxu0 0.0
      %3401 = vmatpush1.msra.mxu0 0.0
      %3402 = vmatprep.subr.mxu0 0.0
      %3403 = vmatpush1.msra.mxu0 0.0
      %3404 = vmatprep.subr.mxu0 0.0
      %3405 = vmatpush1.msra.mxu0 0.0
      %3406 = vmatprep.subr.mxu0 0.0
      %3407 = vmatpush1.msra.mxu0 0.0
      %3408 = vmatprep.subr.mxu0 0.0
      %3409 = vmatpush1.msra.mxu0 0.0
      %3410 = vmatprep.subr.mxu0 0.0
      %3411 = vmatpush1.msra.mxu0 0.0
      %3412 = vmatprep.subr.mxu0 0.0
      %3413 = vmatpush1.msra.mxu0 0.0
      %3414 = vmatprep.subr.mxu0 0.0
      %3415 = vmatpush1.msra.mxu0 0.0
      %3416 = vmatprep.subr.mxu0 0.0
      %3417 = vmatpush1.msra.mxu0 0.0
      %3418 = vmatprep.subr.mxu0 0.0
      %3419 = vmatpush1.msra.mxu0 0.0
      %3420 = vmatprep.subr.mxu0 0.0
      %3421 = vmatpush1.msra.mxu0 0.0
      %3422 = vmatprep.subr.mxu0 0.0
      %3423 = vmatpush1.msra.mxu0 0.0
      %3424 = vmatprep.subr.mxu0 0.0
      %3425 = vmatpush1.msra.mxu0 0.0
      %3426 = vmatprep.subr.mxu0 0.0
      %3427 = vmatpush1.msra.mxu0 0.0
      %3428 = vmatprep.subr.mxu0 0.0
      %3429 = vmatpush1.msra.mxu0 0.0
      %3430 = vmatprep.subr.mxu0 0.0
      %3431 = vmatpush1.msra.mxu0 0.0
      %3432 = vmatprep.subr.mxu0 0.0
      %3433 = vmatpush1.msra.mxu0 0.0
      %3434 = vmatprep.subr.mxu0 0.0
      %3435 = vmatpush1.msra.mxu0 0.0
      %3436 = vmatprep.subr.mxu0 0.0
      %3437 = vmatpush1.msra.mxu0 0.0
      %3438 = vmatprep.subr.mxu0 0.0
      %3439 = vmatpush1.msra.mxu0 0.0
      %3440 = vmatprep.subr.mxu0 0.0
      %3441 = vmatpush1.msra.mxu0 0.0
      %3442 = vmatprep.subr.mxu0 0.0
      %3443 = vmatpush1.msra.mxu0 0.0
      %3444 = vmatprep.subr.mxu0 0.0
      %3445 = vmatpush1.msra.mxu0 0.0
      %3446 = vmatprep.subr.mxu0 0.0
      %3447 = vmatpush1.msra.mxu0 0.0
      %3448 = vmatprep.subr.mxu0 0.0
      %3449 = vmatpush1.msra.mxu0 0.0
      %3450 = vmatprep.subr.mxu0 0.0
      %3451 = vmatpush1.msra.mxu0 0.0
      %3452 = vmatprep.subr.mxu0 0.0
      %3453 = vmatpush1.msra.mxu0 0.0
      %3454 = vmatprep.subr.mxu0 0.0
      %3455 = vmatpush1.msra.mxu0 0.0
      %3456 = vmatprep.subr.mxu0 0.0
      %3457 = vmatpush1.msra.mxu0 0.0
      %3458 = vmatprep.mubr.f32.mxu0 0.0
      %3459 = vmatmul.mubr.f32.gmra.mrb[0].mxu0 %v3386
      %v3460 = vpop.f32.mrb[0].mxu0
      %v3461 = vadd.f32 0.0, %v3460
      %v3462 = vpop.f32.mrb[0].mxu0
      %v3463 = vadd.f32 0.0, %v3462
      %3464 = vdwg.mxu0
      %v3465 = vadd.f32 %v3373, %v3461
      %v3466 = vadd.f32 %v3374, %v3463
      %v3467 = vld [vmem:[%s11] sm:$0xf]
      %3469 = vset.pattern.permute.xlu0 0
      %3470 = vperm.xlu0 %3469, %v3467
      %v3471 = vpop.permute.xlu0 %3470
      %v3473 = vadd.f32 %v3465, %v3471
      %v3474 = vadd.f32 %v3466, %v3471
      %v3475 = vmax.f32 %v3473, 0.0
      %v3476 = vmax.f32 %v3474, 0.0
      %v3479 = vcombine.low %v3475, %v3476
      %3481 = vst [vmem:[%s430] sm:$0xff] %v3479
      %p3482 = scmp.lt.s32.totalorder %s23, 1
      %s3483 = scalar_select %p3482, %s23, 1
      %s3484 = smul.addr %s3483, 2
      %s3485 = smul.addr %s3484, 4
      %s3486 = scalar_lea.vmem %s12, %s3485
      // Predicated region
      $region69: #{upsample_forward.1} parent=67 // pred_check
        %p3487 = pneg %p303
      $region70: #{upsample_forward.1} parent=67 // pred_check_branch
        %3489 = sbr.rel (%p3487) target = $region72
      $region71: #{upsample_forward.1} parent=67 // pred_region
        _
      $region72: #{upsample_forward.1} parent=67 // pred_fallthru
        _
    $region68: #{upsample_forward.1} parent=5 // pred_fallthru
      _
    %p3490 = scmp.le.s32.totalorder 2, %s18
    // Predicated region
    $region73: #{upsample_forward.1} parent=5 // pred_check
      %p3491 = pneg %p3490
    $region74: #{upsample_forward.1} parent=5 // pred_check_branch
      %3493 = sbr.rel (%p3491) target = $region76
    $region75: #{upsample_forward.1} parent=5 // pred_region
      %s3494 = ssub.s32 %s18, 2
      // Predicated region
      $region77: #{upsample_forward.1} parent=75 // pred_check
        %p3495 = pneg %p309
      $region78: #{upsample_forward.1} parent=75 // pred_check_branch
        %3497 = sbr.rel (%p3495) target = $region80
      $region79: #{upsample_forward.1} parent=75 // pred_region
        %p3498 = scmp.lt.s32.totalorder %s24, 1
        %s3499 = scalar_select %p3498, %s24, 1
        %s3500 = smul.addr %s3499, 2
        %s3501 = smul.addr %s3500, 4
        %s3502 = scalar_lea.vmem %s12, %s3501
      $region80: #{upsample_forward.1} parent=75 // pred_fallthru
        _
    $region76: #{upsample_forward.1} parent=5 // pred_fallthru
      _
  $region6: #{upsample_forward.1} parent=0 // loop_footer
    %s22 = sadd.s32 1, %s18
  $region7: #{upsample_forward.1} parent=0 // loop_footer_branch
    %17 = sbr.rel target = $region3
  $region8: #{upsample_forward.1} parent=0 // loop_exit
    _

</llo_original>
